<compile_context>
chip_gen: v6e
topology: v6e:2x2x1
jax: 0.10.0
libtpu: 0.0.40
codegen_flags: <defaults>
</compile_context>

<pallas_src>
import functools

import jax
import jax.numpy as jnp
from jax.experimental import pallas as pl
from jax.experimental.pallas import tpu as pltpu


def _conv2d_kernel(x_ref, w_ref, b_ref, o_ref, acc_ref, *,
                   nb, oh, ow_t, kh, kw, sh, sw, dh, dw, cin):
    """One grid step = (NB images) x (TCO=128 output channels), full spatial extent.

    x_ref:   (NB, Hp, Wp, Cin)        zero-padded NHWC activation tile
    w_ref:   (1, KH, KW, Cin, TCO)    per-Cout-block weight tile
    b_ref:   (1, TCO)                 f32 bias tile
    o_ref:   (NB, OH, OW_t, TCO)      output tile (lane-dense channels)
    acc_ref: (NB*OH*OW_t, TCO) f32    VMEM accumulator scratch
    """
    tco = o_ref.shape[-1]
    m = nb * oh * ow_t

    def row_slice(i):
        start = i * dh
        return pl.ds(start, oh, stride=sh) if sh > 1 else pl.ds(start, oh)

    def col_slice(j):
        start = j * dw
        return pl.ds(start, ow_t, stride=sw) if sw > 1 else pl.ds(start, ow_t)

    first = True
    for i in range(kh):
        for j in range(kw):
            # Read the (i, j) tap patch directly from the ref (strided on the
            # H / W axes) -- no full-tile copies, no HBM-side im2col.
            p = x_ref[:, row_slice(i), col_slice(j), :]      # (NB, OH, OW_t, Cin)
            lhs = p.reshape(m, cin)
            wij = w_ref[0, i, j]                             # (Cin, TCO)
            contrib = jnp.dot(lhs, wij, preferred_element_type=jnp.float32)
            if first:
                acc_ref[...] = contrib
                first = False
            else:
                acc_ref[...] = acc_ref[...] + contrib

    out = acc_ref[...] + b_ref[...].astype(jnp.float32)      # (M, TCO)
    o_ref[...] = out.reshape(nb, oh, ow_t, tco).astype(o_ref.dtype)


def _round_up(x, m):
    return ((x + m - 1) // m) * m


def _vmem_limit_and_budget():
    """Generation-dependent scoped-VMEM limit and per-step tile budget."""
    cap = 64 * 1024 * 1024
    try:
        info = pltpu.get_tpu_info()
        cap = int(getattr(info, "vmem_capacity_bytes", cap))
    except Exception:
        pass
    limit = min(cap * 3 // 4, 100 * 1024 * 1024)   # v5e/v6e ~96 MiB, v7x ~48 MiB
    budget = max(limit - 8 * 1024 * 1024, 16 * 1024 * 1024)
    return limit, budget


def _choose_nb(N, Hp, Wp, Cin, OH, OW_t, KH, KW, TCO, n_co,
               op_isz, out_isz, budget):
    """Fold batch elements per grid step while fitting VMEM / accumulator caps."""
    M_CAP = 2048                       # f32 accumulator rows per step (VMEM scratch)

    def m_rows(nb):
        return nb * OH * OW_t

    def tile_bytes(nb):
        in_b = nb * Hp * Wp * Cin * op_isz
        out_b = nb * OH * OW_t * TCO * out_isz
        w_b = KH * KW * Cin * TCO * op_isz
        acc_b = nb * OH * OW_t * TCO * 4
        # inputs/outputs/weights double-buffered by the pipeline; acc is scratch.
        return 2 * (in_b + out_b + w_b) + acc_b + TCO * 4

    NB = 1
    while True:
        nb2 = NB * 2
        if nb2 > min(N, 16):
            break
        if m_rows(nb2) > M_CAP:
            break
        if tile_bytes(nb2) > budget:
            break
        # Keep >= 2 parallel grid steps so both TensorCores (v7x) stay busy.
        if N > 1 and pl.cdiv(N, nb2) * n_co < 2:
            break
        NB = nb2
    return NB


def convolution(input_tensor, weight_tensor, bias_tensor, stride, padding,
                dilation, transposed, groups, compute_dtype=None):
    """Pallas equivalent of aten.convolution.default (2D, groups=1, not transposed).

    compute_dtype: optional MXU operand dtype (e.g. jnp.bfloat16 on v6e/v7x);
    accumulation and bias always stay in f32.
    """
    assert not transposed, "transposed convolution not implemented"
    assert groups == 1, "grouped convolution not implemented"

    N, Cin, H, W = input_tensor.shape
    Cout, _, KH, KW = weight_tensor.shape
    sh, sw = stride
    ph, pw = padding
    dh, dw = dilation

    OH = (H + 2 * ph - dh * (KH - 1) - 1) // sh + 1
    OW = (W + 2 * pw - dw * (KW - 1) - 1) // sw + 1

    out_dtype = jnp.dtype(input_tensor.dtype)
    op_dtype = jnp.dtype(compute_dtype) if compute_dtype is not None else out_dtype
    op_isz = op_dtype.itemsize
    out_isz = out_dtype.itemsize

    TCO = 128
    Cout_p = _round_up(Cout, TCO)
    n_co = Cout_p // TCO
    OW_t = _round_up(OW, 8)           # sublane-friendly output width

    # Padded input geometry (zero padding only; no duplication).
    Hp = H + 2 * ph                                   # >= (OH-1)*sh + dh*(KH-1) + 1
    Wp_need = (OW_t - 1) * sw + dw * (KW - 1) + 1
    Wp = max(W + 2 * pw, Wp_need)

    vmem_limit, budget = _vmem_limit_and_budget()
    NB = _choose_nb(N, Hp, Wp, Cin, OH, OW_t, KH, KW, TCO, n_co,
                    op_isz, out_isz, budget)
    n_blk = pl.cdiv(N, NB)
    Np = n_blk * NB

    # NCHW -> NHWC, zero-pad batch + spatial (wrapper glue, no duplication).
    x = jnp.transpose(input_tensor, (0, 2, 3, 1)).astype(op_dtype)
    x = jnp.pad(x, ((0, Np - N), (ph, ph), (pw, Wp - W - pw), (0, 0)))

    # OIHW -> (n_co, KH, KW, Cin, TCO); Cout zero-padded to lane width.
    w = jnp.transpose(weight_tensor, (2, 3, 1, 0)).astype(op_dtype)   # (KH,KW,Cin,Cout)
    w = jnp.pad(w, ((0, 0), (0, 0), (0, 0), (0, Cout_p - Cout)))
    w = w.reshape(KH, KW, Cin, n_co, TCO).transpose(3, 0, 1, 2, 4)

    # Bias stays f32 so low-precision operands still add an exact bias.
    if bias_tensor is None:
        b = jnp.zeros((1, Cout_p), jnp.float32)
    else:
        b = jnp.pad(bias_tensor.astype(jnp.float32),
                    (0, Cout_p - Cout)).reshape(1, Cout_p)

    kernel = functools.partial(
        _conv2d_kernel, nb=NB, oh=OH, ow_t=OW_t, kh=KH, kw=KW,
        sh=sh, sw=sw, dh=dh, dw=dw, cin=Cin)

    flops = 2 * N * OH * OW * KH * KW * Cin * Cout
    bytes_accessed = int(x.size * op_isz + w.size * op_isz + b.size * 4
                         + Np * OH * OW_t * Cout_p * out_isz)

    out = pl.pallas_call(
        kernel,
        out_shape=jax.ShapeDtypeStruct((Np, OH, OW_t, Cout_p), out_dtype),
        grid=(n_blk, n_co),
        in_specs=[
            # Activation tile: depends only on the batch block -> stays VMEM
            # resident across all Cout blocks.
            pl.BlockSpec((NB, Hp, Wp, Cin), lambda n, c: (n, 0, 0, 0)),
            # Per-Cout-block weight / bias tiles (small, cheap to re-fetch).
            pl.BlockSpec((1, KH, KW, Cin, TCO), lambda n, c: (c, 0, 0, 0, 0)),
            pl.BlockSpec((1, TCO), lambda n, c: (0, c)),
        ],
        out_specs=pl.BlockSpec((NB, OH, OW_t, TCO), lambda n, c: (n, 0, 0, c)),
        scratch_shapes=[pltpu.VMEM((NB * OH * OW_t, TCO), jnp.float32)],
        compiler_params=pltpu.CompilerParams(
            dimension_semantics=("parallel", "parallel"),
            vmem_limit_bytes=vmem_limit),
        cost_estimate=pl.CostEstimate(
            flops=flops, transcendentals=0, bytes_accessed=bytes_accessed),
    )(x, w, b)

    # (Np, OH, OW_t, Cout_p) -> NCHW, drop every padding axis.
    out = out[:N, :, :OW, :Cout]
    return jnp.transpose(out, (0, 3, 1, 2))


if __name__ == "__main__":
    key = jax.random.PRNGKey(0)
    k1, k2, k3, k4, k5, k6 = jax.random.split(key, 6)

    def reference(x, w, b, stride, padding, dilation):
        out = jax.lax.conv_general_dilated(
            x, w, window_strides=tuple(stride),
            padding=[(padding[0], padding[0]), (padding[1], padding[1])],
            rhs_dilation=tuple(dilation),
            dimension_numbers=("NCHW", "OIHW", "NCHW"))
        if b is not None:
            out = out + b[None, :, None, None]
        return out

    # Case 1: canonical small shape (N=2, Cin=4, 16x16, Cout=8, 3x3, s=1, p=1, d=1).
    x1 = jax.random.normal(k1, (2, 4, 16, 16), dtype=jnp.float32)       # NCHW
    w1 = jax.random.normal(k2, (8, 4, 3, 3), dtype=jnp.float32) * 0.1   # OIHW
    b1 = jax.random.normal(k3, (8,), dtype=jnp.float32) * 0.1
    out1 = jax.block_until_ready(
        convolution(x1, w1, b1, [1, 1], [1, 1], [1, 1], False, 1))
    ref1 = reference(x1, w1, b1, [1, 1], [1, 1], [1, 1])
    assert out1.shape == ref1.shape, (out1.shape, ref1.shape)
    assert jnp.allclose(out1, ref1, atol=1e-4, rtol=1e-4), float(
        jnp.max(jnp.abs(out1 - ref1)))

    # Case 2: strided + dilated, odd batch / channel counts, no padding.
    x2 = jax.random.normal(k4, (3, 5, 16, 16), dtype=jnp.float32)
    w2 = jax.random.normal(k5, (8, 5, 3, 3), dtype=jnp.float32) * 0.1
    b2 = jax.random.normal(k6, (8,), dtype=jnp.float32) * 0.1
    out2 = jax.block_until_ready(
        convolution(x2, w2, b2, [2, 2], [0, 0], [2, 2], False, 1))
    ref2 = reference(x2, w2, b2, [2, 2], [0, 0], [2, 2])
    assert out2.shape == ref2.shape, (out2.shape, ref2.shape)
    assert jnp.allclose(out2, ref2, atol=1e-4, rtol=1e-4), float(
        jnp.max(jnp.abs(out2 - ref2)))

    # Case 3: no bias, 1x1 kernel (exercises bias=None and KH=KW=1 paths).
    w3 = jax.random.normal(k5, (8, 4, 1, 1), dtype=jnp.float32) * 0.1
    out3 = jax.block_until_ready(
        convolution(x1, w3, None, [1, 1], [0, 0], [1, 1], False, 1))
    ref3 = reference(x1, w3, None, [1, 1], [0, 0], [1, 1])
    assert out3.shape == ref3.shape, (out3.shape, ref3.shape)
    assert jnp.allclose(out3, ref3, atol=1e-4, rtol=1e-4), float(
        jnp.max(jnp.abs(out3 - ref3)))

    print("KERNEL_OK")
</pallas_src>

<mosaic_0001>
module attributes {stable_mosaic.version = 11 : i64} {
  func.func @_conv2d_kernel(%arg0: i32, %arg1: i32, %arg2: memref<1x18x18x4xf32, #tpu.memory_space<vmem>>, %arg3: memref<1x3x3x4x128xf32, #tpu.memory_space<vmem>>, %arg4: memref<1x128xf32, #tpu.memory_space<vmem>>, %arg5: memref<1x16x16x128xf32, #tpu.memory_space<vmem>>, %arg6: memref<256x128xf32, #tpu.memory_space<vmem>>) attributes {dimension_semantics = [#tpu.dimension_semantics<parallel>, #tpu.dimension_semantics<parallel>], iteration_bounds = array<i64: 2, 1>, scalar_prefetch = 0 : i64, scratch_operands = 1 : i64, tpu.core_type = #tpu.core_type<tc>, window_params = [{transform_indices = @transform_0, window_bounds = array<i64: 1, 18, 18, 4>}, {transform_indices = @transform_1, window_bounds = array<i64: 1, 3, 3, 4, 128>}, {transform_indices = @transform_2, window_bounds = array<i64: 1, 128>}, {transform_indices = @transform_3, window_bounds = array<i64: 1, 16, 16, 128>}]} {
    %c0 = arith.constant 0 : index
    %c0_0 = arith.constant 0 : index
    %c0_1 = arith.constant 0 : index
    %c0_2 = arith.constant 0 : index
    %0 = vector.load %arg2[%c0, %c0_0, %c0_1, %c0_2] : memref<1x18x18x4xf32, #tpu.memory_space<vmem>>, vector<1x16x16x4xf32>
    %1 = vector.shape_cast %0 : vector<1x16x16x4xf32> to vector<256x4xf32>
    %c0_3 = arith.constant 0 : index
    %c0_4 = arith.constant 0 : index
    %c0_5 = arith.constant 0 : index
    %c0_6 = arith.constant 0 : index
    %c0_7 = arith.constant 0 : index
    %2 = vector.load %arg3[%c0_3, %c0_4, %c0_5, %c0_6, %c0_7] : memref<1x3x3x4x128xf32, #tpu.memory_space<vmem>>, vector<1x1x1x4x128xf32>
    %3 = vector.shape_cast %2 : vector<1x1x1x4x128xf32> to vector<4x128xf32>
    %cst = arith.constant dense<0.000000e+00> : vector<256x128xf32>
    %4 = tpu.matmul %1, %3, %cst {dimension_numbers = #tpu.dot_dimension_numbers<[1], [0], [0], [1], [0, 0, 1, 1], [], []>} : vector<256x4xf32>, vector<4x128xf32>, vector<256x128xf32> -> vector<256x128xf32>
    %c0_8 = arith.constant 0 : index
    %c0_9 = arith.constant 0 : index
    %5 = vector.load %arg6[%c0_8, %c0_9] : memref<256x128xf32, #tpu.memory_space<vmem>>, vector<256x128xf32>
    tpu.vector_store %arg6[%c0_8, %c0_9], %4 {strides = array<i32>} : memref<256x128xf32, #tpu.memory_space<vmem>>, vector<256x128xf32>,
    %c0_10 = arith.constant 0 : index
    %c0_11 = arith.constant 0 : index
    %c1 = arith.constant 1 : index
    %c0_12 = arith.constant 0 : index
    %6 = vector.load %arg2[%c0_10, %c0_11, %c1, %c0_12] : memref<1x18x18x4xf32, #tpu.memory_space<vmem>>, vector<1x16x16x4xf32>
    %7 = vector.shape_cast %6 : vector<1x16x16x4xf32> to vector<256x4xf32>
    %c0_13 = arith.constant 0 : index
    %c0_14 = arith.constant 0 : index
    %c1_15 = arith.constant 1 : index
    %c0_16 = arith.constant 0 : index
    %c0_17 = arith.constant 0 : index
    %8 = vector.load %arg3[%c0_13, %c0_14, %c1_15, %c0_16, %c0_17] : memref<1x3x3x4x128xf32, #tpu.memory_space<vmem>>, vector<1x1x1x4x128xf32>
    %9 = vector.shape_cast %8 : vector<1x1x1x4x128xf32> to vector<4x128xf32>
    %cst_18 = arith.constant dense<0.000000e+00> : vector<256x128xf32>
    %10 = tpu.matmul %7, %9, %cst_18 {dimension_numbers = #tpu.dot_dimension_numbers<[1], [0], [0], [1], [0, 0, 1, 1], [], []>} : vector<256x4xf32>, vector<4x128xf32>, vector<256x128xf32> -> vector<256x128xf32>
    %c0_19 = arith.constant 0 : index
    %c0_20 = arith.constant 0 : index
    %11 = vector.load %arg6[%c0_19, %c0_20] : memref<256x128xf32, #tpu.memory_space<vmem>>, vector<256x128xf32>
    %12 = arith.addf %11, %10 : vector<256x128xf32>
    %c0_21 = arith.constant 0 : index
    %c0_22 = arith.constant 0 : index
    %13 = vector.load %arg6[%c0_21, %c0_22] : memref<256x128xf32, #tpu.memory_space<vmem>>, vector<256x128xf32>
    tpu.vector_store %arg6[%c0_21, %c0_22], %12 {strides = array<i32>} : memref<256x128xf32, #tpu.memory_space<vmem>>, vector<256x128xf32>,
    %c0_23 = arith.constant 0 : index
    %c0_24 = arith.constant 0 : index
    %c2 = arith.constant 2 : index
    %c0_25 = arith.constant 0 : index
    %14 = vector.load %arg2[%c0_23, %c0_24, %c2, %c0_25] : memref<1x18x18x4xf32, #tpu.memory_space<vmem>>, vector<1x16x16x4xf32>
    %15 = vector.shape_cast %14 : vector<1x16x16x4xf32> to vector<256x4xf32>
    %c0_26 = arith.constant 0 : index
    %c0_27 = arith.constant 0 : index
    %c2_28 = arith.constant 2 : index
    %c0_29 = arith.constant 0 : index
    %c0_30 = arith.constant 0 : index
    %16 = vector.load %arg3[%c0_26, %c0_27, %c2_28, %c0_29, %c0_30] : memref<1x3x3x4x128xf32, #tpu.memory_space<vmem>>, vector<1x1x1x4x128xf32>
    %17 = vector.shape_cast %16 : vector<1x1x1x4x128xf32> to vector<4x128xf32>
    %cst_31 = arith.constant dense<0.000000e+00> : vector<256x128xf32>
    %18 = tpu.matmul %15, %17, %cst_31 {dimension_numbers = #tpu.dot_dimension_numbers<[1], [0], [0], [1], [0, 0, 1, 1], [], []>} : vector<256x4xf32>, vector<4x128xf32>, vector<256x128xf32> -> vector<256x128xf32>
    %c0_32 = arith.constant 0 : index
    %c0_33 = arith.constant 0 : index
    %19 = vector.load %arg6[%c0_32, %c0_33] : memref<256x128xf32, #tpu.memory_space<vmem>>, vector<256x128xf32>
    %20 = arith.addf %19, %18 : vector<256x128xf32>
    %c0_34 = arith.constant 0 : index
    %c0_35 = arith.constant 0 : index
    %21 = vector.load %arg6[%c0_34, %c0_35] : memref<256x128xf32, #tpu.memory_space<vmem>>, vector<256x128xf32>
    tpu.vector_store %arg6[%c0_34, %c0_35], %20 {strides = array<i32>} : memref<256x128xf32, #tpu.memory_space<vmem>>, vector<256x128xf32>,
    %c0_36 = arith.constant 0 : index
    %c1_37 = arith.constant 1 : index
    %c0_38 = arith.constant 0 : index
    %c0_39 = arith.constant 0 : index
    %22 = vector.load %arg2[%c0_36, %c1_37, %c0_38, %c0_39] : memref<1x18x18x4xf32, #tpu.memory_space<vmem>>, vector<1x16x16x4xf32>
    %23 = vector.shape_cast %22 : vector<1x16x16x4xf32> to vector<256x4xf32>
    %c0_40 = arith.constant 0 : index
    %c1_41 = arith.constant 1 : index
    %c0_42 = arith.constant 0 : index
    %c0_43 = arith.constant 0 : index
    %c0_44 = arith.constant 0 : index
    %24 = vector.load %arg3[%c0_40, %c1_41, %c0_42, %c0_43, %c0_44] : memref<1x3x3x4x128xf32, #tpu.memory_space<vmem>>, vector<1x1x1x4x128xf32>
    %25 = vector.shape_cast %24 : vector<1x1x1x4x128xf32> to vector<4x128xf32>
    %cst_45 = arith.constant dense<0.000000e+00> : vector<256x128xf32>
    %26 = tpu.matmul %23, %25, %cst_45 {dimension_numbers = #tpu.dot_dimension_numbers<[1], [0], [0], [1], [0, 0, 1, 1], [], []>} : vector<256x4xf32>, vector<4x128xf32>, vector<256x128xf32> -> vector<256x128xf32>
    %c0_46 = arith.constant 0 : index
    %c0_47 = arith.constant 0 : index
    %27 = vector.load %arg6[%c0_46, %c0_47] : memref<256x128xf32, #tpu.memory_space<vmem>>, vector<256x128xf32>
    %28 = arith.addf %27, %26 : vector<256x128xf32>
    %c0_48 = arith.constant 0 : index
    %c0_49 = arith.constant 0 : index
    %29 = vector.load %arg6[%c0_48, %c0_49] : memref<256x128xf32, #tpu.memory_space<vmem>>, vector<256x128xf32>
    tpu.vector_store %arg6[%c0_48, %c0_49], %28 {strides = array<i32>} : memref<256x128xf32, #tpu.memory_space<vmem>>, vector<256x128xf32>,
    %c0_50 = arith.constant 0 : index
    %c1_51 = arith.constant 1 : index
    %c1_52 = arith.constant 1 : index
    %c0_53 = arith.constant 0 : index
    %30 = vector.load %arg2[%c0_50, %c1_51, %c1_52, %c0_53] : memref<1x18x18x4xf32, #tpu.memory_space<vmem>>, vector<1x16x16x4xf32>
    %31 = vector.shape_cast %30 : vector<1x16x16x4xf32> to vector<256x4xf32>
    %c0_54 = arith.constant 0 : index
    %c1_55 = arith.constant 1 : index
    %c1_56 = arith.constant 1 : index
    %c0_57 = arith.constant 0 : index
    %c0_58 = arith.constant 0 : index
    %32 = vector.load %arg3[%c0_54, %c1_55, %c1_56, %c0_57, %c0_58] : memref<1x3x3x4x128xf32, #tpu.memory_space<vmem>>, vector<1x1x1x4x128xf32>
    %33 = vector.shape_cast %32 : vector<1x1x1x4x128xf32> to vector<4x128xf32>
    %cst_59 = arith.constant dense<0.000000e+00> : vector<256x128xf32>
    %34 = tpu.matmul %31, %33, %cst_59 {dimension_numbers = #tpu.dot_dimension_numbers<[1], [0], [0], [1], [0, 0, 1, 1], [], []>} : vector<256x4xf32>, vector<4x128xf32>, vector<256x128xf32> -> vector<256x128xf32>
    %c0_60 = arith.constant 0 : index
    %c0_61 = arith.constant 0 : index
    %35 = vector.load %arg6[%c0_60, %c0_61] : memref<256x128xf32, #tpu.memory_space<vmem>>, vector<256x128xf32>
    %36 = arith.addf %35, %34 : vector<256x128xf32>
    %c0_62 = arith.constant 0 : index
    %c0_63 = arith.constant 0 : index
    %37 = vector.load %arg6[%c0_62, %c0_63] : memref<256x128xf32, #tpu.memory_space<vmem>>, vector<256x128xf32>
    tpu.vector_store %arg6[%c0_62, %c0_63], %36 {strides = array<i32>} : memref<256x128xf32, #tpu.memory_space<vmem>>, vector<256x128xf32>,
    %c0_64 = arith.constant 0 : index
    %c1_65 = arith.constant 1 : index
    %c2_66 = arith.constant 2 : index
    %c0_67 = arith.constant 0 : index
    %38 = vector.load %arg2[%c0_64, %c1_65, %c2_66, %c0_67] : memref<1x18x18x4xf32, #tpu.memory_space<vmem>>, vector<1x16x16x4xf32>
    %39 = vector.shape_cast %38 : vector<1x16x16x4xf32> to vector<256x4xf32>
    %c0_68 = arith.constant 0 : index
    %c1_69 = arith.constant 1 : index
    %c2_70 = arith.constant 2 : index
    %c0_71 = arith.constant 0 : index
    %c0_72 = arith.constant 0 : index
    %40 = vector.load %arg3[%c0_68, %c1_69, %c2_70, %c0_71, %c0_72] : memref<1x3x3x4x128xf32, #tpu.memory_space<vmem>>, vector<1x1x1x4x128xf32>
    %41 = vector.shape_cast %40 : vector<1x1x1x4x128xf32> to vector<4x128xf32>
    %cst_73 = arith.constant dense<0.000000e+00> : vector<256x128xf32>
    %42 = tpu.matmul %39, %41, %cst_73 {dimension_numbers = #tpu.dot_dimension_numbers<[1], [0], [0], [1], [0, 0, 1, 1], [], []>} : vector<256x4xf32>, vector<4x128xf32>, vector<256x128xf32> -> vector<256x128xf32>
    %c0_74 = arith.constant 0 : index
    %c0_75 = arith.constant 0 : index
    %43 = vector.load %arg6[%c0_74, %c0_75] : memref<256x128xf32, #tpu.memory_space<vmem>>, vector<256x128xf32>
    %44 = arith.addf %43, %42 : vector<256x128xf32>
    %c0_76 = arith.constant 0 : index
    %c0_77 = arith.constant 0 : index
    %45 = vector.load %arg6[%c0_76, %c0_77] : memref<256x128xf32, #tpu.memory_space<vmem>>, vector<256x128xf32>
    tpu.vector_store %arg6[%c0_76, %c0_77], %44 {strides = array<i32>} : memref<256x128xf32, #tpu.memory_space<vmem>>, vector<256x128xf32>,
    %c0_78 = arith.constant 0 : index
    %c2_79 = arith.constant 2 : index
    %c0_80 = arith.constant 0 : index
    %c0_81 = arith.constant 0 : index
    %46 = vector.load %arg2[%c0_78, %c2_79, %c0_80, %c0_81] : memref<1x18x18x4xf32, #tpu.memory_space<vmem>>, vector<1x16x16x4xf32>
    %47 = vector.shape_cast %46 : vector<1x16x16x4xf32> to vector<256x4xf32>
    %c0_82 = arith.constant 0 : index
    %c2_83 = arith.constant 2 : index
    %c0_84 = arith.constant 0 : index
    %c0_85 = arith.constant 0 : index
    %c0_86 = arith.constant 0 : index
    %48 = vector.load %arg3[%c0_82, %c2_83, %c0_84, %c0_85, %c0_86] : memref<1x3x3x4x128xf32, #tpu.memory_space<vmem>>, vector<1x1x1x4x128xf32>
    %49 = vector.shape_cast %48 : vector<1x1x1x4x128xf32> to vector<4x128xf32>
    %cst_87 = arith.constant dense<0.000000e+00> : vector<256x128xf32>
    %50 = tpu.matmul %47, %49, %cst_87 {dimension_numbers = #tpu.dot_dimension_numbers<[1], [0], [0], [1], [0, 0, 1, 1], [], []>} : vector<256x4xf32>, vector<4x128xf32>, vector<256x128xf32> -> vector<256x128xf32>
    %c0_88 = arith.constant 0 : index
    %c0_89 = arith.constant 0 : index
    %51 = vector.load %arg6[%c0_88, %c0_89] : memref<256x128xf32, #tpu.memory_space<vmem>>, vector<256x128xf32>
    %52 = arith.addf %51, %50 : vector<256x128xf32>
    %c0_90 = arith.constant 0 : index
    %c0_91 = arith.constant 0 : index
    %53 = vector.load %arg6[%c0_90, %c0_91] : memref<256x128xf32, #tpu.memory_space<vmem>>, vector<256x128xf32>
    tpu.vector_store %arg6[%c0_90, %c0_91], %52 {strides = array<i32>} : memref<256x128xf32, #tpu.memory_space<vmem>>, vector<256x128xf32>,
    %c0_92 = arith.constant 0 : index
    %c2_93 = arith.constant 2 : index
    %c1_94 = arith.constant 1 : index
    %c0_95 = arith.constant 0 : index
    %54 = vector.load %arg2[%c0_92, %c2_93, %c1_94, %c0_95] : memref<1x18x18x4xf32, #tpu.memory_space<vmem>>, vector<1x16x16x4xf32>
    %55 = vector.shape_cast %54 : vector<1x16x16x4xf32> to vector<256x4xf32>
    %c0_96 = arith.constant 0 : index
    %c2_97 = arith.constant 2 : index
    %c1_98 = arith.constant 1 : index
    %c0_99 = arith.constant 0 : index
    %c0_100 = arith.constant 0 : index
    %56 = vector.load %arg3[%c0_96, %c2_97, %c1_98, %c0_99, %c0_100] : memref<1x3x3x4x128xf32, #tpu.memory_space<vmem>>, vector<1x1x1x4x128xf32>
    %57 = vector.shape_cast %56 : vector<1x1x1x4x128xf32> to vector<4x128xf32>
    %cst_101 = arith.constant dense<0.000000e+00> : vector<256x128xf32>
    %58 = tpu.matmul %55, %57, %cst_101 {dimension_numbers = #tpu.dot_dimension_numbers<[1], [0], [0], [1], [0, 0, 1, 1], [], []>} : vector<256x4xf32>, vector<4x128xf32>, vector<256x128xf32> -> vector<256x128xf32>
    %c0_102 = arith.constant 0 : index
    %c0_103 = arith.constant 0 : index
    %59 = vector.load %arg6[%c0_102, %c0_103] : memref<256x128xf32, #tpu.memory_space<vmem>>, vector<256x128xf32>
    %60 = arith.addf %59, %58 : vector<256x128xf32>
    %c0_104 = arith.constant 0 : index
    %c0_105 = arith.constant 0 : index
    %61 = vector.load %arg6[%c0_104, %c0_105] : memref<256x128xf32, #tpu.memory_space<vmem>>, vector<256x128xf32>
    tpu.vector_store %arg6[%c0_104, %c0_105], %60 {strides = array<i32>} : memref<256x128xf32, #tpu.memory_space<vmem>>, vector<256x128xf32>,
    %c0_106 = arith.constant 0 : index
    %c2_107 = arith.constant 2 : index
    %c2_108 = arith.constant 2 : index
    %c0_109 = arith.constant 0 : index
    %62 = vector.load %arg2[%c0_106, %c2_107, %c2_108, %c0_109] : memref<1x18x18x4xf32, #tpu.memory_space<vmem>>, vector<1x16x16x4xf32>
    %63 = vector.shape_cast %62 : vector<1x16x16x4xf32> to vector<256x4xf32>
    %c0_110 = arith.constant 0 : index
    %c2_111 = arith.constant 2 : index
    %c2_112 = arith.constant 2 : index
    %c0_113 = arith.constant 0 : index
    %c0_114 = arith.constant 0 : index
    %64 = vector.load %arg3[%c0_110, %c2_111, %c2_112, %c0_113, %c0_114] : memref<1x3x3x4x128xf32, #tpu.memory_space<vmem>>, vector<1x1x1x4x128xf32>
    %65 = vector.shape_cast %64 : vector<1x1x1x4x128xf32> to vector<4x128xf32>
    %cst_115 = arith.constant dense<0.000000e+00> : vector<256x128xf32>
    %66 = tpu.matmul %63, %65, %cst_115 {dimension_numbers = #tpu.dot_dimension_numbers<[1], [0], [0], [1], [0, 0, 1, 1], [], []>} : vector<256x4xf32>, vector<4x128xf32>, vector<256x128xf32> -> vector<256x128xf32>
    %c0_116 = arith.constant 0 : index
    %c0_117 = arith.constant 0 : index
    %67 = vector.load %arg6[%c0_116, %c0_117] : memref<256x128xf32, #tpu.memory_space<vmem>>, vector<256x128xf32>
    %68 = arith.addf %67, %66 : vector<256x128xf32>
    %c0_118 = arith.constant 0 : index
    %c0_119 = arith.constant 0 : index
    %69 = vector.load %arg6[%c0_118, %c0_119] : memref<256x128xf32, #tpu.memory_space<vmem>>, vector<256x128xf32>
    tpu.vector_store %arg6[%c0_118, %c0_119], %68 {strides = array<i32>} : memref<256x128xf32, #tpu.memory_space<vmem>>, vector<256x128xf32>,
    %c0_120 = arith.constant 0 : index
    %c0_121 = arith.constant 0 : index
    %70 = vector.load %arg6[%c0_120, %c0_121] : memref<256x128xf32, #tpu.memory_space<vmem>>, vector<256x128xf32>
    %c0_122 = arith.constant 0 : index
    %c0_123 = arith.constant 0 : index
    %71 = vector.load %arg4[%c0_122, %c0_123] : memref<1x128xf32, #tpu.memory_space<vmem>>, vector<1x128xf32>
    %72 = vector.broadcast %71 : vector<1x128xf32> to vector<256x128xf32>
    %73 = arith.addf %70, %72 : vector<256x128xf32>
    %74 = vector.shape_cast %73 : vector<256x128xf32> to vector<1x16x16x128xf32>
    %c0_124 = arith.constant 0 : index
    %c0_125 = arith.constant 0 : index
    %c0_126 = arith.constant 0 : index
    %c0_127 = arith.constant 0 : index
    %75 = vector.load %arg5[%c0_124, %c0_125, %c0_126, %c0_127] : memref<1x16x16x128xf32, #tpu.memory_space<vmem>>, vector<1x16x16x128xf32>
    tpu.vector_store %arg5[%c0_124, %c0_125, %c0_126, %c0_127], %74 {strides = array<i32>} : memref<1x16x16x128xf32, #tpu.memory_space<vmem>>, vector<1x16x16x128xf32>,
    return
  }
  func.func @transform_0(%arg0: i32, %arg1: i32) -> (i32, i32, i32, i32) {
    %c0_i32 = arith.constant 0 : i32
    %c0_i32_0 = arith.constant 0 : i32
    %c0_i32_1 = arith.constant 0 : i32
    %c0_i32_2 = arith.constant 0 : i32
    return %arg0, %c0_i32, %c0_i32_0, %c0_i32_1 : i32, i32, i32, i32
  }
  func.func @transform_1(%arg0: i32, %arg1: i32) -> (i32, i32, i32, i32, i32) {
    %c0_i32 = arith.constant 0 : i32
    %c0_i32_0 = arith.constant 0 : i32
    %c0_i32_1 = arith.constant 0 : i32
    %c0_i32_2 = arith.constant 0 : i32
    %c0_i32_3 = arith.constant 0 : i32
    return %arg1, %c0_i32, %c0_i32_0, %c0_i32_1, %c0_i32_2 : i32, i32, i32, i32, i32
  }
  func.func @transform_2(%arg0: i32, %arg1: i32) -> (i32, i32) {
    %c0_i32 = arith.constant 0 : i32
    %c0_i32_0 = arith.constant 0 : i32
    return %c0_i32, %arg1 : i32, i32
  }
  func.func @transform_3(%arg0: i32, %arg1: i32) -> (i32, i32, i32, i32) {
    %c0_i32 = arith.constant 0 : i32
    %c0_i32_0 = arith.constant 0 : i32
    %c0_i32_1 = arith.constant 0 : i32
    return %arg0, %c0_i32, %c0_i32_0, %arg1 : i32, i32, i32, i32
  }
}

</mosaic_0001>

<llo_original>
// kernel: tpu_custom_call.1
$region0: #{tpu_custom_call.1}
  #allocation0 [shape = 'u32[]', space=smem, size = 0x4, offset = 0x4, fixed_abs, tag = 'smem constant byte address 0x4 - core index']
  #allocation1 [shape = 'u32[144,128]{1,0:T(1,128)}', space=vmem, size = 0x12000, scoped, tag = 'internal scratch']
  #allocation2 [shape = 'f32[256,128]{1,0:T(8,128)}', space=vmem, size = 0x20000, scoped, tag = 'scratch operand']
  %s0 = inlined_call_operand.vmem [shape: f32[2,18,18,4], index: 0, kind: input, shape index: {}]
  %s1 = inlined_call_operand.vmem [shape: f32[1,3,3,4,128], index: 1, kind: input, shape index: {}]
  %s2 = inlined_call_operand.vmem [shape: f32[1,128], index: 2, kind: input, shape index: {}]
  %s3 = inlined_call_operand.hbm [shape: f32[2,16,16,128], index: 3, kind: output, shape index: {}]
  %s4 = sld [smem:[#allocation0]]
  $region45: #{tpu_custom_call.1} parent=0
    _
  %s6 = ssub.s32 1, %s4
  %s7 = scalar_select 0, %s6, %s4
  $region1: #{tpu_custom_call.1} parent=0
    #allocation3 [shape = 'u8[262144]{0}', space=vmem, size = 0x40000, scoped, tag = 'output window, operand 0']
    #allocation4 [shape = 's32[2]{0}', space=sflag, size = 0x8, scoped, tag = 'scoped memory for tpu_custom_call.1']
    %8 = vsyncpa [#allocation4], 0
    %s9 = scalar_lea.sflag [#allocation4], 1
    %10 = vsyncpa %s9, 0
    loop: start=0, step=1, limit=4
    $region2: #{tpu_custom_call.1} parent=1 // loop_pre_header
      _
    $region3: #{tpu_custom_call.1} parent=1 // loop_header
      %s12 = sphi 0, %s16
      %p13 = scmp.ge.s32.totalorder %s12, 4
      %s19 = sphi 0, %s31
      %s20 = sphi 0, %s27
      %s21 = sphi 0, %s19
      %s22 = sphi 0, %s20
      %s23 = sphi 0, %s21
      %s24 = sphi 0, %s22
      %s34 = sphi 0, %s36
      %s37 = sphi 0, %s34
      %s38 = sphi 0, %s37
      %s54 = sphi 0, %s38
      %s60 = sphi 0, %s62
      %s63 = sphi 0, %s60
      %s64 = sphi 0, %s63
      %s80 = sphi 0, %s64
      %s86 = sphi 0, %s88
      %s89 = sphi 0, %s86
      %s90 = sphi 0, %s89
      %s106 = sphi 0, %s90
      %s114 = sphi 0, %s116
      %s117 = sphi 0, %s114
      %s118 = sphi 0, %s117
      %s134 = sphi 0, %s118
    $region4: #{tpu_custom_call.1} parent=1 // loop_header_branch
      %15 = sbr.rel (%p13) target = $region8
    $region5: #{tpu_custom_call.1} parent=1 // loop_body
      %s17 = ssub.s32 %s12, 1
      %s18 = ssub.s32 %s12, 2
      %s25 = sadd.s32 1, %s20
      %p26 = scmp.ge.s32.totalorder %s25, 1
      %s27 = scalar_select %p26, 0, %s25
      %s28 = sadd.s32 1, %s19
      %s29 = scalar_select %p26, %s28, %s19
      %p30 = scmp.ge.s32.totalorder %s29, 2
      %s31 = scalar_select %p30, 0, %s29
      %s32 = ssub.s32 %s19, %s31
      %p33 = scmp.eq.s32.totalorder %s32, 0
      %s35 = sadd.s32 %s34, 1
      %s36 = scalar_select %p33, %s34, %s35
      %p39 = pneg %p33
      %p40 = scmp.eq.s32.totalorder %s12, 1
      %p41 = por %p39, %p40
      %p42 = scmp.ne.s32.totalorder %s34, %s37
      %p43 = scmp.eq.s32.totalorder %s12, 0
      %p44 = por %p42, %p43
      %p45 = scmp.ne.s32.totalorder %s34, %s37
      %p46 = scmp.eq.s32.totalorder %s17, 1
      %p47 = por %p45, %p46
      %p48 = scmp.ne.s32.totalorder %s37, %s38
      %p49 = scmp.eq.s32.totalorder %s17, 0
      %p50 = por %p48, %p49
      %p51 = scmp.ne.s32.totalorder %s37, %s38
      %p52 = scmp.eq.s32.totalorder %s18, 1
      %p53 = por %p51, %p52
      %p55 = scmp.ne.s32.totalorder %s38, %s54
      %p56 = scmp.eq.s32.totalorder %s18, 0
      %p57 = por %p55, %p56
      %s58 = ssub.s32 %s20, %s27
      %p59 = scmp.eq.s32.totalorder %s58, 0
      %s61 = sadd.s32 %s60, 1
      %s62 = scalar_select %p59, %s60, %s61
      %p65 = pneg %p59
      %p66 = scmp.eq.s32.totalorder %s12, 1
      %p67 = por %p65, %p66
      %p68 = scmp.ne.s32.totalorder %s60, %s63
      %p69 = scmp.eq.s32.totalorder %s12, 0
      %p70 = por %p68, %p69
      %p71 = scmp.ne.s32.totalorder %s60, %s63
      %p72 = scmp.eq.s32.totalorder %s17, 1
      %p73 = por %p71, %p72
      %p74 = scmp.ne.s32.totalorder %s63, %s64
      %p75 = scmp.eq.s32.totalorder %s17, 0
      %p76 = por %p74, %p75
      %p77 = scmp.ne.s32.totalorder %s63, %s64
      %p78 = scmp.eq.s32.totalorder %s18, 1
      %p79 = por %p77, %p78
      %p81 = scmp.ne.s32.totalorder %s64, %s80
      %p82 = scmp.eq.s32.totalorder %s18, 0
      %p83 = por %p81, %p82
      %s84 = ssub.s32 %s20, %s27
      %p85 = scmp.eq.s32.totalorder %s84, 0
      %s87 = sadd.s32 %s86, 1
      %s88 = scalar_select %p85, %s86, %s87
      %p91 = pneg %p85
      %p92 = scmp.eq.s32.totalorder %s12, 1
      %p93 = por %p91, %p92
      %p94 = scmp.ne.s32.totalorder %s86, %s89
      %p95 = scmp.eq.s32.totalorder %s12, 0
      %p96 = por %p94, %p95
      %p97 = scmp.ne.s32.totalorder %s86, %s89
      %p98 = scmp.eq.s32.totalorder %s17, 1
      %p99 = por %p97, %p98
      %p100 = scmp.ne.s32.totalorder %s89, %s90
      %p101 = scmp.eq.s32.totalorder %s17, 0
      %p102 = por %p100, %p101
      %p103 = scmp.ne.s32.totalorder %s89, %s90
      %p104 = scmp.eq.s32.totalorder %s18, 1
      %p105 = por %p103, %p104
      %p107 = scmp.ne.s32.totalorder %s90, %s106
      %p108 = scmp.eq.s32.totalorder %s18, 0
      %p109 = por %p107, %p108
      %s110 = ssub.s32 %s19, %s31
      %s111 = ssub.s32 %s20, %s27
      %s112 = sor.u32 %s110, %s111
      %p113 = scmp.eq.s32.totalorder %s112, 0
      %s115 = sadd.s32 %s114, 1
      %s116 = scalar_select %p113, %s114, %s115
      %p119 = pneg %p113
      %p120 = scmp.eq.s32.totalorder %s12, 1
      %p121 = por %p119, %p120
      %p122 = scmp.ne.s32.totalorder %s114, %s117
      %p123 = scmp.eq.s32.totalorder %s12, 0
      %p124 = por %p122, %p123
      %p125 = scmp.ne.s32.totalorder %s114, %s117
      %p126 = scmp.eq.s32.totalorder %s17, 1
      %p127 = por %p125, %p126
      %p128 = scmp.ne.s32.totalorder %s117, %s118
      %p129 = scmp.eq.s32.totalorder %s17, 0
      %p130 = por %p128, %p129
      %p131 = scmp.ne.s32.totalorder %s117, %s118
      %p132 = scmp.eq.s32.totalorder %s18, 1
      %p133 = por %p131, %p132
      %p135 = scmp.ne.s32.totalorder %s118, %s134
      %p136 = scmp.eq.s32.totalorder %s18, 0
      %p137 = por %p135, %p136
      %p138 = scmp.le.s32.totalorder 1, %s12
      %p139 = scmp.lt.s32.totalorder %s12, 3
      %p140 = pnand %p138, %p139
      %p141 = pneg %p140
      // Predicated region
      $region9: #{tpu_custom_call.1} parent=5 // pred_check
        _
      $region10: #{tpu_custom_call.1} parent=5 // pred_check_branch
        %143 = sbr.rel (%p140) target = $region12
      $region11: #{tpu_custom_call.1} parent=5 // pred_region
        %s144 = ssub.s32 %s12, 1
        // Predicated region
        $region13: #{tpu_custom_call.1} parent=11 // pred_check
          %p145 = pneg %p76
        $region14: #{tpu_custom_call.1} parent=11 // pred_check_branch
          %147 = sbr.rel (%p145) target = $region16
        $region15: #{tpu_custom_call.1} parent=11 // pred_region
          %p148 = scmp.lt.s32.totalorder %s22, 0
          %s149 = scalar_select %p148, %s22, 0
          %s150 = smul.addr %s149, 9
          %s151 = smul.addr %s150, 4
          %s152 = scalar_lea.vmem %s1, %s151
        $region16: #{tpu_custom_call.1} parent=11 // pred_fallthru
          _
        // Predicated region
        $region17: #{tpu_custom_call.1} parent=11 // pred_check
          %p153 = pneg %p102
        $region18: #{tpu_custom_call.1} parent=11 // pred_check_branch
          %155 = sbr.rel (%p153) target = $region20
        $region19: #{tpu_custom_call.1} parent=11 // pred_region
          %p156 = scmp.lt.s32.totalorder %s22, 0
          %s157 = scalar_select %p156, %s22, 0
          %s158 = scalar_lea.vmem %s2, %s157
        $region20: #{tpu_custom_call.1} parent=11 // pred_fallthru
          _
      $region12: #{tpu_custom_call.1} parent=5 // pred_fallthru
        _
      %p159 = scmp.lt.s32.totalorder %s12, 2
      // Predicated region
      $region21: #{tpu_custom_call.1} parent=5 // pred_check
        %p160 = pneg %p159
      $region22: #{tpu_custom_call.1} parent=5 // pred_check_branch
        %162 = sbr.rel (%p160) target = $region24
      $region23: #{tpu_custom_call.1} parent=5 // pred_region
        // Predicated region
        $region25: #{tpu_custom_call.1} parent=23 // pred_check
          %p163 = pneg %p44
        $region26: #{tpu_custom_call.1} parent=23 // pred_check_branch
          %165 = sbr.rel (%p163) target = $region28
        $region27: #{tpu_custom_call.1} parent=23 // pred_region
          %p166 = scmp.lt.s32.totalorder %s19, 1
          %s167 = scalar_select %p166, %s19, 1
          %s168 = smul.addr %s167, 54
          %s169 = smul.addr %s168, 8
          %s170 = scalar_lea.vmem %s0, %s169
        $region28: #{tpu_custom_call.1} parent=23 // pred_fallthru
          _
      $region24: #{tpu_custom_call.1} parent=5 // pred_fallthru
        _
      %p171 = scmp.le.s32.totalorder 1, %s12
      %p172 = scmp.lt.s32.totalorder %s12, 3
      %p173 = pnand %p171, %p172
      %p174 = pneg %p173
      // Predicated region
      $region29: #{tpu_custom_call.1} parent=5 // pred_check
        _
      $region30: #{tpu_custom_call.1} parent=5 // pred_check_branch
        %176 = sbr.rel (%p173) target = $region32
      $region31: #{tpu_custom_call.1} parent=5 // pred_region
        %s177 = ssub.s32 %s12, 1
        %p178 = scmp.lt.s32.totalorder %s21, 1
        %s179 = scalar_select %p178, %s21, 1
        %s180 = smul.addr %s179, 54
        %s181 = smul.addr %s180, 8
        %s182 = scalar_lea.vmem %s0, %s181
        %p183 = pneg %p50
        %p184 = pneg %p47
        %p185 = scmp.lt.s32.totalorder %s22, 0
        %s186 = scalar_select %p185, %s22, 0
        %s187 = smul.addr %s186, 9
        %s188 = smul.addr %s187, 4
        %s189 = scalar_lea.vmem %s1, %s188
        %p190 = pneg %p76
        %p191 = pneg %p73
        %p192 = scmp.lt.s32.totalorder %s22, 0
        %s193 = scalar_select %p192, %s22, 0
        %s194 = scalar_lea.vmem %s2, %s193
        %p195 = pneg %p102
        %p196 = pneg %p99
        %p197 = pneg %p130
        %p198 = pneg %p127
        %s199 = sand.u32 %s117, 1
        %s200 = scalar_lea.sflag [#allocation4], %s199
        %s201 = sand.u32 %s117, 1
        %s202 = smul.addr %s201, 256
        %s203 = scalar_lea.vmem [#allocation3], %s202
        %p204 = scmp.lt.s32.totalorder %s21, 1
        %s205 = scalar_select %p204, %s21, 1
        %s206 = smul.addr %s205, 54
        %s207 = smul.addr %s206, 8
        %s208 = scalar_lea.vmem %s0, %s207
        %p209 = scmp.lt.s32.totalorder %s22, 0
        %s210 = scalar_select %p209, %s22, 0
        %s211 = smul.addr %s210, 9
        %s212 = smul.addr %s211, 4
        %s213 = scalar_lea.vmem %s1, %s212
        %p214 = scmp.lt.s32.totalorder %s22, 0
        %s215 = scalar_select %p214, %s22, 0
        %s216 = scalar_lea.vmem %s2, %s215
        %v217 = vld [vmem:[%s208] sm:$0xff]
        %v218 = vld [vmem:[%s208 + $0x8] sm:$0xff]
        %v219 = vld [vmem:[%s208 + $0x18] sm:$0xff]
        %v220 = vld [vmem:[%s208 + $0x20] sm:$0xff]
        %v221 = vld [vmem:[%s208 + $0x30] sm:$0xff]
        %v222 = vld [vmem:[%s208 + $0x38] sm:$0xff]
        %v223 = vld [vmem:[%s208 + $0x48] sm:$0xff]
        %v224 = vld [vmem:[%s208 + $0x50] sm:$0xff]
        %v225 = vld [vmem:[%s208 + $0x60] sm:$0xff]
        %v226 = vld [vmem:[%s208 + $0x68] sm:$0xff]
        %v227 = vld [vmem:[%s208 + $0x78] sm:$0xff]
        %v228 = vld [vmem:[%s208 + $0x80] sm:$0xff]
        %v229 = vld [vmem:[%s208 + $0x90] sm:$0xff]
        %v230 = vld [vmem:[%s208 + $0x98] sm:$0xff]
        %v231 = vld [vmem:[%s208 + $0xa8] sm:$0xff]
        %v232 = vld [vmem:[%s208 + $0xb0] sm:$0xff]
        %v233 = vld [vmem:[%s208 + $0xc0] sm:$0xff]
        %v234 = vld [vmem:[%s208 + $0xc8] sm:$0xff]
        %v235 = vld [vmem:[%s208 + $0xd8] sm:$0xff]
        %v236 = vld [vmem:[%s208 + $0xe0] sm:$0xff]
        %v237 = vld [vmem:[%s208 + $0xf0] sm:$0xff]
        %v238 = vld [vmem:[%s208 + $0xf8] sm:$0xff]
        %v239 = vld [vmem:[%s208 + $0x108] sm:$0xff]
        %v240 = vld [vmem:[%s208 + $0x110] sm:$0xff]
        %v241 = vld [vmem:[%s208 + $0x120] sm:$0xff]
        %v242 = vld [vmem:[%s208 + $0x128] sm:$0xff]
        %v243 = vld [vmem:[%s208 + $0x138] sm:$0xff]
        %v244 = vld [vmem:[%s208 + $0x140] sm:$0xff]
        %v245 = vld [vmem:[%s208 + $0x150] sm:$0xff]
        %v246 = vld [vmem:[%s208 + $0x158] sm:$0xff]
        %v247 = vld [vmem:[%s208 + $0x168] sm:$0xff]
        %v248 = vld [vmem:[%s208 + $0x170] sm:$0xff]
        %v249 = vld [vmem:[%s213] sm:$0xf]
        %vm250 = vcmask 31744
        %v252 = vsel %vm250, %v217, 0
        %v255 = vsel %vm250, %v218, 0
        %v258 = vsel %vm250, %v219, 0
        %v261 = vsel %vm250, %v220, 0
        %v264 = vsel %vm250, %v221, 0
        %v267 = vsel %vm250, %v222, 0
        %v270 = vsel %vm250, %v223, 0
        %v273 = vsel %vm250, %v224, 0
        %v276 = vsel %vm250, %v225, 0
        %v279 = vsel %vm250, %v226, 0
        %v282 = vsel %vm250, %v227, 0
        %v285 = vsel %vm250, %v228, 0
        %v288 = vsel %vm250, %v229, 0
        %v291 = vsel %vm250, %v230, 0
        %v294 = vsel %vm250, %v231, 0
        %v297 = vsel %vm250, %v232, 0
        %v300 = vsel %vm250, %v233, 0
        %v303 = vsel %vm250, %v234, 0
        %v306 = vsel %vm250, %v235, 0
        %v309 = vsel %vm250, %v236, 0
        %v312 = vsel %vm250, %v237, 0
        %v315 = vsel %vm250, %v238, 0
        %v318 = vsel %vm250, %v239, 0
        %v321 = vsel %vm250, %v240, 0
        %v324 = vsel %vm250, %v241, 0
        %v327 = vsel %vm250, %v242, 0
        %v330 = vsel %vm250, %v243, 0
        %v333 = vsel %vm250, %v244, 0
        %v336 = vsel %vm250, %v245, 0
        %v339 = vsel %vm250, %v246, 0
        %v342 = vsel %vm250, %v247, 0
        %v345 = vsel %vm250, %v248, 0
        %vm347 = vcmask 1043456
        %v349 = vsel %vm347, %v249, 0
        %351 = vmatprep.subr.mxu0 0.0
        %352 = vmatpush1.msra.mxu0 0.0
        %353 = vmatprep.subr.mxu0 0.0
        %354 = vmatpush1.msra.mxu0 0.0
        %355 = vmatprep.subr.mxu0 0.0
        %356 = vmatpush1.msra.mxu0 0.0
        %357 = vmatprep.subr.mxu0 0.0
        %358 = vmatpush1.msra.mxu0 0.0
        %359 = vmatprep.subr.mxu0 0.0
        %360 = vmatpush1.msra.mxu0 0.0
        %361 = vmatprep.subr.mxu0 0.0
        %362 = vmatpush1.msra.mxu0 0.0
        %363 = vmatprep.subr.mxu0 0.0
        %364 = vmatpush1.msra.mxu0 0.0
        %365 = vmatprep.subr.mxu0 0.0
        %366 = vmatpush1.msra.mxu0 0.0
        %367 = vmatprep.subr.mxu0 0.0
        %368 = vmatpush1.msra.mxu0 0.0
        %369 = vmatprep.subr.mxu0 0.0
        %370 = vmatpush1.msra.mxu0 0.0
        %371 = vmatprep.subr.mxu0 0.0
        %372 = vmatpush1.msra.mxu0 0.0
        %373 = vmatprep.subr.mxu0 0.0
        %374 = vmatpush1.msra.mxu0 0.0
        %375 = vmatprep.subr.mxu0 0.0
        %376 = vmatpush1.msra.mxu0 0.0
        %377 = vmatprep.subr.mxu0 0.0
        %378 = vmatpush1.msra.mxu0 0.0
        %379 = vmatprep.subr.mxu0 0.0
        %380 = vmatpush1.msra.mxu0 0.0
        %381 = vmatprep.subr.mxu0 0.0
        %382 = vmatpush1.msra.mxu0 %v349
        %383 = vmatprep.subr.mxu0 0.0
        %384 = vmatpush2.msra.mxu0 0.0
        %385 = vmatprep.subr.mxu0 0.0
        %386 = vmatpush2.msra.mxu0 0.0
        %387 = vmatprep.subr.mxu0 0.0
        %388 = vmatpush2.msra.mxu0 0.0
        %389 = vmatprep.subr.mxu0 0.0
        %390 = vmatpush2.msra.mxu0 0.0
        %391 = vmatprep.subr.mxu0 0.0
        %392 = vmatpush2.msra.mxu0 0.0
        %393 = vmatprep.subr.mxu0 0.0
        %394 = vmatpush2.msra.mxu0 0.0
        %395 = vmatprep.subr.mxu0 0.0
        %396 = vmatpush2.msra.mxu0 0.0
        %397 = vmatprep.subr.mxu0 0.0
        %398 = vmatpush2.msra.mxu0 0.0
        %399 = vmatprep.subr.mxu0 0.0
        %400 = vmatpush2.msra.mxu0 0.0
        %401 = vmatprep.subr.mxu0 0.0
        %402 = vmatpush2.msra.mxu0 0.0
        %403 = vmatprep.subr.mxu0 0.0
        %404 = vmatpush2.msra.mxu0 0.0
        %405 = vmatprep.subr.mxu0 0.0
        %406 = vmatpush2.msra.mxu0 0.0
        %407 = vmatprep.subr.mxu0 0.0
        %408 = vmatpush2.msra.mxu0 0.0
        %409 = vmatprep.subr.mxu0 0.0
        %410 = vmatpush2.msra.mxu0 0.0
        %411 = vmatprep.subr.mxu0 0.0
        %412 = vmatpush2.msra.mxu0 0.0
        %413 = vmatprep.subr.mxu0 0.0
        %414 = vmatpush2.msra.mxu0 0.0
        %415 = vmatprep.mubr.f32.mxu0 0.0
        %416 = vmatmul.mubr.f32.gmra.mxu0 %v252
        %v417 = vpop.f32.mrf.mxu0
        %v418 = vadd.f32 0.0, %v417
        %v419 = vpop.f32.mrf.mxu0
        %420 = vmatprep.mubr.f32.mxu0 0.0
        %421 = vmatmul.mubr.f32.gmra.mxu0 %v255
        %v422 = vpop.f32.mrf.mxu0
        %v423 = vadd.f32 0.0, %v422
        %v424 = vpop.f32.mrf.mxu0
        %425 = vmatprep.mubr.f32.mxu0 0.0
        %426 = vmatmul.mubr.f32.gmra.mxu0 %v258
        %v427 = vpop.f32.mrf.mxu0
        %v428 = vadd.f32 0.0, %v427
        %v429 = vpop.f32.mrf.mxu0
        %430 = vmatprep.mubr.f32.mxu0 0.0
        %431 = vmatmul.mubr.f32.gmra.mxu0 %v261
        %v432 = vpop.f32.mrf.mxu0
        %v433 = vadd.f32 0.0, %v432
        %v434 = vpop.f32.mrf.mxu0
        %435 = vmatprep.mubr.f32.mxu0 0.0
        %436 = vmatmul.mubr.f32.gmra.mxu0 %v264
        %v437 = vpop.f32.mrf.mxu0
        %v438 = vadd.f32 0.0, %v437
        %v439 = vpop.f32.mrf.mxu0
        %440 = vmatprep.mubr.f32.mxu0 0.0
        %441 = vmatmul.mubr.f32.gmra.mxu0 %v267
        %v442 = vpop.f32.mrf.mxu0
        %v443 = vadd.f32 0.0, %v442
        %v444 = vpop.f32.mrf.mxu0
        %445 = vmatprep.mubr.f32.mxu0 0.0
        %446 = vmatmul.mubr.f32.gmra.mxu0 %v270
        %v447 = vpop.f32.mrf.mxu0
        %v448 = vadd.f32 0.0, %v447
        %v449 = vpop.f32.mrf.mxu0
        %450 = vmatprep.mubr.f32.mxu0 0.0
        %451 = vmatmul.mubr.f32.gmra.mxu0 %v273
        %v452 = vpop.f32.mrf.mxu0
        %v453 = vadd.f32 0.0, %v452
        %v454 = vpop.f32.mrf.mxu0
        %455 = vmatprep.mubr.f32.mxu0 0.0
        %456 = vmatmul.mubr.f32.gmra.mxu0 %v276
        %v457 = vpop.f32.mrf.mxu0
        %v458 = vadd.f32 0.0, %v457
        %v459 = vpop.f32.mrf.mxu0
        %460 = vmatprep.mubr.f32.mxu0 0.0
        %461 = vmatmul.mubr.f32.gmra.mxu0 %v279
        %v462 = vpop.f32.mrf.mxu0
        %v463 = vadd.f32 0.0, %v462
        %v464 = vpop.f32.mrf.mxu0
        %465 = vmatprep.mubr.f32.mxu0 0.0
        %466 = vmatmul.mubr.f32.gmra.mxu0 %v282
        %v467 = vpop.f32.mrf.mxu0
        %v468 = vadd.f32 0.0, %v467
        %v469 = vpop.f32.mrf.mxu0
        %470 = vmatprep.mubr.f32.mxu0 0.0
        %471 = vmatmul.mubr.f32.gmra.mxu0 %v285
        %v472 = vpop.f32.mrf.mxu0
        %v473 = vadd.f32 0.0, %v472
        %v474 = vpop.f32.mrf.mxu0
        %475 = vmatprep.mubr.f32.mxu0 0.0
        %476 = vmatmul.mubr.f32.gmra.mxu0 %v288
        %v477 = vpop.f32.mrf.mxu0
        %v478 = vadd.f32 0.0, %v477
        %v479 = vpop.f32.mrf.mxu0
        %480 = vmatprep.mubr.f32.mxu0 0.0
        %481 = vmatmul.mubr.f32.gmra.mxu0 %v291
        %v482 = vpop.f32.mrf.mxu0
        %v483 = vadd.f32 0.0, %v482
        %v484 = vpop.f32.mrf.mxu0
        %485 = vmatprep.mubr.f32.mxu0 0.0
        %486 = vmatmul.mubr.f32.gmra.mxu0 %v294
        %v487 = vpop.f32.mrf.mxu0
        %v488 = vadd.f32 0.0, %v487
        %v489 = vpop.f32.mrf.mxu0
        %490 = vmatprep.mubr.f32.mxu0 0.0
        %491 = vmatmul.mubr.f32.gmra.mxu0 %v297
        %v492 = vpop.f32.mrf.mxu0
        %v493 = vadd.f32 0.0, %v492
        %v494 = vpop.f32.mrf.mxu0
        %495 = vmatprep.mubr.f32.mxu0 0.0
        %496 = vmatmul.mubr.f32.gmra.mxu0 %v300
        %v497 = vpop.f32.mrf.mxu0
        %v498 = vadd.f32 0.0, %v497
        %v499 = vpop.f32.mrf.mxu0
        %500 = vmatprep.mubr.f32.mxu0 0.0
        %501 = vmatmul.mubr.f32.gmra.mxu0 %v303
        %v502 = vpop.f32.mrf.mxu0
        %v503 = vadd.f32 0.0, %v502
        %v504 = vpop.f32.mrf.mxu0
        %505 = vmatprep.mubr.f32.mxu0 0.0
        %506 = vmatmul.mubr.f32.gmra.mxu0 %v306
        %v507 = vpop.f32.mrf.mxu0
        %v508 = vadd.f32 0.0, %v507
        %v509 = vpop.f32.mrf.mxu0
        %510 = vmatprep.mubr.f32.mxu0 0.0
        %511 = vmatmul.mubr.f32.gmra.mxu0 %v309
        %v512 = vpop.f32.mrf.mxu0
        %v513 = vadd.f32 0.0, %v512
        %v514 = vpop.f32.mrf.mxu0
        %515 = vmatprep.mubr.f32.mxu0 0.0
        %516 = vmatmul.mubr.f32.gmra.mxu0 %v312
        %v517 = vpop.f32.mrf.mxu0
        %v518 = vadd.f32 0.0, %v517
        %v519 = vpop.f32.mrf.mxu0
        %520 = vmatprep.mubr.f32.mxu0 0.0
        %521 = vmatmul.mubr.f32.gmra.mxu0 %v315
        %v522 = vpop.f32.mrf.mxu0
        %v523 = vadd.f32 0.0, %v522
        %v524 = vpop.f32.mrf.mxu0
        %525 = vmatprep.mubr.f32.mxu0 0.0
        %526 = vmatmul.mubr.f32.gmra.mxu0 %v318
        %v527 = vpop.f32.mrf.mxu0
        %v528 = vadd.f32 0.0, %v527
        %v529 = vpop.f32.mrf.mxu0
        %530 = vmatprep.mubr.f32.mxu0 0.0
        %531 = vmatmul.mubr.f32.gmra.mxu0 %v321
        %v532 = vpop.f32.mrf.mxu0
        %v533 = vadd.f32 0.0, %v532
        %v534 = vpop.f32.mrf.mxu0
        %535 = vmatprep.mubr.f32.mxu0 0.0
        %536 = vmatmul.mubr.f32.gmra.mxu0 %v324
        %v537 = vpop.f32.mrf.mxu0
        %v538 = vadd.f32 0.0, %v537
        %v539 = vpop.f32.mrf.mxu0
        %540 = vmatprep.mubr.f32.mxu0 0.0
        %541 = vmatmul.mubr.f32.gmra.mxu0 %v327
        %v542 = vpop.f32.mrf.mxu0
        %v543 = vadd.f32 0.0, %v542
        %v544 = vpop.f32.mrf.mxu0
        %545 = vmatprep.mubr.f32.mxu0 0.0
        %546 = vmatmul.mubr.f32.gmra.mxu0 %v330
        %v547 = vpop.f32.mrf.mxu0
        %v548 = vadd.f32 0.0, %v547
        %v549 = vpop.f32.mrf.mxu0
        %550 = vmatprep.mubr.f32.mxu0 0.0
        %551 = vmatmul.mubr.f32.gmra.mxu0 %v333
        %v552 = vpop.f32.mrf.mxu0
        %v553 = vadd.f32 0.0, %v552
        %v554 = vpop.f32.mrf.mxu0
        %555 = vmatprep.mubr.f32.mxu0 0.0
        %556 = vmatmul.mubr.f32.gmra.mxu0 %v336
        %v557 = vpop.f32.mrf.mxu0
        %v558 = vadd.f32 0.0, %v557
        %v559 = vpop.f32.mrf.mxu0
        %560 = vmatprep.mubr.f32.mxu0 0.0
        %561 = vmatmul.mubr.f32.gmra.mxu0 %v339
        %v562 = vpop.f32.mrf.mxu0
        %v563 = vadd.f32 0.0, %v562
        %v564 = vpop.f32.mrf.mxu0
        %565 = vmatprep.mubr.f32.mxu0 0.0
        %566 = vmatmul.mubr.f32.gmra.mxu0 %v342
        %v567 = vpop.f32.mrf.mxu0
        %v568 = vadd.f32 0.0, %v567
        %v569 = vpop.f32.mrf.mxu0
        %570 = vmatprep.mubr.f32.mxu0 0.0
        %571 = vmatmul.mubr.f32.gmra.mxu0 %v345
        %v572 = vpop.f32.mrf.mxu0
        %v573 = vadd.f32 0.0, %v572
        %v574 = vpop.f32.mrf.mxu0
        %575 = vdwg.mxu0
        %576 = vst [vmem:[#allocation2] sm:$0xff] %v418
        %577 = vst [vmem:[#allocation2 + $0x8] sm:$0xff] %v423
        %578 = vst [vmem:[#allocation2 + $0x10] sm:$0xff] %v428
        %579 = vst [vmem:[#allocation2 + $0x18] sm:$0xff] %v433
        %580 = vst [vmem:[#allocation2 + $0x20] sm:$0xff] %v438
        %581 = vst [vmem:[#allocation2 + $0x28] sm:$0xff] %v443
        %582 = vst [vmem:[#allocation2 + $0x30] sm:$0xff] %v448
        %583 = vst [vmem:[#allocation2 + $0x38] sm:$0xff] %v453
        %584 = vst [vmem:[#allocation2 + $0x40] sm:$0xff] %v458
        %585 = vst [vmem:[#allocation2 + $0x48] sm:$0xff] %v463
        %586 = vst [vmem:[#allocation2 + $0x50] sm:$0xff] %v468
        %587 = vst [vmem:[#allocation2 + $0x58] sm:$0xff] %v473
        %588 = vst [vmem:[#allocation2 + $0x60] sm:$0xff] %v478
        %589 = vst [vmem:[#allocation2 + $0x68] sm:$0xff] %v483
        %590 = vst [vmem:[#allocation2 + $0x70] sm:$0xff] %v488
        %591 = vst [vmem:[#allocation2 + $0x78] sm:$0xff] %v493
        %592 = vst [vmem:[#allocation2 + $0x80] sm:$0xff] %v498
        %593 = vst [vmem:[#allocation2 + $0x88] sm:$0xff] %v503
        %594 = vst [vmem:[#allocation2 + $0x90] sm:$0xff] %v508
        %595 = vst [vmem:[#allocation2 + $0x98] sm:$0xff] %v513
        %596 = vst [vmem:[#allocation2 + $0xa0] sm:$0xff] %v518
        %597 = vst [vmem:[#allocation2 + $0xa8] sm:$0xff] %v523
        %598 = vst [vmem:[#allocation2 + $0xb0] sm:$0xff] %v528
        %599 = vst [vmem:[#allocation2 + $0xb8] sm:$0xff] %v533
        %600 = vst [vmem:[#allocation2 + $0xc0] sm:$0xff] %v538
        %601 = vst [vmem:[#allocation2 + $0xc8] sm:$0xff] %v543
        %602 = vst [vmem:[#allocation2 + $0xd0] sm:$0xff] %v548
        %603 = vst [vmem:[#allocation2 + $0xd8] sm:$0xff] %v553
        %604 = vst [vmem:[#allocation2 + $0xe0] sm:$0xff] %v558
        %605 = vst [vmem:[#allocation2 + $0xe8] sm:$0xff] %v563
        %606 = vst [vmem:[#allocation2 + $0xf0] sm:$0xff] %v568
        %607 = vst [vmem:[#allocation2 + $0xf8] sm:$0xff] %v573
        %v608 = vld [vmem:[%s208 + $0x1] sm:$0xff]
        %v609 = vld [vmem:[%s208 + $0x9] sm:$0xff]
        %v610 = vld [vmem:[%s208 + $0x19] sm:$0xff]
        %v611 = vld [vmem:[%s208 + $0x21] sm:$0xff]
        %v612 = vld [vmem:[%s208 + $0x31] sm:$0xff]
        %v613 = vld [vmem:[%s208 + $0x39] sm:$0xff]
        %v614 = vld [vmem:[%s208 + $0x49] sm:$0xff]
        %v615 = vld [vmem:[%s208 + $0x51] sm:$0xff]
        %v616 = vld [vmem:[%s208 + $0x61] sm:$0xff]
        %v617 = vld [vmem:[%s208 + $0x69] sm:$0xff]
        %v618 = vld [vmem:[%s208 + $0x79] sm:$0xff]
        %v619 = vld [vmem:[%s208 + $0x81] sm:$0xff]
        %v620 = vld [vmem:[%s208 + $0x91] sm:$0xff]
        %v621 = vld [vmem:[%s208 + $0x99] sm:$0xff]
        %v622 = vld [vmem:[%s208 + $0xa9] sm:$0xff]
        %v623 = vld [vmem:[%s208 + $0xb1] sm:$0xff]
        %v624 = vld [vmem:[%s208 + $0xc1] sm:$0xff]
        %v625 = vld [vmem:[%s208 + $0xc9] sm:$0xff]
        %v626 = vld [vmem:[%s208 + $0xd9] sm:$0xff]
        %v627 = vld [vmem:[%s208 + $0xe1] sm:$0xff]
        %v628 = vld [vmem:[%s208 + $0xf1] sm:$0xff]
        %v629 = vld [vmem:[%s208 + $0xf9] sm:$0xff]
        %v630 = vld [vmem:[%s208 + $0x109] sm:$0xff]
        %v631 = vld [vmem:[%s208 + $0x111] sm:$0xff]
        %v632 = vld [vmem:[%s208 + $0x121] sm:$0xff]
        %v633 = vld [vmem:[%s208 + $0x129] sm:$0xff]
        %v634 = vld [vmem:[%s208 + $0x139] sm:$0xff]
        %v635 = vld [vmem:[%s208 + $0x141] sm:$0xff]
        %v636 = vld [vmem:[%s208 + $0x151] sm:$0xff]
        %v637 = vld [vmem:[%s208 + $0x159] sm:$0xff]
        %v638 = vld [vmem:[%s208 + $0x169] sm:$0xff]
        %v639 = vld [vmem:[%s208 + $0x171] sm:$0xff]
        %s640 = scalar_lea.vmem %s213, 4
        %v641 = vld [vmem:[%s640] sm:$0xf]
        %v643 = vsel %vm250, %v608, 0
        %v646 = vsel %vm250, %v609, 0
        %v649 = vsel %vm250, %v610, 0
        %v652 = vsel %vm250, %v611, 0
        %v655 = vsel %vm250, %v612, 0
        %v658 = vsel %vm250, %v613, 0
        %v661 = vsel %vm250, %v614, 0
        %v664 = vsel %vm250, %v615, 0
        %v667 = vsel %vm250, %v616, 0
        %v670 = vsel %vm250, %v617, 0
        %v673 = vsel %vm250, %v618, 0
        %v676 = vsel %vm250, %v619, 0
        %v679 = vsel %vm250, %v620, 0
        %v682 = vsel %vm250, %v621, 0
        %v685 = vsel %vm250, %v622, 0
        %v688 = vsel %vm250, %v623, 0
        %v691 = vsel %vm250, %v624, 0
        %v694 = vsel %vm250, %v625, 0
        %v697 = vsel %vm250, %v626, 0
        %v700 = vsel %vm250, %v627, 0
        %v703 = vsel %vm250, %v628, 0
        %v706 = vsel %vm250, %v629, 0
        %v709 = vsel %vm250, %v630, 0
        %v712 = vsel %vm250, %v631, 0
        %v715 = vsel %vm250, %v632, 0
        %v718 = vsel %vm250, %v633, 0
        %v721 = vsel %vm250, %v634, 0
        %v724 = vsel %vm250, %v635, 0
        %v727 = vsel %vm250, %v636, 0
        %v730 = vsel %vm250, %v637, 0
        %v733 = vsel %vm250, %v638, 0
        %v736 = vsel %vm250, %v639, 0
        %v739 = vsel %vm347, %v641, 0
        %741 = vmatprep.subr.mxu0 0.0
        %742 = vmatpush1.msra.mxu0 0.0
        %743 = vmatprep.subr.mxu0 0.0
        %744 = vmatpush1.msra.mxu0 0.0
        %745 = vmatprep.subr.mxu0 0.0
        %746 = vmatpush1.msra.mxu0 0.0
        %747 = vmatprep.subr.mxu0 0.0
        %748 = vmatpush1.msra.mxu0 0.0
        %749 = vmatprep.subr.mxu0 0.0
        %750 = vmatpush1.msra.mxu0 0.0
        %751 = vmatprep.subr.mxu0 0.0
        %752 = vmatpush1.msra.mxu0 0.0
        %753 = vmatprep.subr.mxu0 0.0
        %754 = vmatpush1.msra.mxu0 0.0
        %755 = vmatprep.subr.mxu0 0.0
        %756 = vmatpush1.msra.mxu0 0.0
        %757 = vmatprep.subr.mxu0 0.0
        %758 = vmatpush1.msra.mxu0 0.0
        %759 = vmatprep.subr.mxu0 0.0
        %760 = vmatpush1.msra.mxu0 0.0
        %761 = vmatprep.subr.mxu0 0.0
        %762 = vmatpush1.msra.mxu0 0.0
        %763 = vmatprep.subr.mxu0 0.0
        %764 = vmatpush1.msra.mxu0 0.0
        %765 = vmatprep.subr.mxu0 0.0
        %766 = vmatpush1.msra.mxu0 0.0
        %767 = vmatprep.subr.mxu0 0.0
        %768 = vmatpush1.msra.mxu0 0.0
        %769 = vmatprep.subr.mxu0 0.0
        %770 = vmatpush1.msra.mxu0 0.0
        %771 = vmatprep.subr.mxu0 0.0
        %772 = vmatpush1.msra.mxu0 %v739
        %773 = vmatprep.subr.mxu0 0.0
        %774 = vmatpush2.msra.mxu0 0.0
        %775 = vmatprep.subr.mxu0 0.0
        %776 = vmatpush2.msra.mxu0 0.0
        %777 = vmatprep.subr.mxu0 0.0
        %778 = vmatpush2.msra.mxu0 0.0
        %779 = vmatprep.subr.mxu0 0.0
        %780 = vmatpush2.msra.mxu0 0.0
        %781 = vmatprep.subr.mxu0 0.0
        %782 = vmatpush2.msra.mxu0 0.0
        %783 = vmatprep.subr.mxu0 0.0
        %784 = vmatpush2.msra.mxu0 0.0
        %785 = vmatprep.subr.mxu0 0.0
        %786 = vmatpush2.msra.mxu0 0.0
        %787 = vmatprep.subr.mxu0 0.0
        %788 = vmatpush2.msra.mxu0 0.0
        %789 = vmatprep.subr.mxu0 0.0
        %790 = vmatpush2.msra.mxu0 0.0
        %791 = vmatprep.subr.mxu0 0.0
        %792 = vmatpush2.msra.mxu0 0.0
        %793 = vmatprep.subr.mxu0 0.0
        %794 = vmatpush2.msra.mxu0 0.0
        %795 = vmatprep.subr.mxu0 0.0
        %796 = vmatpush2.msra.mxu0 0.0
        %797 = vmatprep.subr.mxu0 0.0
        %798 = vmatpush2.msra.mxu0 0.0
        %799 = vmatprep.subr.mxu0 0.0
        %800 = vmatpush2.msra.mxu0 0.0
        %801 = vmatprep.subr.mxu0 0.0
        %802 = vmatpush2.msra.mxu0 0.0
        %803 = vmatprep.subr.mxu0 0.0
        %804 = vmatpush2.msra.mxu0 0.0
        %805 = vmatprep.mubr.f32.mxu0 0.0
        %806 = vmatmul.mubr.f32.gmra.mxu0 %v643
        %v807 = vpop.f32.mrf.mxu0
        %v808 = vadd.f32 0.0, %v807
        %v809 = vpop.f32.mrf.mxu0
        %810 = vmatprep.mubr.f32.mxu0 0.0
        %811 = vmatmul.mubr.f32.gmra.mxu0 %v646
        %v812 = vpop.f32.mrf.mxu0
        %v813 = vadd.f32 0.0, %v812
        %v814 = vpop.f32.mrf.mxu0
        %815 = vmatprep.mubr.f32.mxu0 0.0
        %816 = vmatmul.mubr.f32.gmra.mxu0 %v649
        %v817 = vpop.f32.mrf.mxu0
        %v818 = vadd.f32 0.0, %v817
        %v819 = vpop.f32.mrf.mxu0
        %820 = vmatprep.mubr.f32.mxu0 0.0
        %821 = vmatmul.mubr.f32.gmra.mxu0 %v652
        %v822 = vpop.f32.mrf.mxu0
        %v823 = vadd.f32 0.0, %v822
        %v824 = vpop.f32.mrf.mxu0
        %825 = vmatprep.mubr.f32.mxu0 0.0
        %826 = vmatmul.mubr.f32.gmra.mxu0 %v655
        %v827 = vpop.f32.mrf.mxu0
        %v828 = vadd.f32 0.0, %v827
        %v829 = vpop.f32.mrf.mxu0
        %830 = vmatprep.mubr.f32.mxu0 0.0
        %831 = vmatmul.mubr.f32.gmra.mxu0 %v658
        %v832 = vpop.f32.mrf.mxu0
        %v833 = vadd.f32 0.0, %v832
        %v834 = vpop.f32.mrf.mxu0
        %835 = vmatprep.mubr.f32.mxu0 0.0
        %836 = vmatmul.mubr.f32.gmra.mxu0 %v661
        %v837 = vpop.f32.mrf.mxu0
        %v838 = vadd.f32 0.0, %v837
        %v839 = vpop.f32.mrf.mxu0
        %840 = vmatprep.mubr.f32.mxu0 0.0
        %841 = vmatmul.mubr.f32.gmra.mxu0 %v664
        %v842 = vpop.f32.mrf.mxu0
        %v843 = vadd.f32 0.0, %v842
        %v844 = vpop.f32.mrf.mxu0
        %845 = vmatprep.mubr.f32.mxu0 0.0
        %846 = vmatmul.mubr.f32.gmra.mxu0 %v667
        %v847 = vpop.f32.mrf.mxu0
        %v848 = vadd.f32 0.0, %v847
        %v849 = vpop.f32.mrf.mxu0
        %850 = vmatprep.mubr.f32.mxu0 0.0
        %851 = vmatmul.mubr.f32.gmra.mxu0 %v670
        %v852 = vpop.f32.mrf.mxu0
        %v853 = vadd.f32 0.0, %v852
        %v854 = vpop.f32.mrf.mxu0
        %855 = vmatprep.mubr.f32.mxu0 0.0
        %856 = vmatmul.mubr.f32.gmra.mxu0 %v673
        %v857 = vpop.f32.mrf.mxu0
        %v858 = vadd.f32 0.0, %v857
        %v859 = vpop.f32.mrf.mxu0
        %860 = vmatprep.mubr.f32.mxu0 0.0
        %861 = vmatmul.mubr.f32.gmra.mxu0 %v676
        %v862 = vpop.f32.mrf.mxu0
        %v863 = vadd.f32 0.0, %v862
        %v864 = vpop.f32.mrf.mxu0
        %865 = vmatprep.mubr.f32.mxu0 0.0
        %866 = vmatmul.mubr.f32.gmra.mxu0 %v679
        %v867 = vpop.f32.mrf.mxu0
        %v868 = vadd.f32 0.0, %v867
        %v869 = vpop.f32.mrf.mxu0
        %870 = vmatprep.mubr.f32.mxu0 0.0
        %871 = vmatmul.mubr.f32.gmra.mxu0 %v682
        %v872 = vpop.f32.mrf.mxu0
        %v873 = vadd.f32 0.0, %v872
        %v874 = vpop.f32.mrf.mxu0
        %875 = vmatprep.mubr.f32.mxu0 0.0
        %876 = vmatmul.mubr.f32.gmra.mxu0 %v685
        %v877 = vpop.f32.mrf.mxu0
        %v878 = vadd.f32 0.0, %v877
        %v879 = vpop.f32.mrf.mxu0
        %880 = vmatprep.mubr.f32.mxu0 0.0
        %881 = vmatmul.mubr.f32.gmra.mxu0 %v688
        %v882 = vpop.f32.mrf.mxu0
        %v883 = vadd.f32 0.0, %v882
        %v884 = vpop.f32.mrf.mxu0
        %885 = vmatprep.mubr.f32.mxu0 0.0
        %886 = vmatmul.mubr.f32.gmra.mxu0 %v691
        %v887 = vpop.f32.mrf.mxu0
        %v888 = vadd.f32 0.0, %v887
        %v889 = vpop.f32.mrf.mxu0
        %890 = vmatprep.mubr.f32.mxu0 0.0
        %891 = vmatmul.mubr.f32.gmra.mxu0 %v694
        %v892 = vpop.f32.mrf.mxu0
        %v893 = vadd.f32 0.0, %v892
        %v894 = vpop.f32.mrf.mxu0
        %895 = vmatprep.mubr.f32.mxu0 0.0
        %896 = vmatmul.mubr.f32.gmra.mxu0 %v697
        %v897 = vpop.f32.mrf.mxu0
        %v898 = vadd.f32 0.0, %v897
        %v899 = vpop.f32.mrf.mxu0
        %900 = vmatprep.mubr.f32.mxu0 0.0
        %901 = vmatmul.mubr.f32.gmra.mxu0 %v700
        %v902 = vpop.f32.mrf.mxu0
        %v903 = vadd.f32 0.0, %v902
        %v904 = vpop.f32.mrf.mxu0
        %905 = vmatprep.mubr.f32.mxu0 0.0
        %906 = vmatmul.mubr.f32.gmra.mxu0 %v703
        %v907 = vpop.f32.mrf.mxu0
        %v908 = vadd.f32 0.0, %v907
        %v909 = vpop.f32.mrf.mxu0
        %910 = vmatprep.mubr.f32.mxu0 0.0
        %911 = vmatmul.mubr.f32.gmra.mxu0 %v706
        %v912 = vpop.f32.mrf.mxu0
        %v913 = vadd.f32 0.0, %v912
        %v914 = vpop.f32.mrf.mxu0
        %915 = vmatprep.mubr.f32.mxu0 0.0
        %916 = vmatmul.mubr.f32.gmra.mxu0 %v709
        %v917 = vpop.f32.mrf.mxu0
        %v918 = vadd.f32 0.0, %v917
        %v919 = vpop.f32.mrf.mxu0
        %920 = vmatprep.mubr.f32.mxu0 0.0
        %921 = vmatmul.mubr.f32.gmra.mxu0 %v712
        %v922 = vpop.f32.mrf.mxu0
        %v923 = vadd.f32 0.0, %v922
        %v924 = vpop.f32.mrf.mxu0
        %925 = vmatprep.mubr.f32.mxu0 0.0
        %926 = vmatmul.mubr.f32.gmra.mxu0 %v715
        %v927 = vpop.f32.mrf.mxu0
        %v928 = vadd.f32 0.0, %v927
        %v929 = vpop.f32.mrf.mxu0
        %930 = vmatprep.mubr.f32.mxu0 0.0
        %931 = vmatmul.mubr.f32.gmra.mxu0 %v718
        %v932 = vpop.f32.mrf.mxu0
        %v933 = vadd.f32 0.0, %v932
        %v934 = vpop.f32.mrf.mxu0
        %935 = vmatprep.mubr.f32.mxu0 0.0
        %936 = vmatmul.mubr.f32.gmra.mxu0 %v721
        %v937 = vpop.f32.mrf.mxu0
        %v938 = vadd.f32 0.0, %v937
        %v939 = vpop.f32.mrf.mxu0
        %940 = vmatprep.mubr.f32.mxu0 0.0
        %941 = vmatmul.mubr.f32.gmra.mxu0 %v724
        %v942 = vpop.f32.mrf.mxu0
        %v943 = vadd.f32 0.0, %v942
        %v944 = vpop.f32.mrf.mxu0
        %945 = vmatprep.mubr.f32.mxu0 0.0
        %946 = vmatmul.mubr.f32.gmra.mxu0 %v727
        %v947 = vpop.f32.mrf.mxu0
        %v948 = vadd.f32 0.0, %v947
        %v949 = vpop.f32.mrf.mxu0
        %950 = vmatprep.mubr.f32.mxu0 0.0
        %951 = vmatmul.mubr.f32.gmra.mxu0 %v730
        %v952 = vpop.f32.mrf.mxu0
        %v953 = vadd.f32 0.0, %v952
        %v954 = vpop.f32.mrf.mxu0
        %955 = vmatprep.mubr.f32.mxu0 0.0
        %956 = vmatmul.mubr.f32.gmra.mxu0 %v733
        %v957 = vpop.f32.mrf.mxu0
        %v958 = vadd.f32 0.0, %v957
        %v959 = vpop.f32.mrf.mxu0
        %960 = vmatprep.mubr.f32.mxu0 0.0
        %961 = vmatmul.mubr.f32.gmra.mxu0 %v736
        %v962 = vpop.f32.mrf.mxu0
        %v963 = vadd.f32 0.0, %v962
        %v964 = vpop.f32.mrf.mxu0
        %965 = vdwg.mxu0
        %v966 = vld [vmem:[#allocation2] sm:$0xff]
        %v967 = vld [vmem:[#allocation2 + $0x8] sm:$0xff]
        %v968 = vld [vmem:[#allocation2 + $0x10] sm:$0xff]
        %v969 = vld [vmem:[#allocation2 + $0x18] sm:$0xff]
        %v970 = vld [vmem:[#allocation2 + $0x20] sm:$0xff]
        %v971 = vld [vmem:[#allocation2 + $0x28] sm:$0xff]
        %v972 = vld [vmem:[#allocation2 + $0x30] sm:$0xff]
        %v973 = vld [vmem:[#allocation2 + $0x38] sm:$0xff]
        %v974 = vld [vmem:[#allocation2 + $0x40] sm:$0xff]
        %v975 = vld [vmem:[#allocation2 + $0x48] sm:$0xff]
        %v976 = vld [vmem:[#allocation2 + $0x50] sm:$0xff]
        %v977 = vld [vmem:[#allocation2 + $0x58] sm:$0xff]
        %v978 = vld [vmem:[#allocation2 + $0x60] sm:$0xff]
        %v979 = vld [vmem:[#allocation2 + $0x68] sm:$0xff]
        %v980 = vld [vmem:[#allocation2 + $0x70] sm:$0xff]
        %v981 = vld [vmem:[#allocation2 + $0x78] sm:$0xff]
        %v982 = vld [vmem:[#allocation2 + $0x80] sm:$0xff]
        %v983 = vld [vmem:[#allocation2 + $0x88] sm:$0xff]
        %v984 = vld [vmem:[#allocation2 + $0x90] sm:$0xff]
        %v985 = vld [vmem:[#allocation2 + $0x98] sm:$0xff]
        %v986 = vld [vmem:[#allocation2 + $0xa0] sm:$0xff]
        %v987 = vld [vmem:[#allocation2 + $0xa8] sm:$0xff]
        %v988 = vld [vmem:[#allocation2 + $0xb0] sm:$0xff]
        %v989 = vld [vmem:[#allocation2 + $0xb8] sm:$0xff]
        %v990 = vld [vmem:[#allocation2 + $0xc0] sm:$0xff]
        %v991 = vld [vmem:[#allocation2 + $0xc8] sm:$0xff]
        %v992 = vld [vmem:[#allocation2 + $0xd0] sm:$0xff]
        %v993 = vld [vmem:[#allocation2 + $0xd8] sm:$0xff]
        %v994 = vld [vmem:[#allocation2 + $0xe0] sm:$0xff]
        %v995 = vld [vmem:[#allocation2 + $0xe8] sm:$0xff]
        %v996 = vld [vmem:[#allocation2 + $0xf0] sm:$0xff]
        %v997 = vld [vmem:[#allocation2 + $0xf8] sm:$0xff]
        %v998 = vadd.f32 %v966, %v808
        %v999 = vadd.f32 %v967, %v813
        %v1000 = vadd.f32 %v968, %v818
        %v1001 = vadd.f32 %v969, %v823
        %v1002 = vadd.f32 %v970, %v828
        %v1003 = vadd.f32 %v971, %v833
        %v1004 = vadd.f32 %v972, %v838
        %v1005 = vadd.f32 %v973, %v843
        %v1006 = vadd.f32 %v974, %v848
        %v1007 = vadd.f32 %v975, %v853
        %v1008 = vadd.f32 %v976, %v858
        %v1009 = vadd.f32 %v977, %v863
        %v1010 = vadd.f32 %v978, %v868
        %v1011 = vadd.f32 %v979, %v873
        %v1012 = vadd.f32 %v980, %v878
        %v1013 = vadd.f32 %v981, %v883
        %v1014 = vadd.f32 %v982, %v888
        %v1015 = vadd.f32 %v983, %v893
        %v1016 = vadd.f32 %v984, %v898
        %v1017 = vadd.f32 %v985, %v903
        %v1018 = vadd.f32 %v986, %v908
        %v1019 = vadd.f32 %v987, %v913
        %v1020 = vadd.f32 %v988, %v918
        %v1021 = vadd.f32 %v989, %v923
        %v1022 = vadd.f32 %v990, %v928
        %v1023 = vadd.f32 %v991, %v933
        %v1024 = vadd.f32 %v992, %v938
        %v1025 = vadd.f32 %v993, %v943
        %v1026 = vadd.f32 %v994, %v948
        %v1027 = vadd.f32 %v995, %v953
        %v1028 = vadd.f32 %v996, %v958
        %v1029 = vadd.f32 %v997, %v963
        %1030 = vst [vmem:[#allocation2] sm:$0xff] %v998
        %1031 = vst [vmem:[#allocation2 + $0x8] sm:$0xff] %v999
        %1032 = vst [vmem:[#allocation2 + $0x10] sm:$0xff] %v1000
        %1033 = vst [vmem:[#allocation2 + $0x18] sm:$0xff] %v1001
        %1034 = vst [vmem:[#allocation2 + $0x20] sm:$0xff] %v1002
        %1035 = vst [vmem:[#allocation2 + $0x28] sm:$0xff] %v1003
        %1036 = vst [vmem:[#allocation2 + $0x30] sm:$0xff] %v1004
        %1037 = vst [vmem:[#allocation2 + $0x38] sm:$0xff] %v1005
        %1038 = vst [vmem:[#allocation2 + $0x40] sm:$0xff] %v1006
        %1039 = vst [vmem:[#allocation2 + $0x48] sm:$0xff] %v1007
        %1040 = vst [vmem:[#allocation2 + $0x50] sm:$0xff] %v1008
        %1041 = vst [vmem:[#allocation2 + $0x58] sm:$0xff] %v1009
        %1042 = vst [vmem:[#allocation2 + $0x60] sm:$0xff] %v1010
        %1043 = vst [vmem:[#allocation2 + $0x68] sm:$0xff] %v1011
        %1044 = vst [vmem:[#allocation2 + $0x70] sm:$0xff] %v1012
        %1045 = vst [vmem:[#allocation2 + $0x78] sm:$0xff] %v1013
        %1046 = vst [vmem:[#allocation2 + $0x80] sm:$0xff] %v1014
        %1047 = vst [vmem:[#allocation2 + $0x88] sm:$0xff] %v1015
        %1048 = vst [vmem:[#allocation2 + $0x90] sm:$0xff] %v1016
        %1049 = vst [vmem:[#allocation2 + $0x98] sm:$0xff] %v1017
        %1050 = vst [vmem:[#allocation2 + $0xa0] sm:$0xff] %v1018
        %1051 = vst [vmem:[#allocation2 + $0xa8] sm:$0xff] %v1019
        %1052 = vst [vmem:[#allocation2 + $0xb0] sm:$0xff] %v1020
        %1053 = vst [vmem:[#allocation2 + $0xb8] sm:$0xff] %v1021
        %1054 = vst [vmem:[#allocation2 + $0xc0] sm:$0xff] %v1022
        %1055 = vst [vmem:[#allocation2 + $0xc8] sm:$0xff] %v1023
        %1056 = vst [vmem:[#allocation2 + $0xd0] sm:$0xff] %v1024
        %1057 = vst [vmem:[#allocation2 + $0xd8] sm:$0xff] %v1025
        %1058 = vst [vmem:[#allocation2 + $0xe0] sm:$0xff] %v1026
        %1059 = vst [vmem:[#allocation2 + $0xe8] sm:$0xff] %v1027
        %1060 = vst [vmem:[#allocation2 + $0xf0] sm:$0xff] %v1028
        %1061 = vst [vmem:[#allocation2 + $0xf8] sm:$0xff] %v1029
        %v1062 = vld [vmem:[%s208 + $0x2] sm:$0xff]
        %v1063 = vld [vmem:[%s208 + $0xa] sm:$0xff]
        %v1064 = vld [vmem:[%s208 + $0x1a] sm:$0xff]
        %v1065 = vld [vmem:[%s208 + $0x22] sm:$0xff]
        %v1066 = vld [vmem:[%s208 + $0x32] sm:$0xff]
        %v1067 = vld [vmem:[%s208 + $0x3a] sm:$0xff]
        %v1068 = vld [vmem:[%s208 + $0x4a] sm:$0xff]
        %v1069 = vld [vmem:[%s208 + $0x52] sm:$0xff]
        %v1070 = vld [vmem:[%s208 + $0x62] sm:$0xff]
        %v1071 = vld [vmem:[%s208 + $0x6a] sm:$0xff]
        %v1072 = vld [vmem:[%s208 + $0x7a] sm:$0xff]
        %v1073 = vld [vmem:[%s208 + $0x82] sm:$0xff]
        %v1074 = vld [vmem:[%s208 + $0x92] sm:$0xff]
        %v1075 = vld [vmem:[%s208 + $0x9a] sm:$0xff]
        %v1076 = vld [vmem:[%s208 + $0xaa] sm:$0xff]
        %v1077 = vld [vmem:[%s208 + $0xb2] sm:$0xff]
        %v1078 = vld [vmem:[%s208 + $0xc2] sm:$0xff]
        %v1079 = vld [vmem:[%s208 + $0xca] sm:$0xff]
        %v1080 = vld [vmem:[%s208 + $0xda] sm:$0xff]
        %v1081 = vld [vmem:[%s208 + $0xe2] sm:$0xff]
        %v1082 = vld [vmem:[%s208 + $0xf2] sm:$0xff]
        %v1083 = vld [vmem:[%s208 + $0xfa] sm:$0xff]
        %v1084 = vld [vmem:[%s208 + $0x10a] sm:$0xff]
        %v1085 = vld [vmem:[%s208 + $0x112] sm:$0xff]
        %v1086 = vld [vmem:[%s208 + $0x122] sm:$0xff]
        %v1087 = vld [vmem:[%s208 + $0x12a] sm:$0xff]
        %v1088 = vld [vmem:[%s208 + $0x13a] sm:$0xff]
        %v1089 = vld [vmem:[%s208 + $0x142] sm:$0xff]
        %v1090 = vld [vmem:[%s208 + $0x152] sm:$0xff]
        %v1091 = vld [vmem:[%s208 + $0x15a] sm:$0xff]
        %v1092 = vld [vmem:[%s208 + $0x16a] sm:$0xff]
        %v1093 = vld [vmem:[%s208 + $0x172] sm:$0xff]
        %s1094 = scalar_lea.vmem %s213, 8
        %v1095 = vld [vmem:[%s1094] sm:$0xf]
        %v1097 = vsel %vm250, %v1062, 0
        %v1100 = vsel %vm250, %v1063, 0
        %v1103 = vsel %vm250, %v1064, 0
        %v1106 = vsel %vm250, %v1065, 0
        %v1109 = vsel %vm250, %v1066, 0
        %v1112 = vsel %vm250, %v1067, 0
        %v1115 = vsel %vm250, %v1068, 0
        %v1118 = vsel %vm250, %v1069, 0
        %v1121 = vsel %vm250, %v1070, 0
        %v1124 = vsel %vm250, %v1071, 0
        %v1127 = vsel %vm250, %v1072, 0
        %v1130 = vsel %vm250, %v1073, 0
        %v1133 = vsel %vm250, %v1074, 0
        %v1136 = vsel %vm250, %v1075, 0
        %v1139 = vsel %vm250, %v1076, 0
        %v1142 = vsel %vm250, %v1077, 0
        %v1145 = vsel %vm250, %v1078, 0
        %v1148 = vsel %vm250, %v1079, 0
        %v1151 = vsel %vm250, %v1080, 0
        %v1154 = vsel %vm250, %v1081, 0
        %v1157 = vsel %vm250, %v1082, 0
        %v1160 = vsel %vm250, %v1083, 0
        %v1163 = vsel %vm250, %v1084, 0
        %v1166 = vsel %vm250, %v1085, 0
        %v1169 = vsel %vm250, %v1086, 0
        %v1172 = vsel %vm250, %v1087, 0
        %v1175 = vsel %vm250, %v1088, 0
        %v1178 = vsel %vm250, %v1089, 0
        %v1181 = vsel %vm250, %v1090, 0
        %v1184 = vsel %vm250, %v1091, 0
        %v1187 = vsel %vm250, %v1092, 0
        %v1190 = vsel %vm250, %v1093, 0
        %v1193 = vsel %vm347, %v1095, 0
        %1195 = vmatprep.subr.mxu0 0.0
        %1196 = vmatpush1.msra.mxu0 0.0
        %1197 = vmatprep.subr.mxu0 0.0
        %1198 = vmatpush1.msra.mxu0 0.0
        %1199 = vmatprep.subr.mxu0 0.0
        %1200 = vmatpush1.msra.mxu0 0.0
        %1201 = vmatprep.subr.mxu0 0.0
        %1202 = vmatpush1.msra.mxu0 0.0
        %1203 = vmatprep.subr.mxu0 0.0
        %1204 = vmatpush1.msra.mxu0 0.0
        %1205 = vmatprep.subr.mxu0 0.0
        %1206 = vmatpush1.msra.mxu0 0.0
        %1207 = vmatprep.subr.mxu0 0.0
        %1208 = vmatpush1.msra.mxu0 0.0
        %1209 = vmatprep.subr.mxu0 0.0
        %1210 = vmatpush1.msra.mxu0 0.0
        %1211 = vmatprep.subr.mxu0 0.0
        %1212 = vmatpush1.msra.mxu0 0.0
        %1213 = vmatprep.subr.mxu0 0.0
        %1214 = vmatpush1.msra.mxu0 0.0
        %1215 = vmatprep.subr.mxu0 0.0
        %1216 = vmatpush1.msra.mxu0 0.0
        %1217 = vmatprep.subr.mxu0 0.0
        %1218 = vmatpush1.msra.mxu0 0.0
        %1219 = vmatprep.subr.mxu0 0.0
        %1220 = vmatpush1.msra.mxu0 0.0
        %1221 = vmatprep.subr.mxu0 0.0
        %1222 = vmatpush1.msra.mxu0 0.0
        %1223 = vmatprep.subr.mxu0 0.0
        %1224 = vmatpush1.msra.mxu0 0.0
        %1225 = vmatprep.subr.mxu0 0.0
        %1226 = vmatpush1.msra.mxu0 %v1193
        %1227 = vmatprep.subr.mxu0 0.0
        %1228 = vmatpush2.msra.mxu0 0.0
        %1229 = vmatprep.subr.mxu0 0.0
        %1230 = vmatpush2.msra.mxu0 0.0
        %1231 = vmatprep.subr.mxu0 0.0
        %1232 = vmatpush2.msra.mxu0 0.0
        %1233 = vmatprep.subr.mxu0 0.0
        %1234 = vmatpush2.msra.mxu0 0.0
        %1235 = vmatprep.subr.mxu0 0.0
        %1236 = vmatpush2.msra.mxu0 0.0
        %1237 = vmatprep.subr.mxu0 0.0
        %1238 = vmatpush2.msra.mxu0 0.0
        %1239 = vmatprep.subr.mxu0 0.0
        %1240 = vmatpush2.msra.mxu0 0.0
        %1241 = vmatprep.subr.mxu0 0.0
        %1242 = vmatpush2.msra.mxu0 0.0
        %1243 = vmatprep.subr.mxu0 0.0
        %1244 = vmatpush2.msra.mxu0 0.0
        %1245 = vmatprep.subr.mxu0 0.0
        %1246 = vmatpush2.msra.mxu0 0.0
        %1247 = vmatprep.subr.mxu0 0.0
        %1248 = vmatpush2.msra.mxu0 0.0
        %1249 = vmatprep.subr.mxu0 0.0
        %1250 = vmatpush2.msra.mxu0 0.0
        %1251 = vmatprep.subr.mxu0 0.0
        %1252 = vmatpush2.msra.mxu0 0.0
        %1253 = vmatprep.subr.mxu0 0.0
        %1254 = vmatpush2.msra.mxu0 0.0
        %1255 = vmatprep.subr.mxu0 0.0
        %1256 = vmatpush2.msra.mxu0 0.0
        %1257 = vmatprep.subr.mxu0 0.0
        %1258 = vmatpush2.msra.mxu0 0.0
        %1259 = vmatprep.mubr.f32.mxu0 0.0
        %1260 = vmatmul.mubr.f32.gmra.mxu0 %v1097
        %v1261 = vpop.f32.mrf.mxu0
        %v1262 = vadd.f32 0.0, %v1261
        %v1263 = vpop.f32.mrf.mxu0
        %1264 = vmatprep.mubr.f32.mxu0 0.0
        %1265 = vmatmul.mubr.f32.gmra.mxu0 %v1100
        %v1266 = vpop.f32.mrf.mxu0
        %v1267 = vadd.f32 0.0, %v1266
        %v1268 = vpop.f32.mrf.mxu0
        %1269 = vmatprep.mubr.f32.mxu0 0.0
        %1270 = vmatmul.mubr.f32.gmra.mxu0 %v1103
        %v1271 = vpop.f32.mrf.mxu0
        %v1272 = vadd.f32 0.0, %v1271
        %v1273 = vpop.f32.mrf.mxu0
        %1274 = vmatprep.mubr.f32.mxu0 0.0
        %1275 = vmatmul.mubr.f32.gmra.mxu0 %v1106
        %v1276 = vpop.f32.mrf.mxu0
        %v1277 = vadd.f32 0.0, %v1276
        %v1278 = vpop.f32.mrf.mxu0
        %1279 = vmatprep.mubr.f32.mxu0 0.0
        %1280 = vmatmul.mubr.f32.gmra.mxu0 %v1109
        %v1281 = vpop.f32.mrf.mxu0
        %v1282 = vadd.f32 0.0, %v1281
        %v1283 = vpop.f32.mrf.mxu0
        %1284 = vmatprep.mubr.f32.mxu0 0.0
        %1285 = vmatmul.mubr.f32.gmra.mxu0 %v1112
        %v1286 = vpop.f32.mrf.mxu0
        %v1287 = vadd.f32 0.0, %v1286
        %v1288 = vpop.f32.mrf.mxu0
        %1289 = vmatprep.mubr.f32.mxu0 0.0
        %1290 = vmatmul.mubr.f32.gmra.mxu0 %v1115
        %v1291 = vpop.f32.mrf.mxu0
        %v1292 = vadd.f32 0.0, %v1291
        %v1293 = vpop.f32.mrf.mxu0
        %1294 = vmatprep.mubr.f32.mxu0 0.0
        %1295 = vmatmul.mubr.f32.gmra.mxu0 %v1118
        %v1296 = vpop.f32.mrf.mxu0
        %v1297 = vadd.f32 0.0, %v1296
        %v1298 = vpop.f32.mrf.mxu0
        %1299 = vmatprep.mubr.f32.mxu0 0.0
        %1300 = vmatmul.mubr.f32.gmra.mxu0 %v1121
        %v1301 = vpop.f32.mrf.mxu0
        %v1302 = vadd.f32 0.0, %v1301
        %v1303 = vpop.f32.mrf.mxu0
        %1304 = vmatprep.mubr.f32.mxu0 0.0
        %1305 = vmatmul.mubr.f32.gmra.mxu0 %v1124
        %v1306 = vpop.f32.mrf.mxu0
        %v1307 = vadd.f32 0.0, %v1306
        %v1308 = vpop.f32.mrf.mxu0
        %1309 = vmatprep.mubr.f32.mxu0 0.0
        %1310 = vmatmul.mubr.f32.gmra.mxu0 %v1127
        %v1311 = vpop.f32.mrf.mxu0
        %v1312 = vadd.f32 0.0, %v1311
        %v1313 = vpop.f32.mrf.mxu0
        %1314 = vmatprep.mubr.f32.mxu0 0.0
        %1315 = vmatmul.mubr.f32.gmra.mxu0 %v1130
        %v1316 = vpop.f32.mrf.mxu0
        %v1317 = vadd.f32 0.0, %v1316
        %v1318 = vpop.f32.mrf.mxu0
        %1319 = vmatprep.mubr.f32.mxu0 0.0
        %1320 = vmatmul.mubr.f32.gmra.mxu0 %v1133
        %v1321 = vpop.f32.mrf.mxu0
        %v1322 = vadd.f32 0.0, %v1321
        %v1323 = vpop.f32.mrf.mxu0
        %1324 = vmatprep.mubr.f32.mxu0 0.0
        %1325 = vmatmul.mubr.f32.gmra.mxu0 %v1136
        %v1326 = vpop.f32.mrf.mxu0
        %v1327 = vadd.f32 0.0, %v1326
        %v1328 = vpop.f32.mrf.mxu0
        %1329 = vmatprep.mubr.f32.mxu0 0.0
        %1330 = vmatmul.mubr.f32.gmra.mxu0 %v1139
        %v1331 = vpop.f32.mrf.mxu0
        %v1332 = vadd.f32 0.0, %v1331
        %v1333 = vpop.f32.mrf.mxu0
        %1334 = vmatprep.mubr.f32.mxu0 0.0
        %1335 = vmatmul.mubr.f32.gmra.mxu0 %v1142
        %v1336 = vpop.f32.mrf.mxu0
        %v1337 = vadd.f32 0.0, %v1336
        %v1338 = vpop.f32.mrf.mxu0
        %1339 = vmatprep.mubr.f32.mxu0 0.0
        %1340 = vmatmul.mubr.f32.gmra.mxu0 %v1145
        %v1341 = vpop.f32.mrf.mxu0
        %v1342 = vadd.f32 0.0, %v1341
        %v1343 = vpop.f32.mrf.mxu0
        %1344 = vmatprep.mubr.f32.mxu0 0.0
        %1345 = vmatmul.mubr.f32.gmra.mxu0 %v1148
        %v1346 = vpop.f32.mrf.mxu0
        %v1347 = vadd.f32 0.0, %v1346
        %v1348 = vpop.f32.mrf.mxu0
        %1349 = vmatprep.mubr.f32.mxu0 0.0
        %1350 = vmatmul.mubr.f32.gmra.mxu0 %v1151
        %v1351 = vpop.f32.mrf.mxu0
        %v1352 = vadd.f32 0.0, %v1351
        %v1353 = vpop.f32.mrf.mxu0
        %1354 = vmatprep.mubr.f32.mxu0 0.0
        %1355 = vmatmul.mubr.f32.gmra.mxu0 %v1154
        %v1356 = vpop.f32.mrf.mxu0
        %v1357 = vadd.f32 0.0, %v1356
        %v1358 = vpop.f32.mrf.mxu0
        %1359 = vmatprep.mubr.f32.mxu0 0.0
        %1360 = vmatmul.mubr.f32.gmra.mxu0 %v1157
        %v1361 = vpop.f32.mrf.mxu0
        %v1362 = vadd.f32 0.0, %v1361
        %v1363 = vpop.f32.mrf.mxu0
        %1364 = vmatprep.mubr.f32.mxu0 0.0
        %1365 = vmatmul.mubr.f32.gmra.mxu0 %v1160
        %v1366 = vpop.f32.mrf.mxu0
        %v1367 = vadd.f32 0.0, %v1366
        %v1368 = vpop.f32.mrf.mxu0
        %1369 = vmatprep.mubr.f32.mxu0 0.0
        %1370 = vmatmul.mubr.f32.gmra.mxu0 %v1163
        %v1371 = vpop.f32.mrf.mxu0
        %v1372 = vadd.f32 0.0, %v1371
        %v1373 = vpop.f32.mrf.mxu0
        %1374 = vmatprep.mubr.f32.mxu0 0.0
        %1375 = vmatmul.mubr.f32.gmra.mxu0 %v1166
        %v1376 = vpop.f32.mrf.mxu0
        %v1377 = vadd.f32 0.0, %v1376
        %v1378 = vpop.f32.mrf.mxu0
        %1379 = vmatprep.mubr.f32.mxu0 0.0
        %1380 = vmatmul.mubr.f32.gmra.mxu0 %v1169
        %v1381 = vpop.f32.mrf.mxu0
        %v1382 = vadd.f32 0.0, %v1381
        %v1383 = vpop.f32.mrf.mxu0
        %1384 = vmatprep.mubr.f32.mxu0 0.0
        %1385 = vmatmul.mubr.f32.gmra.mxu0 %v1172
        %v1386 = vpop.f32.mrf.mxu0
        %v1387 = vadd.f32 0.0, %v1386
        %v1388 = vpop.f32.mrf.mxu0
        %1389 = vmatprep.mubr.f32.mxu0 0.0
        %1390 = vmatmul.mubr.f32.gmra.mxu0 %v1175
        %v1391 = vpop.f32.mrf.mxu0
        %v1392 = vadd.f32 0.0, %v1391
        %v1393 = vpop.f32.mrf.mxu0
        %1394 = vmatprep.mubr.f32.mxu0 0.0
        %1395 = vmatmul.mubr.f32.gmra.mxu0 %v1178
        %v1396 = vpop.f32.mrf.mxu0
        %v1397 = vadd.f32 0.0, %v1396
        %v1398 = vpop.f32.mrf.mxu0
        %1399 = vmatprep.mubr.f32.mxu0 0.0
        %1400 = vmatmul.mubr.f32.gmra.mxu0 %v1181
        %v1401 = vpop.f32.mrf.mxu0
        %v1402 = vadd.f32 0.0, %v1401
        %v1403 = vpop.f32.mrf.mxu0
        %1404 = vmatprep.mubr.f32.mxu0 0.0
        %1405 = vmatmul.mubr.f32.gmra.mxu0 %v1184
        %v1406 = vpop.f32.mrf.mxu0
        %v1407 = vadd.f32 0.0, %v1406
        %v1408 = vpop.f32.mrf.mxu0
        %1409 = vmatprep.mubr.f32.mxu0 0.0
        %1410 = vmatmul.mubr.f32.gmra.mxu0 %v1187
        %v1411 = vpop.f32.mrf.mxu0
        %v1412 = vadd.f32 0.0, %v1411
        %v1413 = vpop.f32.mrf.mxu0
        %1414 = vmatprep.mubr.f32.mxu0 0.0
        %1415 = vmatmul.mubr.f32.gmra.mxu0 %v1190
        %v1416 = vpop.f32.mrf.mxu0
        %v1417 = vadd.f32 0.0, %v1416
        %v1418 = vpop.f32.mrf.mxu0
        %1419 = vdwg.mxu0
        %v1420 = vld [vmem:[#allocation2] sm:$0xff]
        %v1421 = vld [vmem:[#allocation2 + $0x8] sm:$0xff]
        %v1422 = vld [vmem:[#allocation2 + $0x10] sm:$0xff]
        %v1423 = vld [vmem:[#allocation2 + $0x18] sm:$0xff]
        %v1424 = vld [vmem:[#allocation2 + $0x20] sm:$0xff]
        %v1425 = vld [vmem:[#allocation2 + $0x28] sm:$0xff]
        %v1426 = vld [vmem:[#allocation2 + $0x30] sm:$0xff]
        %v1427 = vld [vmem:[#allocation2 + $0x38] sm:$0xff]
        %v1428 = vld [vmem:[#allocation2 + $0x40] sm:$0xff]
        %v1429 = vld [vmem:[#allocation2 + $0x48] sm:$0xff]
        %v1430 = vld [vmem:[#allocation2 + $0x50] sm:$0xff]
        %v1431 = vld [vmem:[#allocation2 + $0x58] sm:$0xff]
        %v1432 = vld [vmem:[#allocation2 + $0x60] sm:$0xff]
        %v1433 = vld [vmem:[#allocation2 + $0x68] sm:$0xff]
        %v1434 = vld [vmem:[#allocation2 + $0x70] sm:$0xff]
        %v1435 = vld [vmem:[#allocation2 + $0x78] sm:$0xff]
        %v1436 = vld [vmem:[#allocation2 + $0x80] sm:$0xff]
        %v1437 = vld [vmem:[#allocation2 + $0x88] sm:$0xff]
        %v1438 = vld [vmem:[#allocation2 + $0x90] sm:$0xff]
        %v1439 = vld [vmem:[#allocation2 + $0x98] sm:$0xff]
        %v1440 = vld [vmem:[#allocation2 + $0xa0] sm:$0xff]
        %v1441 = vld [vmem:[#allocation2 + $0xa8] sm:$0xff]
        %v1442 = vld [vmem:[#allocation2 + $0xb0] sm:$0xff]
        %v1443 = vld [vmem:[#allocation2 + $0xb8] sm:$0xff]
        %v1444 = vld [vmem:[#allocation2 + $0xc0] sm:$0xff]
        %v1445 = vld [vmem:[#allocation2 + $0xc8] sm:$0xff]
        %v1446 = vld [vmem:[#allocation2 + $0xd0] sm:$0xff]
        %v1447 = vld [vmem:[#allocation2 + $0xd8] sm:$0xff]
        %v1448 = vld [vmem:[#allocation2 + $0xe0] sm:$0xff]
        %v1449 = vld [vmem:[#allocation2 + $0xe8] sm:$0xff]
        %v1450 = vld [vmem:[#allocation2 + $0xf0] sm:$0xff]
        %v1451 = vld [vmem:[#allocation2 + $0xf8] sm:$0xff]
        %v1452 = vadd.f32 %v1420, %v1262
        %v1453 = vadd.f32 %v1421, %v1267
        %v1454 = vadd.f32 %v1422, %v1272
        %v1455 = vadd.f32 %v1423, %v1277
        %v1456 = vadd.f32 %v1424, %v1282
        %v1457 = vadd.f32 %v1425, %v1287
        %v1458 = vadd.f32 %v1426, %v1292
        %v1459 = vadd.f32 %v1427, %v1297
        %v1460 = vadd.f32 %v1428, %v1302
        %v1461 = vadd.f32 %v1429, %v1307
        %v1462 = vadd.f32 %v1430, %v1312
        %v1463 = vadd.f32 %v1431, %v1317
        %v1464 = vadd.f32 %v1432, %v1322
        %v1465 = vadd.f32 %v1433, %v1327
        %v1466 = vadd.f32 %v1434, %v1332
        %v1467 = vadd.f32 %v1435, %v1337
        %v1468 = vadd.f32 %v1436, %v1342
        %v1469 = vadd.f32 %v1437, %v1347
        %v1470 = vadd.f32 %v1438, %v1352
        %v1471 = vadd.f32 %v1439, %v1357
        %v1472 = vadd.f32 %v1440, %v1362
        %v1473 = vadd.f32 %v1441, %v1367
        %v1474 = vadd.f32 %v1442, %v1372
        %v1475 = vadd.f32 %v1443, %v1377
        %v1476 = vadd.f32 %v1444, %v1382
        %v1477 = vadd.f32 %v1445, %v1387
        %v1478 = vadd.f32 %v1446, %v1392
        %v1479 = vadd.f32 %v1447, %v1397
        %v1480 = vadd.f32 %v1448, %v1402
        %v1481 = vadd.f32 %v1449, %v1407
        %v1482 = vadd.f32 %v1450, %v1412
        %v1483 = vadd.f32 %v1451, %v1417
        %1484 = vst [vmem:[#allocation2] sm:$0xff] %v1452
        %1485 = vst [vmem:[#allocation2 + $0x8] sm:$0xff] %v1453
        %1486 = vst [vmem:[#allocation2 + $0x10] sm:$0xff] %v1454
        %1487 = vst [vmem:[#allocation2 + $0x18] sm:$0xff] %v1455
        %1488 = vst [vmem:[#allocation2 + $0x20] sm:$0xff] %v1456
        %1489 = vst [vmem:[#allocation2 + $0x28] sm:$0xff] %v1457
        %1490 = vst [vmem:[#allocation2 + $0x30] sm:$0xff] %v1458
        %1491 = vst [vmem:[#allocation2 + $0x38] sm:$0xff] %v1459
        %1492 = vst [vmem:[#allocation2 + $0x40] sm:$0xff] %v1460
        %1493 = vst [vmem:[#allocation2 + $0x48] sm:$0xff] %v1461
        %1494 = vst [vmem:[#allocation2 + $0x50] sm:$0xff] %v1462
        %1495 = vst [vmem:[#allocation2 + $0x58] sm:$0xff] %v1463
        %1496 = vst [vmem:[#allocation2 + $0x60] sm:$0xff] %v1464
        %1497 = vst [vmem:[#allocation2 + $0x68] sm:$0xff] %v1465
        %1498 = vst [vmem:[#allocation2 + $0x70] sm:$0xff] %v1466
        %1499 = vst [vmem:[#allocation2 + $0x78] sm:$0xff] %v1467
        %1500 = vst [vmem:[#allocation2 + $0x80] sm:$0xff] %v1468
        %1501 = vst [vmem:[#allocation2 + $0x88] sm:$0xff] %v1469
        %1502 = vst [vmem:[#allocation2 + $0x90] sm:$0xff] %v1470
        %1503 = vst [vmem:[#allocation2 + $0x98] sm:$0xff] %v1471
        %1504 = vst [vmem:[#allocation2 + $0xa0] sm:$0xff] %v1472
        %1505 = vst [vmem:[#allocation2 + $0xa8] sm:$0xff] %v1473
        %1506 = vst [vmem:[#allocation2 + $0xb0] sm:$0xff] %v1474
        %1507 = vst [vmem:[#allocation2 + $0xb8] sm:$0xff] %v1475
        %1508 = vst [vmem:[#allocation2 + $0xc0] sm:$0xff] %v1476
        %1509 = vst [vmem:[#allocation2 + $0xc8] sm:$0xff] %v1477
        %1510 = vst [vmem:[#allocation2 + $0xd0] sm:$0xff] %v1478
        %1511 = vst [vmem:[#allocation2 + $0xd8] sm:$0xff] %v1479
        %1512 = vst [vmem:[#allocation2 + $0xe0] sm:$0xff] %v1480
        %1513 = vst [vmem:[#allocation2 + $0xe8] sm:$0xff] %v1481
        %1514 = vst [vmem:[#allocation2 + $0xf0] sm:$0xff] %v1482
        %1515 = vst [vmem:[#allocation2 + $0xf8] sm:$0xff] %v1483
        %s1516 = scalar_lea.vmem %s208, 24
        %v1517 = vld [vmem:[%s1516] sm:$0xff]
        %v1518 = vld [vmem:[%s1516 + $0x8] sm:$0xff]
        %v1519 = vld [vmem:[%s1516 + $0x18] sm:$0xff]
        %v1520 = vld [vmem:[%s1516 + $0x20] sm:$0xff]
        %v1521 = vld [vmem:[%s1516 + $0x30] sm:$0xff]
        %v1522 = vld [vmem:[%s1516 + $0x38] sm:$0xff]
        %v1523 = vld [vmem:[%s1516 + $0x48] sm:$0xff]
        %v1524 = vld [vmem:[%s1516 + $0x50] sm:$0xff]
        %v1525 = vld [vmem:[%s1516 + $0x60] sm:$0xff]
        %v1526 = vld [vmem:[%s1516 + $0x68] sm:$0xff]
        %v1527 = vld [vmem:[%s1516 + $0x78] sm:$0xff]
        %v1528 = vld [vmem:[%s1516 + $0x80] sm:$0xff]
        %v1529 = vld [vmem:[%s1516 + $0x90] sm:$0xff]
        %v1530 = vld [vmem:[%s1516 + $0x98] sm:$0xff]
        %v1531 = vld [vmem:[%s1516 + $0xa8] sm:$0xff]
        %v1532 = vld [vmem:[%s1516 + $0xb0] sm:$0xff]
        %v1533 = vld [vmem:[%s1516 + $0xc0] sm:$0xff]
        %v1534 = vld [vmem:[%s1516 + $0xc8] sm:$0xff]
        %v1535 = vld [vmem:[%s1516 + $0xd8] sm:$0xff]
        %v1536 = vld [vmem:[%s1516 + $0xe0] sm:$0xff]
        %v1537 = vld [vmem:[%s1516 + $0xf0] sm:$0xff]
        %v1538 = vld [vmem:[%s1516 + $0xf8] sm:$0xff]
        %v1539 = vld [vmem:[%s1516 + $0x108] sm:$0xff]
        %v1540 = vld [vmem:[%s1516 + $0x110] sm:$0xff]
        %v1541 = vld [vmem:[%s1516 + $0x120] sm:$0xff]
        %v1542 = vld [vmem:[%s1516 + $0x128] sm:$0xff]
        %v1543 = vld [vmem:[%s1516 + $0x138] sm:$0xff]
        %v1544 = vld [vmem:[%s1516 + $0x140] sm:$0xff]
        %v1545 = vld [vmem:[%s1516 + $0x150] sm:$0xff]
        %v1546 = vld [vmem:[%s1516 + $0x158] sm:$0xff]
        %v1547 = vld [vmem:[%s1516 + $0x168] sm:$0xff]
        %v1548 = vld [vmem:[%s1516 + $0x170] sm:$0xff]
        %s1549 = scalar_lea.vmem %s213, 12
        %v1550 = vld [vmem:[%s1549] sm:$0xf]
        %v1552 = vsel %vm250, %v1517, 0
        %v1555 = vsel %vm250, %v1518, 0
        %v1558 = vsel %vm250, %v1519, 0
        %v1561 = vsel %vm250, %v1520, 0
        %v1564 = vsel %vm250, %v1521, 0
        %v1567 = vsel %vm250, %v1522, 0
        %v1570 = vsel %vm250, %v1523, 0
        %v1573 = vsel %vm250, %v1524, 0
        %v1576 = vsel %vm250, %v1525, 0
        %v1579 = vsel %vm250, %v1526, 0
        %v1582 = vsel %vm250, %v1527, 0
        %v1585 = vsel %vm250, %v1528, 0
        %v1588 = vsel %vm250, %v1529, 0
        %v1591 = vsel %vm250, %v1530, 0
        %v1594 = vsel %vm250, %v1531, 0
        %v1597 = vsel %vm250, %v1532, 0
        %v1600 = vsel %vm250, %v1533, 0
        %v1603 = vsel %vm250, %v1534, 0
        %v1606 = vsel %vm250, %v1535, 0
        %v1609 = vsel %vm250, %v1536, 0
        %v1612 = vsel %vm250, %v1537, 0
        %v1615 = vsel %vm250, %v1538, 0
        %v1618 = vsel %vm250, %v1539, 0
        %v1621 = vsel %vm250, %v1540, 0
        %v1624 = vsel %vm250, %v1541, 0
        %v1627 = vsel %vm250, %v1542, 0
        %v1630 = vsel %vm250, %v1543, 0
        %v1633 = vsel %vm250, %v1544, 0
        %v1636 = vsel %vm250, %v1545, 0
        %v1639 = vsel %vm250, %v1546, 0
        %v1642 = vsel %vm250, %v1547, 0
        %v1645 = vsel %vm250, %v1548, 0
        %v1648 = vsel %vm347, %v1550, 0
        %1650 = vmatprep.subr.mxu0 0.0
        %1651 = vmatpush1.msra.mxu0 0.0
        %1652 = vmatprep.subr.mxu0 0.0
        %1653 = vmatpush1.msra.mxu0 0.0
        %1654 = vmatprep.subr.mxu0 0.0
        %1655 = vmatpush1.msra.mxu0 0.0
        %1656 = vmatprep.subr.mxu0 0.0
        %1657 = vmatpush1.msra.mxu0 0.0
        %1658 = vmatprep.subr.mxu0 0.0
        %1659 = vmatpush1.msra.mxu0 0.0
        %1660 = vmatprep.subr.mxu0 0.0
        %1661 = vmatpush1.msra.mxu0 0.0
        %1662 = vmatprep.subr.mxu0 0.0
        %1663 = vmatpush1.msra.mxu0 0.0
        %1664 = vmatprep.subr.mxu0 0.0
        %1665 = vmatpush1.msra.mxu0 0.0
        %1666 = vmatprep.subr.mxu0 0.0
        %1667 = vmatpush1.msra.mxu0 0.0
        %1668 = vmatprep.subr.mxu0 0.0
        %1669 = vmatpush1.msra.mxu0 0.0
        %1670 = vmatprep.subr.mxu0 0.0
        %1671 = vmatpush1.msra.mxu0 0.0
        %1672 = vmatprep.subr.mxu0 0.0
        %1673 = vmatpush1.msra.mxu0 0.0
        %1674 = vmatprep.subr.mxu0 0.0
        %1675 = vmatpush1.msra.mxu0 0.0
        %1676 = vmatprep.subr.mxu0 0.0
        %1677 = vmatpush1.msra.mxu0 0.0
        %1678 = vmatprep.subr.mxu0 0.0
        %1679 = vmatpush1.msra.mxu0 0.0
        %1680 = vmatprep.subr.mxu0 0.0
        %1681 = vmatpush1.msra.mxu0 %v1648
        %1682 = vmatprep.subr.mxu0 0.0
        %1683 = vmatpush2.msra.mxu0 0.0
        %1684 = vmatprep.subr.mxu0 0.0
        %1685 = vmatpush2.msra.mxu0 0.0
        %1686 = vmatprep.subr.mxu0 0.0
        %1687 = vmatpush2.msra.mxu0 0.0
        %1688 = vmatprep.subr.mxu0 0.0
        %1689 = vmatpush2.msra.mxu0 0.0
        %1690 = vmatprep.subr.mxu0 0.0
        %1691 = vmatpush2.msra.mxu0 0.0
        %1692 = vmatprep.subr.mxu0 0.0
        %1693 = vmatpush2.msra.mxu0 0.0
        %1694 = vmatprep.subr.mxu0 0.0
        %1695 = vmatpush2.msra.mxu0 0.0
        %1696 = vmatprep.subr.mxu0 0.0
        %1697 = vmatpush2.msra.mxu0 0.0
        %1698 = vmatprep.subr.mxu0 0.0
        %1699 = vmatpush2.msra.mxu0 0.0
        %1700 = vmatprep.subr.mxu0 0.0
        %1701 = vmatpush2.msra.mxu0 0.0
        %1702 = vmatprep.subr.mxu0 0.0
        %1703 = vmatpush2.msra.mxu0 0.0
        %1704 = vmatprep.subr.mxu0 0.0
        %1705 = vmatpush2.msra.mxu0 0.0
        %1706 = vmatprep.subr.mxu0 0.0
        %1707 = vmatpush2.msra.mxu0 0.0
        %1708 = vmatprep.subr.mxu0 0.0
        %1709 = vmatpush2.msra.mxu0 0.0
        %1710 = vmatprep.subr.mxu0 0.0
        %1711 = vmatpush2.msra.mxu0 0.0
        %1712 = vmatprep.subr.mxu0 0.0
        %1713 = vmatpush2.msra.mxu0 0.0
        %1714 = vmatprep.mubr.f32.mxu0 0.0
        %1715 = vmatmul.mubr.f32.gmra.mxu0 %v1552
        %v1716 = vpop.f32.mrf.mxu0
        %v1717 = vadd.f32 0.0, %v1716
        %v1718 = vpop.f32.mrf.mxu0
        %1719 = vmatprep.mubr.f32.mxu0 0.0
        %1720 = vmatmul.mubr.f32.gmra.mxu0 %v1555
        %v1721 = vpop.f32.mrf.mxu0
        %v1722 = vadd.f32 0.0, %v1721
        %v1723 = vpop.f32.mrf.mxu0
        %1724 = vmatprep.mubr.f32.mxu0 0.0
        %1725 = vmatmul.mubr.f32.gmra.mxu0 %v1558
        %v1726 = vpop.f32.mrf.mxu0
        %v1727 = vadd.f32 0.0, %v1726
        %v1728 = vpop.f32.mrf.mxu0
        %1729 = vmatprep.mubr.f32.mxu0 0.0
        %1730 = vmatmul.mubr.f32.gmra.mxu0 %v1561
        %v1731 = vpop.f32.mrf.mxu0
        %v1732 = vadd.f32 0.0, %v1731
        %v1733 = vpop.f32.mrf.mxu0
        %1734 = vmatprep.mubr.f32.mxu0 0.0
        %1735 = vmatmul.mubr.f32.gmra.mxu0 %v1564
        %v1736 = vpop.f32.mrf.mxu0
        %v1737 = vadd.f32 0.0, %v1736
        %v1738 = vpop.f32.mrf.mxu0
        %1739 = vmatprep.mubr.f32.mxu0 0.0
        %1740 = vmatmul.mubr.f32.gmra.mxu0 %v1567
        %v1741 = vpop.f32.mrf.mxu0
        %v1742 = vadd.f32 0.0, %v1741
        %v1743 = vpop.f32.mrf.mxu0
        %1744 = vmatprep.mubr.f32.mxu0 0.0
        %1745 = vmatmul.mubr.f32.gmra.mxu0 %v1570
        %v1746 = vpop.f32.mrf.mxu0
        %v1747 = vadd.f32 0.0, %v1746
        %v1748 = vpop.f32.mrf.mxu0
        %1749 = vmatprep.mubr.f32.mxu0 0.0
        %1750 = vmatmul.mubr.f32.gmra.mxu0 %v1573
        %v1751 = vpop.f32.mrf.mxu0
        %v1752 = vadd.f32 0.0, %v1751
        %v1753 = vpop.f32.mrf.mxu0
        %1754 = vmatprep.mubr.f32.mxu0 0.0
        %1755 = vmatmul.mubr.f32.gmra.mxu0 %v1576
        %v1756 = vpop.f32.mrf.mxu0
        %v1757 = vadd.f32 0.0, %v1756
        %v1758 = vpop.f32.mrf.mxu0
        %1759 = vmatprep.mubr.f32.mxu0 0.0
        %1760 = vmatmul.mubr.f32.gmra.mxu0 %v1579
        %v1761 = vpop.f32.mrf.mxu0
        %v1762 = vadd.f32 0.0, %v1761
        %v1763 = vpop.f32.mrf.mxu0
        %1764 = vmatprep.mubr.f32.mxu0 0.0
        %1765 = vmatmul.mubr.f32.gmra.mxu0 %v1582
        %v1766 = vpop.f32.mrf.mxu0
        %v1767 = vadd.f32 0.0, %v1766
        %v1768 = vpop.f32.mrf.mxu0
        %1769 = vmatprep.mubr.f32.mxu0 0.0
        %1770 = vmatmul.mubr.f32.gmra.mxu0 %v1585
        %v1771 = vpop.f32.mrf.mxu0
        %v1772 = vadd.f32 0.0, %v1771
        %v1773 = vpop.f32.mrf.mxu0
        %1774 = vmatprep.mubr.f32.mxu0 0.0
        %1775 = vmatmul.mubr.f32.gmra.mxu0 %v1588
        %v1776 = vpop.f32.mrf.mxu0
        %v1777 = vadd.f32 0.0, %v1776
        %v1778 = vpop.f32.mrf.mxu0
        %1779 = vmatprep.mubr.f32.mxu0 0.0
        %1780 = vmatmul.mubr.f32.gmra.mxu0 %v1591
        %v1781 = vpop.f32.mrf.mxu0
        %v1782 = vadd.f32 0.0, %v1781
        %v1783 = vpop.f32.mrf.mxu0
        %1784 = vmatprep.mubr.f32.mxu0 0.0
        %1785 = vmatmul.mubr.f32.gmra.mxu0 %v1594
        %v1786 = vpop.f32.mrf.mxu0
        %v1787 = vadd.f32 0.0, %v1786
        %v1788 = vpop.f32.mrf.mxu0
        %1789 = vmatprep.mubr.f32.mxu0 0.0
        %1790 = vmatmul.mubr.f32.gmra.mxu0 %v1597
        %v1791 = vpop.f32.mrf.mxu0
        %v1792 = vadd.f32 0.0, %v1791
        %v1793 = vpop.f32.mrf.mxu0
        %1794 = vmatprep.mubr.f32.mxu0 0.0
        %1795 = vmatmul.mubr.f32.gmra.mxu0 %v1600
        %v1796 = vpop.f32.mrf.mxu0
        %v1797 = vadd.f32 0.0, %v1796
        %v1798 = vpop.f32.mrf.mxu0
        %1799 = vmatprep.mubr.f32.mxu0 0.0
        %1800 = vmatmul.mubr.f32.gmra.mxu0 %v1603
        %v1801 = vpop.f32.mrf.mxu0
        %v1802 = vadd.f32 0.0, %v1801
        %v1803 = vpop.f32.mrf.mxu0
        %1804 = vmatprep.mubr.f32.mxu0 0.0
        %1805 = vmatmul.mubr.f32.gmra.mxu0 %v1606
        %v1806 = vpop.f32.mrf.mxu0
        %v1807 = vadd.f32 0.0, %v1806
        %v1808 = vpop.f32.mrf.mxu0
        %1809 = vmatprep.mubr.f32.mxu0 0.0
        %1810 = vmatmul.mubr.f32.gmra.mxu0 %v1609
        %v1811 = vpop.f32.mrf.mxu0
        %v1812 = vadd.f32 0.0, %v1811
        %v1813 = vpop.f32.mrf.mxu0
        %1814 = vmatprep.mubr.f32.mxu0 0.0
        %1815 = vmatmul.mubr.f32.gmra.mxu0 %v1612
        %v1816 = vpop.f32.mrf.mxu0
        %v1817 = vadd.f32 0.0, %v1816
        %v1818 = vpop.f32.mrf.mxu0
        %1819 = vmatprep.mubr.f32.mxu0 0.0
        %1820 = vmatmul.mubr.f32.gmra.mxu0 %v1615
        %v1821 = vpop.f32.mrf.mxu0
        %v1822 = vadd.f32 0.0, %v1821
        %v1823 = vpop.f32.mrf.mxu0
        %1824 = vmatprep.mubr.f32.mxu0 0.0
        %1825 = vmatmul.mubr.f32.gmra.mxu0 %v1618
        %v1826 = vpop.f32.mrf.mxu0
        %v1827 = vadd.f32 0.0, %v1826
        %v1828 = vpop.f32.mrf.mxu0
        %1829 = vmatprep.mubr.f32.mxu0 0.0
        %1830 = vmatmul.mubr.f32.gmra.mxu0 %v1621
        %v1831 = vpop.f32.mrf.mxu0
        %v1832 = vadd.f32 0.0, %v1831
        %v1833 = vpop.f32.mrf.mxu0
        %1834 = vmatprep.mubr.f32.mxu0 0.0
        %1835 = vmatmul.mubr.f32.gmra.mxu0 %v1624
        %v1836 = vpop.f32.mrf.mxu0
        %v1837 = vadd.f32 0.0, %v1836
        %v1838 = vpop.f32.mrf.mxu0
        %1839 = vmatprep.mubr.f32.mxu0 0.0
        %1840 = vmatmul.mubr.f32.gmra.mxu0 %v1627
        %v1841 = vpop.f32.mrf.mxu0
        %v1842 = vadd.f32 0.0, %v1841
        %v1843 = vpop.f32.mrf.mxu0
        %1844 = vmatprep.mubr.f32.mxu0 0.0
        %1845 = vmatmul.mubr.f32.gmra.mxu0 %v1630
        %v1846 = vpop.f32.mrf.mxu0
        %v1847 = vadd.f32 0.0, %v1846
        %v1848 = vpop.f32.mrf.mxu0
        %1849 = vmatprep.mubr.f32.mxu0 0.0
        %1850 = vmatmul.mubr.f32.gmra.mxu0 %v1633
        %v1851 = vpop.f32.mrf.mxu0
        %v1852 = vadd.f32 0.0, %v1851
        %v1853 = vpop.f32.mrf.mxu0
        %1854 = vmatprep.mubr.f32.mxu0 0.0
        %1855 = vmatmul.mubr.f32.gmra.mxu0 %v1636
        %v1856 = vpop.f32.mrf.mxu0
        %v1857 = vadd.f32 0.0, %v1856
        %v1858 = vpop.f32.mrf.mxu0
        %1859 = vmatprep.mubr.f32.mxu0 0.0
        %1860 = vmatmul.mubr.f32.gmra.mxu0 %v1639
        %v1861 = vpop.f32.mrf.mxu0
        %v1862 = vadd.f32 0.0, %v1861
        %v1863 = vpop.f32.mrf.mxu0
        %1864 = vmatprep.mubr.f32.mxu0 0.0
        %1865 = vmatmul.mubr.f32.gmra.mxu0 %v1642
        %v1866 = vpop.f32.mrf.mxu0
        %v1867 = vadd.f32 0.0, %v1866
        %v1868 = vpop.f32.mrf.mxu0
        %1869 = vmatprep.mubr.f32.mxu0 0.0
        %1870 = vmatmul.mubr.f32.gmra.mxu0 %v1645
        %v1871 = vpop.f32.mrf.mxu0
        %v1872 = vadd.f32 0.0, %v1871
        %v1873 = vpop.f32.mrf.mxu0
        %1874 = vdwg.mxu0
        %v1875 = vld [vmem:[#allocation2] sm:$0xff]
        %v1876 = vld [vmem:[#allocation2 + $0x8] sm:$0xff]
        %v1877 = vld [vmem:[#allocation2 + $0x10] sm:$0xff]
        %v1878 = vld [vmem:[#allocation2 + $0x18] sm:$0xff]
        %v1879 = vld [vmem:[#allocation2 + $0x20] sm:$0xff]
        %v1880 = vld [vmem:[#allocation2 + $0x28] sm:$0xff]
        %v1881 = vld [vmem:[#allocation2 + $0x30] sm:$0xff]
        %v1882 = vld [vmem:[#allocation2 + $0x38] sm:$0xff]
        %v1883 = vld [vmem:[#allocation2 + $0x40] sm:$0xff]
        %v1884 = vld [vmem:[#allocation2 + $0x48] sm:$0xff]
        %v1885 = vld [vmem:[#allocation2 + $0x50] sm:$0xff]
        %v1886 = vld [vmem:[#allocation2 + $0x58] sm:$0xff]
        %v1887 = vld [vmem:[#allocation2 + $0x60] sm:$0xff]
        %v1888 = vld [vmem:[#allocation2 + $0x68] sm:$0xff]
        %v1889 = vld [vmem:[#allocation2 + $0x70] sm:$0xff]
        %v1890 = vld [vmem:[#allocation2 + $0x78] sm:$0xff]
        %v1891 = vld [vmem:[#allocation2 + $0x80] sm:$0xff]
        %v1892 = vld [vmem:[#allocation2 + $0x88] sm:$0xff]
        %v1893 = vld [vmem:[#allocation2 + $0x90] sm:$0xff]
        %v1894 = vld [vmem:[#allocation2 + $0x98] sm:$0xff]
        %v1895 = vld [vmem:[#allocation2 + $0xa0] sm:$0xff]
        %v1896 = vld [vmem:[#allocation2 + $0xa8] sm:$0xff]
        %v1897 = vld [vmem:[#allocation2 + $0xb0] sm:$0xff]
        %v1898 = vld [vmem:[#allocation2 + $0xb8] sm:$0xff]
        %v1899 = vld [vmem:[#allocation2 + $0xc0] sm:$0xff]
        %v1900 = vld [vmem:[#allocation2 + $0xc8] sm:$0xff]
        %v1901 = vld [vmem:[#allocation2 + $0xd0] sm:$0xff]
        %v1902 = vld [vmem:[#allocation2 + $0xd8] sm:$0xff]
        %v1903 = vld [vmem:[#allocation2 + $0xe0] sm:$0xff]
        %v1904 = vld [vmem:[#allocation2 + $0xe8] sm:$0xff]
        %v1905 = vld [vmem:[#allocation2 + $0xf0] sm:$0xff]
        %v1906 = vld [vmem:[#allocation2 + $0xf8] sm:$0xff]
        %v1907 = vadd.f32 %v1875, %v1717
        %v1908 = vadd.f32 %v1876, %v1722
        %v1909 = vadd.f32 %v1877, %v1727
        %v1910 = vadd.f32 %v1878, %v1732
        %v1911 = vadd.f32 %v1879, %v1737
        %v1912 = vadd.f32 %v1880, %v1742
        %v1913 = vadd.f32 %v1881, %v1747
        %v1914 = vadd.f32 %v1882, %v1752
        %v1915 = vadd.f32 %v1883, %v1757
        %v1916 = vadd.f32 %v1884, %v1762
        %v1917 = vadd.f32 %v1885, %v1767
        %v1918 = vadd.f32 %v1886, %v1772
        %v1919 = vadd.f32 %v1887, %v1777
        %v1920 = vadd.f32 %v1888, %v1782
        %v1921 = vadd.f32 %v1889, %v1787
        %v1922 = vadd.f32 %v1890, %v1792
        %v1923 = vadd.f32 %v1891, %v1797
        %v1924 = vadd.f32 %v1892, %v1802
        %v1925 = vadd.f32 %v1893, %v1807
        %v1926 = vadd.f32 %v1894, %v1812
        %v1927 = vadd.f32 %v1895, %v1817
        %v1928 = vadd.f32 %v1896, %v1822
        %v1929 = vadd.f32 %v1897, %v1827
        %v1930 = vadd.f32 %v1898, %v1832
        %v1931 = vadd.f32 %v1899, %v1837
        %v1932 = vadd.f32 %v1900, %v1842
        %v1933 = vadd.f32 %v1901, %v1847
        %v1934 = vadd.f32 %v1902, %v1852
        %v1935 = vadd.f32 %v1903, %v1857
        %v1936 = vadd.f32 %v1904, %v1862
        %v1937 = vadd.f32 %v1905, %v1867
        %v1938 = vadd.f32 %v1906, %v1872
        %1939 = vst [vmem:[#allocation2] sm:$0xff] %v1907
        %1940 = vst [vmem:[#allocation2 + $0x8] sm:$0xff] %v1908
        %1941 = vst [vmem:[#allocation2 + $0x10] sm:$0xff] %v1909
        %1942 = vst [vmem:[#allocation2 + $0x18] sm:$0xff] %v1910
        %1943 = vst [vmem:[#allocation2 + $0x20] sm:$0xff] %v1911
        %1944 = vst [vmem:[#allocation2 + $0x28] sm:$0xff] %v1912
        %1945 = vst [vmem:[#allocation2 + $0x30] sm:$0xff] %v1913
        %1946 = vst [vmem:[#allocation2 + $0x38] sm:$0xff] %v1914
        %1947 = vst [vmem:[#allocation2 + $0x40] sm:$0xff] %v1915
        %1948 = vst [vmem:[#allocation2 + $0x48] sm:$0xff] %v1916
        %1949 = vst [vmem:[#allocation2 + $0x50] sm:$0xff] %v1917
        %1950 = vst [vmem:[#allocation2 + $0x58] sm:$0xff] %v1918
        %1951 = vst [vmem:[#allocation2 + $0x60] sm:$0xff] %v1919
        %1952 = vst [vmem:[#allocation2 + $0x68] sm:$0xff] %v1920
        %1953 = vst [vmem:[#allocation2 + $0x70] sm:$0xff] %v1921
        %1954 = vst [vmem:[#allocation2 + $0x78] sm:$0xff] %v1922
        %1955 = vst [vmem:[#allocation2 + $0x80] sm:$0xff] %v1923
        %1956 = vst [vmem:[#allocation2 + $0x88] sm:$0xff] %v1924
        %1957 = vst [vmem:[#allocation2 + $0x90] sm:$0xff] %v1925
        %1958 = vst [vmem:[#allocation2 + $0x98] sm:$0xff] %v1926
        %1959 = vst [vmem:[#allocation2 + $0xa0] sm:$0xff] %v1927
        %1960 = vst [vmem:[#allocation2 + $0xa8] sm:$0xff] %v1928
        %1961 = vst [vmem:[#allocation2 + $0xb0] sm:$0xff] %v1929
        %1962 = vst [vmem:[#allocation2 + $0xb8] sm:$0xff] %v1930
        %1963 = vst [vmem:[#allocation2 + $0xc0] sm:$0xff] %v1931
        %1964 = vst [vmem:[#allocation2 + $0xc8] sm:$0xff] %v1932
        %1965 = vst [vmem:[#allocation2 + $0xd0] sm:$0xff] %v1933
        %1966 = vst [vmem:[#allocation2 + $0xd8] sm:$0xff] %v1934
        %1967 = vst [vmem:[#allocation2 + $0xe0] sm:$0xff] %v1935
        %1968 = vst [vmem:[#allocation2 + $0xe8] sm:$0xff] %v1936
        %1969 = vst [vmem:[#allocation2 + $0xf0] sm:$0xff] %v1937
        %1970 = vst [vmem:[#allocation2 + $0xf8] sm:$0xff] %v1938
        %v1971 = vld [vmem:[%s1516 + $0x1] sm:$0xff]
        %v1972 = vld [vmem:[%s1516 + $0x9] sm:$0xff]
        %v1973 = vld [vmem:[%s1516 + $0x19] sm:$0xff]
        %v1974 = vld [vmem:[%s1516 + $0x21] sm:$0xff]
        %v1975 = vld [vmem:[%s1516 + $0x31] sm:$0xff]
        %v1976 = vld [vmem:[%s1516 + $0x39] sm:$0xff]
        %v1977 = vld [vmem:[%s1516 + $0x49] sm:$0xff]
        %v1978 = vld [vmem:[%s1516 + $0x51] sm:$0xff]
        %v1979 = vld [vmem:[%s1516 + $0x61] sm:$0xff]
        %v1980 = vld [vmem:[%s1516 + $0x69] sm:$0xff]
        %v1981 = vld [vmem:[%s1516 + $0x79] sm:$0xff]
        %v1982 = vld [vmem:[%s1516 + $0x81] sm:$0xff]
        %v1983 = vld [vmem:[%s1516 + $0x91] sm:$0xff]
        %v1984 = vld [vmem:[%s1516 + $0x99] sm:$0xff]
        %v1985 = vld [vmem:[%s1516 + $0xa9] sm:$0xff]
        %v1986 = vld [vmem:[%s1516 + $0xb1] sm:$0xff]
        %v1987 = vld [vmem:[%s1516 + $0xc1] sm:$0xff]
        %v1988 = vld [vmem:[%s1516 + $0xc9] sm:$0xff]
        %v1989 = vld [vmem:[%s1516 + $0xd9] sm:$0xff]
        %v1990 = vld [vmem:[%s1516 + $0xe1] sm:$0xff]
        %v1991 = vld [vmem:[%s1516 + $0xf1] sm:$0xff]
        %v1992 = vld [vmem:[%s1516 + $0xf9] sm:$0xff]
        %v1993 = vld [vmem:[%s1516 + $0x109] sm:$0xff]
        %v1994 = vld [vmem:[%s1516 + $0x111] sm:$0xff]
        %v1995 = vld [vmem:[%s1516 + $0x121] sm:$0xff]
        %v1996 = vld [vmem:[%s1516 + $0x129] sm:$0xff]
        %v1997 = vld [vmem:[%s1516 + $0x139] sm:$0xff]
        %v1998 = vld [vmem:[%s1516 + $0x141] sm:$0xff]
        %v1999 = vld [vmem:[%s1516 + $0x151] sm:$0xff]
        %v2000 = vld [vmem:[%s1516 + $0x159] sm:$0xff]
        %v2001 = vld [vmem:[%s1516 + $0x169] sm:$0xff]
        %v2002 = vld [vmem:[%s1516 + $0x171] sm:$0xff]
        %s2003 = scalar_lea.vmem %s213, 16
        %v2004 = vld [vmem:[%s2003] sm:$0xf]
        %v2006 = vsel %vm250, %v1971, 0
        %v2009 = vsel %vm250, %v1972, 0
        %v2012 = vsel %vm250, %v1973, 0
        %v2015 = vsel %vm250, %v1974, 0
        %v2018 = vsel %vm250, %v1975, 0
        %v2021 = vsel %vm250, %v1976, 0
        %v2024 = vsel %vm250, %v1977, 0
        %v2027 = vsel %vm250, %v1978, 0
        %v2030 = vsel %vm250, %v1979, 0
        %v2033 = vsel %vm250, %v1980, 0
        %v2036 = vsel %vm250, %v1981, 0
        %v2039 = vsel %vm250, %v1982, 0
        %v2042 = vsel %vm250, %v1983, 0
        %v2045 = vsel %vm250, %v1984, 0
        %v2048 = vsel %vm250, %v1985, 0
        %v2051 = vsel %vm250, %v1986, 0
        %v2054 = vsel %vm250, %v1987, 0
        %v2057 = vsel %vm250, %v1988, 0
        %v2060 = vsel %vm250, %v1989, 0
        %v2063 = vsel %vm250, %v1990, 0
        %v2066 = vsel %vm250, %v1991, 0
        %v2069 = vsel %vm250, %v1992, 0
        %v2072 = vsel %vm250, %v1993, 0
        %v2075 = vsel %vm250, %v1994, 0
        %v2078 = vsel %vm250, %v1995, 0
        %v2081 = vsel %vm250, %v1996, 0
        %v2084 = vsel %vm250, %v1997, 0
        %v2087 = vsel %vm250, %v1998, 0
        %v2090 = vsel %vm250, %v1999, 0
        %v2093 = vsel %vm250, %v2000, 0
        %v2096 = vsel %vm250, %v2001, 0
        %v2099 = vsel %vm250, %v2002, 0
        %v2102 = vsel %vm347, %v2004, 0
        %2104 = vmatprep.subr.mxu0 0.0
        %2105 = vmatpush1.msra.mxu0 0.0
        %2106 = vmatprep.subr.mxu0 0.0
        %2107 = vmatpush1.msra.mxu0 0.0
        %2108 = vmatprep.subr.mxu0 0.0
        %2109 = vmatpush1.msra.mxu0 0.0
        %2110 = vmatprep.subr.mxu0 0.0
        %2111 = vmatpush1.msra.mxu0 0.0
        %2112 = vmatprep.subr.mxu0 0.0
        %2113 = vmatpush1.msra.mxu0 0.0
        %2114 = vmatprep.subr.mxu0 0.0
        %2115 = vmatpush1.msra.mxu0 0.0
        %2116 = vmatprep.subr.mxu0 0.0
        %2117 = vmatpush1.msra.mxu0 0.0
        %2118 = vmatprep.subr.mxu0 0.0
        %2119 = vmatpush1.msra.mxu0 0.0
        %2120 = vmatprep.subr.mxu0 0.0
        %2121 = vmatpush1.msra.mxu0 0.0
        %2122 = vmatprep.subr.mxu0 0.0
        %2123 = vmatpush1.msra.mxu0 0.0
        %2124 = vmatprep.subr.mxu0 0.0
        %2125 = vmatpush1.msra.mxu0 0.0
        %2126 = vmatprep.subr.mxu0 0.0
        %2127 = vmatpush1.msra.mxu0 0.0
        %2128 = vmatprep.subr.mxu0 0.0
        %2129 = vmatpush1.msra.mxu0 0.0
        %2130 = vmatprep.subr.mxu0 0.0
        %2131 = vmatpush1.msra.mxu0 0.0
        %2132 = vmatprep.subr.mxu0 0.0
        %2133 = vmatpush1.msra.mxu0 0.0
        %2134 = vmatprep.subr.mxu0 0.0
        %2135 = vmatpush1.msra.mxu0 %v2102
        %2136 = vmatprep.subr.mxu0 0.0
        %2137 = vmatpush2.msra.mxu0 0.0
        %2138 = vmatprep.subr.mxu0 0.0
        %2139 = vmatpush2.msra.mxu0 0.0
        %2140 = vmatprep.subr.mxu0 0.0
        %2141 = vmatpush2.msra.mxu0 0.0
        %2142 = vmatprep.subr.mxu0 0.0
        %2143 = vmatpush2.msra.mxu0 0.0
        %2144 = vmatprep.subr.mxu0 0.0
        %2145 = vmatpush2.msra.mxu0 0.0
        %2146 = vmatprep.subr.mxu0 0.0
        %2147 = vmatpush2.msra.mxu0 0.0
        %2148 = vmatprep.subr.mxu0 0.0
        %2149 = vmatpush2.msra.mxu0 0.0
        %2150 = vmatprep.subr.mxu0 0.0
        %2151 = vmatpush2.msra.mxu0 0.0
        %2152 = vmatprep.subr.mxu0 0.0
        %2153 = vmatpush2.msra.mxu0 0.0
        %2154 = vmatprep.subr.mxu0 0.0
        %2155 = vmatpush2.msra.mxu0 0.0
        %2156 = vmatprep.subr.mxu0 0.0
        %2157 = vmatpush2.msra.mxu0 0.0
        %2158 = vmatprep.subr.mxu0 0.0
        %2159 = vmatpush2.msra.mxu0 0.0
        %2160 = vmatprep.subr.mxu0 0.0
        %2161 = vmatpush2.msra.mxu0 0.0
        %2162 = vmatprep.subr.mxu0 0.0
        %2163 = vmatpush2.msra.mxu0 0.0
        %2164 = vmatprep.subr.mxu0 0.0
        %2165 = vmatpush2.msra.mxu0 0.0
        %2166 = vmatprep.subr.mxu0 0.0
        %2167 = vmatpush2.msra.mxu0 0.0
        %2168 = vmatprep.mubr.f32.mxu0 0.0
        %2169 = vmatmul.mubr.f32.gmra.mxu0 %v2006
        %v2170 = vpop.f32.mrf.mxu0
        %v2171 = vadd.f32 0.0, %v2170
        %v2172 = vpop.f32.mrf.mxu0
        %2173 = vmatprep.mubr.f32.mxu0 0.0
        %2174 = vmatmul.mubr.f32.gmra.mxu0 %v2009
        %v2175 = vpop.f32.mrf.mxu0
        %v2176 = vadd.f32 0.0, %v2175
        %v2177 = vpop.f32.mrf.mxu0
        %2178 = vmatprep.mubr.f32.mxu0 0.0
        %2179 = vmatmul.mubr.f32.gmra.mxu0 %v2012
        %v2180 = vpop.f32.mrf.mxu0
        %v2181 = vadd.f32 0.0, %v2180
        %v2182 = vpop.f32.mrf.mxu0
        %2183 = vmatprep.mubr.f32.mxu0 0.0
        %2184 = vmatmul.mubr.f32.gmra.mxu0 %v2015
        %v2185 = vpop.f32.mrf.mxu0
        %v2186 = vadd.f32 0.0, %v2185
        %v2187 = vpop.f32.mrf.mxu0
        %2188 = vmatprep.mubr.f32.mxu0 0.0
        %2189 = vmatmul.mubr.f32.gmra.mxu0 %v2018
        %v2190 = vpop.f32.mrf.mxu0
        %v2191 = vadd.f32 0.0, %v2190
        %v2192 = vpop.f32.mrf.mxu0
        %2193 = vmatprep.mubr.f32.mxu0 0.0
        %2194 = vmatmul.mubr.f32.gmra.mxu0 %v2021
        %v2195 = vpop.f32.mrf.mxu0
        %v2196 = vadd.f32 0.0, %v2195
        %v2197 = vpop.f32.mrf.mxu0
        %2198 = vmatprep.mubr.f32.mxu0 0.0
        %2199 = vmatmul.mubr.f32.gmra.mxu0 %v2024
        %v2200 = vpop.f32.mrf.mxu0
        %v2201 = vadd.f32 0.0, %v2200
        %v2202 = vpop.f32.mrf.mxu0
        %2203 = vmatprep.mubr.f32.mxu0 0.0
        %2204 = vmatmul.mubr.f32.gmra.mxu0 %v2027
        %v2205 = vpop.f32.mrf.mxu0
        %v2206 = vadd.f32 0.0, %v2205
        %v2207 = vpop.f32.mrf.mxu0
        %2208 = vmatprep.mubr.f32.mxu0 0.0
        %2209 = vmatmul.mubr.f32.gmra.mxu0 %v2030
        %v2210 = vpop.f32.mrf.mxu0
        %v2211 = vadd.f32 0.0, %v2210
        %v2212 = vpop.f32.mrf.mxu0
        %2213 = vmatprep.mubr.f32.mxu0 0.0
        %2214 = vmatmul.mubr.f32.gmra.mxu0 %v2033
        %v2215 = vpop.f32.mrf.mxu0
        %v2216 = vadd.f32 0.0, %v2215
        %v2217 = vpop.f32.mrf.mxu0
        %2218 = vmatprep.mubr.f32.mxu0 0.0
        %2219 = vmatmul.mubr.f32.gmra.mxu0 %v2036
        %v2220 = vpop.f32.mrf.mxu0
        %v2221 = vadd.f32 0.0, %v2220
        %v2222 = vpop.f32.mrf.mxu0
        %2223 = vmatprep.mubr.f32.mxu0 0.0
        %2224 = vmatmul.mubr.f32.gmra.mxu0 %v2039
        %v2225 = vpop.f32.mrf.mxu0
        %v2226 = vadd.f32 0.0, %v2225
        %v2227 = vpop.f32.mrf.mxu0
        %2228 = vmatprep.mubr.f32.mxu0 0.0
        %2229 = vmatmul.mubr.f32.gmra.mxu0 %v2042
        %v2230 = vpop.f32.mrf.mxu0
        %v2231 = vadd.f32 0.0, %v2230
        %v2232 = vpop.f32.mrf.mxu0
        %2233 = vmatprep.mubr.f32.mxu0 0.0
        %2234 = vmatmul.mubr.f32.gmra.mxu0 %v2045
        %v2235 = vpop.f32.mrf.mxu0
        %v2236 = vadd.f32 0.0, %v2235
        %v2237 = vpop.f32.mrf.mxu0
        %2238 = vmatprep.mubr.f32.mxu0 0.0
        %2239 = vmatmul.mubr.f32.gmra.mxu0 %v2048
        %v2240 = vpop.f32.mrf.mxu0
        %v2241 = vadd.f32 0.0, %v2240
        %v2242 = vpop.f32.mrf.mxu0
        %2243 = vmatprep.mubr.f32.mxu0 0.0
        %2244 = vmatmul.mubr.f32.gmra.mxu0 %v2051
        %v2245 = vpop.f32.mrf.mxu0
        %v2246 = vadd.f32 0.0, %v2245
        %v2247 = vpop.f32.mrf.mxu0
        %2248 = vmatprep.mubr.f32.mxu0 0.0
        %2249 = vmatmul.mubr.f32.gmra.mxu0 %v2054
        %v2250 = vpop.f32.mrf.mxu0
        %v2251 = vadd.f32 0.0, %v2250
        %v2252 = vpop.f32.mrf.mxu0
        %2253 = vmatprep.mubr.f32.mxu0 0.0
        %2254 = vmatmul.mubr.f32.gmra.mxu0 %v2057
        %v2255 = vpop.f32.mrf.mxu0
        %v2256 = vadd.f32 0.0, %v2255
        %v2257 = vpop.f32.mrf.mxu0
        %2258 = vmatprep.mubr.f32.mxu0 0.0
        %2259 = vmatmul.mubr.f32.gmra.mxu0 %v2060
        %v2260 = vpop.f32.mrf.mxu0
        %v2261 = vadd.f32 0.0, %v2260
        %v2262 = vpop.f32.mrf.mxu0
        %2263 = vmatprep.mubr.f32.mxu0 0.0
        %2264 = vmatmul.mubr.f32.gmra.mxu0 %v2063
        %v2265 = vpop.f32.mrf.mxu0
        %v2266 = vadd.f32 0.0, %v2265
        %v2267 = vpop.f32.mrf.mxu0
        %2268 = vmatprep.mubr.f32.mxu0 0.0
        %2269 = vmatmul.mubr.f32.gmra.mxu0 %v2066
        %v2270 = vpop.f32.mrf.mxu0
        %v2271 = vadd.f32 0.0, %v2270
        %v2272 = vpop.f32.mrf.mxu0
        %2273 = vmatprep.mubr.f32.mxu0 0.0
        %2274 = vmatmul.mubr.f32.gmra.mxu0 %v2069
        %v2275 = vpop.f32.mrf.mxu0
        %v2276 = vadd.f32 0.0, %v2275
        %v2277 = vpop.f32.mrf.mxu0
        %2278 = vmatprep.mubr.f32.mxu0 0.0
        %2279 = vmatmul.mubr.f32.gmra.mxu0 %v2072
        %v2280 = vpop.f32.mrf.mxu0
        %v2281 = vadd.f32 0.0, %v2280
        %v2282 = vpop.f32.mrf.mxu0
        %2283 = vmatprep.mubr.f32.mxu0 0.0
        %2284 = vmatmul.mubr.f32.gmra.mxu0 %v2075
        %v2285 = vpop.f32.mrf.mxu0
        %v2286 = vadd.f32 0.0, %v2285
        %v2287 = vpop.f32.mrf.mxu0
        %2288 = vmatprep.mubr.f32.mxu0 0.0
        %2289 = vmatmul.mubr.f32.gmra.mxu0 %v2078
        %v2290 = vpop.f32.mrf.mxu0
        %v2291 = vadd.f32 0.0, %v2290
        %v2292 = vpop.f32.mrf.mxu0
        %2293 = vmatprep.mubr.f32.mxu0 0.0
        %2294 = vmatmul.mubr.f32.gmra.mxu0 %v2081
        %v2295 = vpop.f32.mrf.mxu0
        %v2296 = vadd.f32 0.0, %v2295
        %v2297 = vpop.f32.mrf.mxu0
        %2298 = vmatprep.mubr.f32.mxu0 0.0
        %2299 = vmatmul.mubr.f32.gmra.mxu0 %v2084
        %v2300 = vpop.f32.mrf.mxu0
        %v2301 = vadd.f32 0.0, %v2300
        %v2302 = vpop.f32.mrf.mxu0
        %2303 = vmatprep.mubr.f32.mxu0 0.0
        %2304 = vmatmul.mubr.f32.gmra.mxu0 %v2087
        %v2305 = vpop.f32.mrf.mxu0
        %v2306 = vadd.f32 0.0, %v2305
        %v2307 = vpop.f32.mrf.mxu0
        %2308 = vmatprep.mubr.f32.mxu0 0.0
        %2309 = vmatmul.mubr.f32.gmra.mxu0 %v2090
        %v2310 = vpop.f32.mrf.mxu0
        %v2311 = vadd.f32 0.0, %v2310
        %v2312 = vpop.f32.mrf.mxu0
        %2313 = vmatprep.mubr.f32.mxu0 0.0
        %2314 = vmatmul.mubr.f32.gmra.mxu0 %v2093
        %v2315 = vpop.f32.mrf.mxu0
        %v2316 = vadd.f32 0.0, %v2315
        %v2317 = vpop.f32.mrf.mxu0
        %2318 = vmatprep.mubr.f32.mxu0 0.0
        %2319 = vmatmul.mubr.f32.gmra.mxu0 %v2096
        %v2320 = vpop.f32.mrf.mxu0
        %v2321 = vadd.f32 0.0, %v2320
        %v2322 = vpop.f32.mrf.mxu0
        %2323 = vmatprep.mubr.f32.mxu0 0.0
        %2324 = vmatmul.mubr.f32.gmra.mxu0 %v2099
        %v2325 = vpop.f32.mrf.mxu0
        %v2326 = vadd.f32 0.0, %v2325
        %v2327 = vpop.f32.mrf.mxu0
        %2328 = vdwg.mxu0
        %v2329 = vld [vmem:[#allocation2] sm:$0xff]
        %v2330 = vld [vmem:[#allocation2 + $0x8] sm:$0xff]
        %v2331 = vld [vmem:[#allocation2 + $0x10] sm:$0xff]
        %v2332 = vld [vmem:[#allocation2 + $0x18] sm:$0xff]
        %v2333 = vld [vmem:[#allocation2 + $0x20] sm:$0xff]
        %v2334 = vld [vmem:[#allocation2 + $0x28] sm:$0xff]
        %v2335 = vld [vmem:[#allocation2 + $0x30] sm:$0xff]
        %v2336 = vld [vmem:[#allocation2 + $0x38] sm:$0xff]
        %v2337 = vld [vmem:[#allocation2 + $0x40] sm:$0xff]
        %v2338 = vld [vmem:[#allocation2 + $0x48] sm:$0xff]
        %v2339 = vld [vmem:[#allocation2 + $0x50] sm:$0xff]
        %v2340 = vld [vmem:[#allocation2 + $0x58] sm:$0xff]
        %v2341 = vld [vmem:[#allocation2 + $0x60] sm:$0xff]
        %v2342 = vld [vmem:[#allocation2 + $0x68] sm:$0xff]
        %v2343 = vld [vmem:[#allocation2 + $0x70] sm:$0xff]
        %v2344 = vld [vmem:[#allocation2 + $0x78] sm:$0xff]
        %v2345 = vld [vmem:[#allocation2 + $0x80] sm:$0xff]
        %v2346 = vld [vmem:[#allocation2 + $0x88] sm:$0xff]
        %v2347 = vld [vmem:[#allocation2 + $0x90] sm:$0xff]
        %v2348 = vld [vmem:[#allocation2 + $0x98] sm:$0xff]
        %v2349 = vld [vmem:[#allocation2 + $0xa0] sm:$0xff]
        %v2350 = vld [vmem:[#allocation2 + $0xa8] sm:$0xff]
        %v2351 = vld [vmem:[#allocation2 + $0xb0] sm:$0xff]
        %v2352 = vld [vmem:[#allocation2 + $0xb8] sm:$0xff]
        %v2353 = vld [vmem:[#allocation2 + $0xc0] sm:$0xff]
        %v2354 = vld [vmem:[#allocation2 + $0xc8] sm:$0xff]
        %v2355 = vld [vmem:[#allocation2 + $0xd0] sm:$0xff]
        %v2356 = vld [vmem:[#allocation2 + $0xd8] sm:$0xff]
        %v2357 = vld [vmem:[#allocation2 + $0xe0] sm:$0xff]
        %v2358 = vld [vmem:[#allocation2 + $0xe8] sm:$0xff]
        %v2359 = vld [vmem:[#allocation2 + $0xf0] sm:$0xff]
        %v2360 = vld [vmem:[#allocation2 + $0xf8] sm:$0xff]
        %v2361 = vadd.f32 %v2329, %v2171
        %v2362 = vadd.f32 %v2330, %v2176
        %v2363 = vadd.f32 %v2331, %v2181
        %v2364 = vadd.f32 %v2332, %v2186
        %v2365 = vadd.f32 %v2333, %v2191
        %v2366 = vadd.f32 %v2334, %v2196
        %v2367 = vadd.f32 %v2335, %v2201
        %v2368 = vadd.f32 %v2336, %v2206
        %v2369 = vadd.f32 %v2337, %v2211
        %v2370 = vadd.f32 %v2338, %v2216
        %v2371 = vadd.f32 %v2339, %v2221
        %v2372 = vadd.f32 %v2340, %v2226
        %v2373 = vadd.f32 %v2341, %v2231
        %v2374 = vadd.f32 %v2342, %v2236
        %v2375 = vadd.f32 %v2343, %v2241
        %v2376 = vadd.f32 %v2344, %v2246
        %v2377 = vadd.f32 %v2345, %v2251
        %v2378 = vadd.f32 %v2346, %v2256
        %v2379 = vadd.f32 %v2347, %v2261
        %v2380 = vadd.f32 %v2348, %v2266
        %v2381 = vadd.f32 %v2349, %v2271
        %v2382 = vadd.f32 %v2350, %v2276
        %v2383 = vadd.f32 %v2351, %v2281
        %v2384 = vadd.f32 %v2352, %v2286
        %v2385 = vadd.f32 %v2353, %v2291
        %v2386 = vadd.f32 %v2354, %v2296
        %v2387 = vadd.f32 %v2355, %v2301
        %v2388 = vadd.f32 %v2356, %v2306
        %v2389 = vadd.f32 %v2357, %v2311
        %v2390 = vadd.f32 %v2358, %v2316
        %v2391 = vadd.f32 %v2359, %v2321
        %v2392 = vadd.f32 %v2360, %v2326
        %2393 = vst [vmem:[#allocation2] sm:$0xff] %v2361
        %2394 = vst [vmem:[#allocation2 + $0x8] sm:$0xff] %v2362
        %2395 = vst [vmem:[#allocation2 + $0x10] sm:$0xff] %v2363
        %2396 = vst [vmem:[#allocation2 + $0x18] sm:$0xff] %v2364
        %2397 = vst [vmem:[#allocation2 + $0x20] sm:$0xff] %v2365
        %2398 = vst [vmem:[#allocation2 + $0x28] sm:$0xff] %v2366
        %2399 = vst [vmem:[#allocation2 + $0x30] sm:$0xff] %v2367
        %2400 = vst [vmem:[#allocation2 + $0x38] sm:$0xff] %v2368
        %2401 = vst [vmem:[#allocation2 + $0x40] sm:$0xff] %v2369
        %2402 = vst [vmem:[#allocation2 + $0x48] sm:$0xff] %v2370
        %2403 = vst [vmem:[#allocation2 + $0x50] sm:$0xff] %v2371
        %2404 = vst [vmem:[#allocation2 + $0x58] sm:$0xff] %v2372
        %2405 = vst [vmem:[#allocation2 + $0x60] sm:$0xff] %v2373
        %2406 = vst [vmem:[#allocation2 + $0x68] sm:$0xff] %v2374
        %2407 = vst [vmem:[#allocation2 + $0x70] sm:$0xff] %v2375
        %2408 = vst [vmem:[#allocation2 + $0x78] sm:$0xff] %v2376
        %2409 = vst [vmem:[#allocation2 + $0x80] sm:$0xff] %v2377
        %2410 = vst [vmem:[#allocation2 + $0x88] sm:$0xff] %v2378
        %2411 = vst [vmem:[#allocation2 + $0x90] sm:$0xff] %v2379
        %2412 = vst [vmem:[#allocation2 + $0x98] sm:$0xff] %v2380
        %2413 = vst [vmem:[#allocation2 + $0xa0] sm:$0xff] %v2381
        %2414 = vst [vmem:[#allocation2 + $0xa8] sm:$0xff] %v2382
        %2415 = vst [vmem:[#allocation2 + $0xb0] sm:$0xff] %v2383
        %2416 = vst [vmem:[#allocation2 + $0xb8] sm:$0xff] %v2384
        %2417 = vst [vmem:[#allocation2 + $0xc0] sm:$0xff] %v2385
        %2418 = vst [vmem:[#allocation2 + $0xc8] sm:$0xff] %v2386
        %2419 = vst [vmem:[#allocation2 + $0xd0] sm:$0xff] %v2387
        %2420 = vst [vmem:[#allocation2 + $0xd8] sm:$0xff] %v2388
        %2421 = vst [vmem:[#allocation2 + $0xe0] sm:$0xff] %v2389
        %2422 = vst [vmem:[#allocation2 + $0xe8] sm:$0xff] %v2390
        %2423 = vst [vmem:[#allocation2 + $0xf0] sm:$0xff] %v2391
        %2424 = vst [vmem:[#allocation2 + $0xf8] sm:$0xff] %v2392
        %v2425 = vld [vmem:[%s1516 + $0x2] sm:$0xff]
        %v2426 = vld [vmem:[%s1516 + $0xa] sm:$0xff]
        %v2427 = vld [vmem:[%s1516 + $0x1a] sm:$0xff]
        %v2428 = vld [vmem:[%s1516 + $0x22] sm:$0xff]
        %v2429 = vld [vmem:[%s1516 + $0x32] sm:$0xff]
        %v2430 = vld [vmem:[%s1516 + $0x3a] sm:$0xff]
        %v2431 = vld [vmem:[%s1516 + $0x4a] sm:$0xff]
        %v2432 = vld [vmem:[%s1516 + $0x52] sm:$0xff]
        %v2433 = vld [vmem:[%s1516 + $0x62] sm:$0xff]
        %v2434 = vld [vmem:[%s1516 + $0x6a] sm:$0xff]
        %v2435 = vld [vmem:[%s1516 + $0x7a] sm:$0xff]
        %v2436 = vld [vmem:[%s1516 + $0x82] sm:$0xff]
        %v2437 = vld [vmem:[%s1516 + $0x92] sm:$0xff]
        %v2438 = vld [vmem:[%s1516 + $0x9a] sm:$0xff]
        %v2439 = vld [vmem:[%s1516 + $0xaa] sm:$0xff]
        %v2440 = vld [vmem:[%s1516 + $0xb2] sm:$0xff]
        %v2441 = vld [vmem:[%s1516 + $0xc2] sm:$0xff]
        %v2442 = vld [vmem:[%s1516 + $0xca] sm:$0xff]
        %v2443 = vld [vmem:[%s1516 + $0xda] sm:$0xff]
        %v2444 = vld [vmem:[%s1516 + $0xe2] sm:$0xff]
        %v2445 = vld [vmem:[%s1516 + $0xf2] sm:$0xff]
        %v2446 = vld [vmem:[%s1516 + $0xfa] sm:$0xff]
        %v2447 = vld [vmem:[%s1516 + $0x10a] sm:$0xff]
        %v2448 = vld [vmem:[%s1516 + $0x112] sm:$0xff]
        %v2449 = vld [vmem:[%s1516 + $0x122] sm:$0xff]
        %v2450 = vld [vmem:[%s1516 + $0x12a] sm:$0xff]
        %v2451 = vld [vmem:[%s1516 + $0x13a] sm:$0xff]
        %v2452 = vld [vmem:[%s1516 + $0x142] sm:$0xff]
        %v2453 = vld [vmem:[%s1516 + $0x152] sm:$0xff]
        %v2454 = vld [vmem:[%s1516 + $0x15a] sm:$0xff]
        %v2455 = vld [vmem:[%s1516 + $0x16a] sm:$0xff]
        %v2456 = vld [vmem:[%s1516 + $0x172] sm:$0xff]
        %s2457 = scalar_lea.vmem %s213, 20
        %v2458 = vld [vmem:[%s2457] sm:$0xf]
        %v2460 = vsel %vm250, %v2425, 0
        %v2463 = vsel %vm250, %v2426, 0
        %v2466 = vsel %vm250, %v2427, 0
        %v2469 = vsel %vm250, %v2428, 0
        %v2472 = vsel %vm250, %v2429, 0
        %v2475 = vsel %vm250, %v2430, 0
        %v2478 = vsel %vm250, %v2431, 0
        %v2481 = vsel %vm250, %v2432, 0
        %v2484 = vsel %vm250, %v2433, 0
        %v2487 = vsel %vm250, %v2434, 0
        %v2490 = vsel %vm250, %v2435, 0
        %v2493 = vsel %vm250, %v2436, 0
        %v2496 = vsel %vm250, %v2437, 0
        %v2499 = vsel %vm250, %v2438, 0
        %v2502 = vsel %vm250, %v2439, 0
        %v2505 = vsel %vm250, %v2440, 0
        %v2508 = vsel %vm250, %v2441, 0
        %v2511 = vsel %vm250, %v2442, 0
        %v2514 = vsel %vm250, %v2443, 0
        %v2517 = vsel %vm250, %v2444, 0
        %v2520 = vsel %vm250, %v2445, 0
        %v2523 = vsel %vm250, %v2446, 0
        %v2526 = vsel %vm250, %v2447, 0
        %v2529 = vsel %vm250, %v2448, 0
        %v2532 = vsel %vm250, %v2449, 0
        %v2535 = vsel %vm250, %v2450, 0
        %v2538 = vsel %vm250, %v2451, 0
        %v2541 = vsel %vm250, %v2452, 0
        %v2544 = vsel %vm250, %v2453, 0
        %v2547 = vsel %vm250, %v2454, 0
        %v2550 = vsel %vm250, %v2455, 0
        %v2553 = vsel %vm250, %v2456, 0
        %v2556 = vsel %vm347, %v2458, 0
        %2558 = vmatprep.subr.mxu0 0.0
        %2559 = vmatpush1.msra.mxu0 0.0
        %2560 = vmatprep.subr.mxu0 0.0
        %2561 = vmatpush1.msra.mxu0 0.0
        %2562 = vmatprep.subr.mxu0 0.0
        %2563 = vmatpush1.msra.mxu0 0.0
        %2564 = vmatprep.subr.mxu0 0.0
        %2565 = vmatpush1.msra.mxu0 0.0
        %2566 = vmatprep.subr.mxu0 0.0
        %2567 = vmatpush1.msra.mxu0 0.0
        %2568 = vmatprep.subr.mxu0 0.0
        %2569 = vmatpush1.msra.mxu0 0.0
        %2570 = vmatprep.subr.mxu0 0.0
        %2571 = vmatpush1.msra.mxu0 0.0
        %2572 = vmatprep.subr.mxu0 0.0
        %2573 = vmatpush1.msra.mxu0 0.0
        %2574 = vmatprep.subr.mxu0 0.0
        %2575 = vmatpush1.msra.mxu0 0.0
        %2576 = vmatprep.subr.mxu0 0.0
        %2577 = vmatpush1.msra.mxu0 0.0
        %2578 = vmatprep.subr.mxu0 0.0
        %2579 = vmatpush1.msra.mxu0 0.0
        %2580 = vmatprep.subr.mxu0 0.0
        %2581 = vmatpush1.msra.mxu0 0.0
        %2582 = vmatprep.subr.mxu0 0.0
        %2583 = vmatpush1.msra.mxu0 0.0
        %2584 = vmatprep.subr.mxu0 0.0
        %2585 = vmatpush1.msra.mxu0 0.0
        %2586 = vmatprep.subr.mxu0 0.0
        %2587 = vmatpush1.msra.mxu0 0.0
        %2588 = vmatprep.subr.mxu0 0.0
        %2589 = vmatpush1.msra.mxu0 %v2556
        %2590 = vmatprep.subr.mxu0 0.0
        %2591 = vmatpush2.msra.mxu0 0.0
        %2592 = vmatprep.subr.mxu0 0.0
        %2593 = vmatpush2.msra.mxu0 0.0
        %2594 = vmatprep.subr.mxu0 0.0
        %2595 = vmatpush2.msra.mxu0 0.0
        %2596 = vmatprep.subr.mxu0 0.0
        %2597 = vmatpush2.msra.mxu0 0.0
        %2598 = vmatprep.subr.mxu0 0.0
        %2599 = vmatpush2.msra.mxu0 0.0
        %2600 = vmatprep.subr.mxu0 0.0
        %2601 = vmatpush2.msra.mxu0 0.0
        %2602 = vmatprep.subr.mxu0 0.0
        %2603 = vmatpush2.msra.mxu0 0.0
        %2604 = vmatprep.subr.mxu0 0.0
        %2605 = vmatpush2.msra.mxu0 0.0
        %2606 = vmatprep.subr.mxu0 0.0
        %2607 = vmatpush2.msra.mxu0 0.0
        %2608 = vmatprep.subr.mxu0 0.0
        %2609 = vmatpush2.msra.mxu0 0.0
        %2610 = vmatprep.subr.mxu0 0.0
        %2611 = vmatpush2.msra.mxu0 0.0
        %2612 = vmatprep.subr.mxu0 0.0
        %2613 = vmatpush2.msra.mxu0 0.0
        %2614 = vmatprep.subr.mxu0 0.0
        %2615 = vmatpush2.msra.mxu0 0.0
        %2616 = vmatprep.subr.mxu0 0.0
        %2617 = vmatpush2.msra.mxu0 0.0
        %2618 = vmatprep.subr.mxu0 0.0
        %2619 = vmatpush2.msra.mxu0 0.0
        %2620 = vmatprep.subr.mxu0 0.0
        %2621 = vmatpush2.msra.mxu0 0.0
        %2622 = vmatprep.mubr.f32.mxu0 0.0
        %2623 = vmatmul.mubr.f32.gmra.mxu0 %v2460
        %v2624 = vpop.f32.mrf.mxu0
        %v2625 = vadd.f32 0.0, %v2624
        %v2626 = vpop.f32.mrf.mxu0
        %2627 = vmatprep.mubr.f32.mxu0 0.0
        %2628 = vmatmul.mubr.f32.gmra.mxu0 %v2463
        %v2629 = vpop.f32.mrf.mxu0
        %v2630 = vadd.f32 0.0, %v2629
        %v2631 = vpop.f32.mrf.mxu0
        %2632 = vmatprep.mubr.f32.mxu0 0.0
        %2633 = vmatmul.mubr.f32.gmra.mxu0 %v2466
        %v2634 = vpop.f32.mrf.mxu0
        %v2635 = vadd.f32 0.0, %v2634
        %v2636 = vpop.f32.mrf.mxu0
        %2637 = vmatprep.mubr.f32.mxu0 0.0
        %2638 = vmatmul.mubr.f32.gmra.mxu0 %v2469
        %v2639 = vpop.f32.mrf.mxu0
        %v2640 = vadd.f32 0.0, %v2639
        %v2641 = vpop.f32.mrf.mxu0
        %2642 = vmatprep.mubr.f32.mxu0 0.0
        %2643 = vmatmul.mubr.f32.gmra.mxu0 %v2472
        %v2644 = vpop.f32.mrf.mxu0
        %v2645 = vadd.f32 0.0, %v2644
        %v2646 = vpop.f32.mrf.mxu0
        %2647 = vmatprep.mubr.f32.mxu0 0.0
        %2648 = vmatmul.mubr.f32.gmra.mxu0 %v2475
        %v2649 = vpop.f32.mrf.mxu0
        %v2650 = vadd.f32 0.0, %v2649
        %v2651 = vpop.f32.mrf.mxu0
        %2652 = vmatprep.mubr.f32.mxu0 0.0
        %2653 = vmatmul.mubr.f32.gmra.mxu0 %v2478
        %v2654 = vpop.f32.mrf.mxu0
        %v2655 = vadd.f32 0.0, %v2654
        %v2656 = vpop.f32.mrf.mxu0
        %2657 = vmatprep.mubr.f32.mxu0 0.0
        %2658 = vmatmul.mubr.f32.gmra.mxu0 %v2481
        %v2659 = vpop.f32.mrf.mxu0
        %v2660 = vadd.f32 0.0, %v2659
        %v2661 = vpop.f32.mrf.mxu0
        %2662 = vmatprep.mubr.f32.mxu0 0.0
        %2663 = vmatmul.mubr.f32.gmra.mxu0 %v2484
        %v2664 = vpop.f32.mrf.mxu0
        %v2665 = vadd.f32 0.0, %v2664
        %v2666 = vpop.f32.mrf.mxu0
        %2667 = vmatprep.mubr.f32.mxu0 0.0
        %2668 = vmatmul.mubr.f32.gmra.mxu0 %v2487
        %v2669 = vpop.f32.mrf.mxu0
        %v2670 = vadd.f32 0.0, %v2669
        %v2671 = vpop.f32.mrf.mxu0
        %2672 = vmatprep.mubr.f32.mxu0 0.0
        %2673 = vmatmul.mubr.f32.gmra.mxu0 %v2490
        %v2674 = vpop.f32.mrf.mxu0
        %v2675 = vadd.f32 0.0, %v2674
        %v2676 = vpop.f32.mrf.mxu0
        %2677 = vmatprep.mubr.f32.mxu0 0.0
        %2678 = vmatmul.mubr.f32.gmra.mxu0 %v2493
        %v2679 = vpop.f32.mrf.mxu0
        %v2680 = vadd.f32 0.0, %v2679
        %v2681 = vpop.f32.mrf.mxu0
        %2682 = vmatprep.mubr.f32.mxu0 0.0
        %2683 = vmatmul.mubr.f32.gmra.mxu0 %v2496
        %v2684 = vpop.f32.mrf.mxu0
        %v2685 = vadd.f32 0.0, %v2684
        %v2686 = vpop.f32.mrf.mxu0
        %2687 = vmatprep.mubr.f32.mxu0 0.0
        %2688 = vmatmul.mubr.f32.gmra.mxu0 %v2499
        %v2689 = vpop.f32.mrf.mxu0
        %v2690 = vadd.f32 0.0, %v2689
        %v2691 = vpop.f32.mrf.mxu0
        %2692 = vmatprep.mubr.f32.mxu0 0.0
        %2693 = vmatmul.mubr.f32.gmra.mxu0 %v2502
        %v2694 = vpop.f32.mrf.mxu0
        %v2695 = vadd.f32 0.0, %v2694
        %v2696 = vpop.f32.mrf.mxu0
        %2697 = vmatprep.mubr.f32.mxu0 0.0
        %2698 = vmatmul.mubr.f32.gmra.mxu0 %v2505
        %v2699 = vpop.f32.mrf.mxu0
        %v2700 = vadd.f32 0.0, %v2699
        %v2701 = vpop.f32.mrf.mxu0
        %2702 = vmatprep.mubr.f32.mxu0 0.0
        %2703 = vmatmul.mubr.f32.gmra.mxu0 %v2508
        %v2704 = vpop.f32.mrf.mxu0
        %v2705 = vadd.f32 0.0, %v2704
        %v2706 = vpop.f32.mrf.mxu0
        %2707 = vmatprep.mubr.f32.mxu0 0.0
        %2708 = vmatmul.mubr.f32.gmra.mxu0 %v2511
        %v2709 = vpop.f32.mrf.mxu0
        %v2710 = vadd.f32 0.0, %v2709
        %v2711 = vpop.f32.mrf.mxu0
        %2712 = vmatprep.mubr.f32.mxu0 0.0
        %2713 = vmatmul.mubr.f32.gmra.mxu0 %v2514
        %v2714 = vpop.f32.mrf.mxu0
        %v2715 = vadd.f32 0.0, %v2714
        %v2716 = vpop.f32.mrf.mxu0
        %2717 = vmatprep.mubr.f32.mxu0 0.0
        %2718 = vmatmul.mubr.f32.gmra.mxu0 %v2517
        %v2719 = vpop.f32.mrf.mxu0
        %v2720 = vadd.f32 0.0, %v2719
        %v2721 = vpop.f32.mrf.mxu0
        %2722 = vmatprep.mubr.f32.mxu0 0.0
        %2723 = vmatmul.mubr.f32.gmra.mxu0 %v2520
        %v2724 = vpop.f32.mrf.mxu0
        %v2725 = vadd.f32 0.0, %v2724
        %v2726 = vpop.f32.mrf.mxu0
        %2727 = vmatprep.mubr.f32.mxu0 0.0
        %2728 = vmatmul.mubr.f32.gmra.mxu0 %v2523
        %v2729 = vpop.f32.mrf.mxu0
        %v2730 = vadd.f32 0.0, %v2729
        %v2731 = vpop.f32.mrf.mxu0
        %2732 = vmatprep.mubr.f32.mxu0 0.0
        %2733 = vmatmul.mubr.f32.gmra.mxu0 %v2526
        %v2734 = vpop.f32.mrf.mxu0
        %v2735 = vadd.f32 0.0, %v2734
        %v2736 = vpop.f32.mrf.mxu0
        %2737 = vmatprep.mubr.f32.mxu0 0.0
        %2738 = vmatmul.mubr.f32.gmra.mxu0 %v2529
        %v2739 = vpop.f32.mrf.mxu0
        %v2740 = vadd.f32 0.0, %v2739
        %v2741 = vpop.f32.mrf.mxu0
        %2742 = vmatprep.mubr.f32.mxu0 0.0
        %2743 = vmatmul.mubr.f32.gmra.mxu0 %v2532
        %v2744 = vpop.f32.mrf.mxu0
        %v2745 = vadd.f32 0.0, %v2744
        %v2746 = vpop.f32.mrf.mxu0
        %2747 = vmatprep.mubr.f32.mxu0 0.0
        %2748 = vmatmul.mubr.f32.gmra.mxu0 %v2535
        %v2749 = vpop.f32.mrf.mxu0
        %v2750 = vadd.f32 0.0, %v2749
        %v2751 = vpop.f32.mrf.mxu0
        %2752 = vmatprep.mubr.f32.mxu0 0.0
        %2753 = vmatmul.mubr.f32.gmra.mxu0 %v2538
        %v2754 = vpop.f32.mrf.mxu0
        %v2755 = vadd.f32 0.0, %v2754
        %v2756 = vpop.f32.mrf.mxu0
        %2757 = vmatprep.mubr.f32.mxu0 0.0
        %2758 = vmatmul.mubr.f32.gmra.mxu0 %v2541
        %v2759 = vpop.f32.mrf.mxu0
        %v2760 = vadd.f32 0.0, %v2759
        %v2761 = vpop.f32.mrf.mxu0
        %2762 = vmatprep.mubr.f32.mxu0 0.0
        %2763 = vmatmul.mubr.f32.gmra.mxu0 %v2544
        %v2764 = vpop.f32.mrf.mxu0
        %v2765 = vadd.f32 0.0, %v2764
        %v2766 = vpop.f32.mrf.mxu0
        %2767 = vmatprep.mubr.f32.mxu0 0.0
        %2768 = vmatmul.mubr.f32.gmra.mxu0 %v2547
        %v2769 = vpop.f32.mrf.mxu0
        %v2770 = vadd.f32 0.0, %v2769
        %v2771 = vpop.f32.mrf.mxu0
        %2772 = vmatprep.mubr.f32.mxu0 0.0
        %2773 = vmatmul.mubr.f32.gmra.mxu0 %v2550
        %v2774 = vpop.f32.mrf.mxu0
        %v2775 = vadd.f32 0.0, %v2774
        %v2776 = vpop.f32.mrf.mxu0
        %2777 = vmatprep.mubr.f32.mxu0 0.0
        %2778 = vmatmul.mubr.f32.gmra.mxu0 %v2553
        %v2779 = vpop.f32.mrf.mxu0
        %v2780 = vadd.f32 0.0, %v2779
        %v2781 = vpop.f32.mrf.mxu0
        %2782 = vdwg.mxu0
        %v2783 = vld [vmem:[#allocation2] sm:$0xff]
        %v2784 = vld [vmem:[#allocation2 + $0x8] sm:$0xff]
        %v2785 = vld [vmem:[#allocation2 + $0x10] sm:$0xff]
        %v2786 = vld [vmem:[#allocation2 + $0x18] sm:$0xff]
        %v2787 = vld [vmem:[#allocation2 + $0x20] sm:$0xff]
        %v2788 = vld [vmem:[#allocation2 + $0x28] sm:$0xff]
        %v2789 = vld [vmem:[#allocation2 + $0x30] sm:$0xff]
        %v2790 = vld [vmem:[#allocation2 + $0x38] sm:$0xff]
        %v2791 = vld [vmem:[#allocation2 + $0x40] sm:$0xff]
        %v2792 = vld [vmem:[#allocation2 + $0x48] sm:$0xff]
        %v2793 = vld [vmem:[#allocation2 + $0x50] sm:$0xff]
        %v2794 = vld [vmem:[#allocation2 + $0x58] sm:$0xff]
        %v2795 = vld [vmem:[#allocation2 + $0x60] sm:$0xff]
        %v2796 = vld [vmem:[#allocation2 + $0x68] sm:$0xff]
        %v2797 = vld [vmem:[#allocation2 + $0x70] sm:$0xff]
        %v2798 = vld [vmem:[#allocation2 + $0x78] sm:$0xff]
        %v2799 = vld [vmem:[#allocation2 + $0x80] sm:$0xff]
        %v2800 = vld [vmem:[#allocation2 + $0x88] sm:$0xff]
        %v2801 = vld [vmem:[#allocation2 + $0x90] sm:$0xff]
        %v2802 = vld [vmem:[#allocation2 + $0x98] sm:$0xff]
        %v2803 = vld [vmem:[#allocation2 + $0xa0] sm:$0xff]
        %v2804 = vld [vmem:[#allocation2 + $0xa8] sm:$0xff]
        %v2805 = vld [vmem:[#allocation2 + $0xb0] sm:$0xff]
        %v2806 = vld [vmem:[#allocation2 + $0xb8] sm:$0xff]
        %v2807 = vld [vmem:[#allocation2 + $0xc0] sm:$0xff]
        %v2808 = vld [vmem:[#allocation2 + $0xc8] sm:$0xff]
        %v2809 = vld [vmem:[#allocation2 + $0xd0] sm:$0xff]
        %v2810 = vld [vmem:[#allocation2 + $0xd8] sm:$0xff]
        %v2811 = vld [vmem:[#allocation2 + $0xe0] sm:$0xff]
        %v2812 = vld [vmem:[#allocation2 + $0xe8] sm:$0xff]
        %v2813 = vld [vmem:[#allocation2 + $0xf0] sm:$0xff]
        %v2814 = vld [vmem:[#allocation2 + $0xf8] sm:$0xff]
        %v2815 = vadd.f32 %v2783, %v2625
        %v2816 = vadd.f32 %v2784, %v2630
        %v2817 = vadd.f32 %v2785, %v2635
        %v2818 = vadd.f32 %v2786, %v2640
        %v2819 = vadd.f32 %v2787, %v2645
        %v2820 = vadd.f32 %v2788, %v2650
        %v2821 = vadd.f32 %v2789, %v2655
        %v2822 = vadd.f32 %v2790, %v2660
        %v2823 = vadd.f32 %v2791, %v2665
        %v2824 = vadd.f32 %v2792, %v2670
        %v2825 = vadd.f32 %v2793, %v2675
        %v2826 = vadd.f32 %v2794, %v2680
        %v2827 = vadd.f32 %v2795, %v2685
        %v2828 = vadd.f32 %v2796, %v2690
        %v2829 = vadd.f32 %v2797, %v2695
        %v2830 = vadd.f32 %v2798, %v2700
        %v2831 = vadd.f32 %v2799, %v2705
        %v2832 = vadd.f32 %v2800, %v2710
        %v2833 = vadd.f32 %v2801, %v2715
        %v2834 = vadd.f32 %v2802, %v2720
        %v2835 = vadd.f32 %v2803, %v2725
        %v2836 = vadd.f32 %v2804, %v2730
        %v2837 = vadd.f32 %v2805, %v2735
        %v2838 = vadd.f32 %v2806, %v2740
        %v2839 = vadd.f32 %v2807, %v2745
        %v2840 = vadd.f32 %v2808, %v2750
        %v2841 = vadd.f32 %v2809, %v2755
        %v2842 = vadd.f32 %v2810, %v2760
        %v2843 = vadd.f32 %v2811, %v2765
        %v2844 = vadd.f32 %v2812, %v2770
        %v2845 = vadd.f32 %v2813, %v2775
        %v2846 = vadd.f32 %v2814, %v2780
        %2847 = vst [vmem:[#allocation2] sm:$0xff] %v2815
        %2848 = vst [vmem:[#allocation2 + $0x8] sm:$0xff] %v2816
        %2849 = vst [vmem:[#allocation2 + $0x10] sm:$0xff] %v2817
        %2850 = vst [vmem:[#allocation2 + $0x18] sm:$0xff] %v2818
        %2851 = vst [vmem:[#allocation2 + $0x20] sm:$0xff] %v2819
        %2852 = vst [vmem:[#allocation2 + $0x28] sm:$0xff] %v2820
        %2853 = vst [vmem:[#allocation2 + $0x30] sm:$0xff] %v2821
        %2854 = vst [vmem:[#allocation2 + $0x38] sm:$0xff] %v2822
        %2855 = vst [vmem:[#allocation2 + $0x40] sm:$0xff] %v2823
        %2856 = vst [vmem:[#allocation2 + $0x48] sm:$0xff] %v2824
        %2857 = vst [vmem:[#allocation2 + $0x50] sm:$0xff] %v2825
        %2858 = vst [vmem:[#allocation2 + $0x58] sm:$0xff] %v2826
        %2859 = vst [vmem:[#allocation2 + $0x60] sm:$0xff] %v2827
        %2860 = vst [vmem:[#allocation2 + $0x68] sm:$0xff] %v2828
        %2861 = vst [vmem:[#allocation2 + $0x70] sm:$0xff] %v2829
        %2862 = vst [vmem:[#allocation2 + $0x78] sm:$0xff] %v2830
        %2863 = vst [vmem:[#allocation2 + $0x80] sm:$0xff] %v2831
        %2864 = vst [vmem:[#allocation2 + $0x88] sm:$0xff] %v2832
        %2865 = vst [vmem:[#allocation2 + $0x90] sm:$0xff] %v2833
        %2866 = vst [vmem:[#allocation2 + $0x98] sm:$0xff] %v2834
        %2867 = vst [vmem:[#allocation2 + $0xa0] sm:$0xff] %v2835
        %2868 = vst [vmem:[#allocation2 + $0xa8] sm:$0xff] %v2836
        %2869 = vst [vmem:[#allocation2 + $0xb0] sm:$0xff] %v2837
        %2870 = vst [vmem:[#allocation2 + $0xb8] sm:$0xff] %v2838
        %2871 = vst [vmem:[#allocation2 + $0xc0] sm:$0xff] %v2839
        %2872 = vst [vmem:[#allocation2 + $0xc8] sm:$0xff] %v2840
        %2873 = vst [vmem:[#allocation2 + $0xd0] sm:$0xff] %v2841
        %2874 = vst [vmem:[#allocation2 + $0xd8] sm:$0xff] %v2842
        %2875 = vst [vmem:[#allocation2 + $0xe0] sm:$0xff] %v2843
        %2876 = vst [vmem:[#allocation2 + $0xe8] sm:$0xff] %v2844
        %2877 = vst [vmem:[#allocation2 + $0xf0] sm:$0xff] %v2845
        %2878 = vst [vmem:[#allocation2 + $0xf8] sm:$0xff] %v2846
        %s2879 = scalar_lea.vmem %s208, 48
        %v2880 = vld [vmem:[%s2879] sm:$0xff]
        %v2881 = vld [vmem:[%s2879 + $0x8] sm:$0xff]
        %v2882 = vld [vmem:[%s2879 + $0x18] sm:$0xff]
        %v2883 = vld [vmem:[%s2879 + $0x20] sm:$0xff]
        %v2884 = vld [vmem:[%s2879 + $0x30] sm:$0xff]
        %v2885 = vld [vmem:[%s2879 + $0x38] sm:$0xff]
        %v2886 = vld [vmem:[%s2879 + $0x48] sm:$0xff]
        %v2887 = vld [vmem:[%s2879 + $0x50] sm:$0xff]
        %v2888 = vld [vmem:[%s2879 + $0x60] sm:$0xff]
        %v2889 = vld [vmem:[%s2879 + $0x68] sm:$0xff]
        %v2890 = vld [vmem:[%s2879 + $0x78] sm:$0xff]
        %v2891 = vld [vmem:[%s2879 + $0x80] sm:$0xff]
        %v2892 = vld [vmem:[%s2879 + $0x90] sm:$0xff]
        %v2893 = vld [vmem:[%s2879 + $0x98] sm:$0xff]
        %v2894 = vld [vmem:[%s2879 + $0xa8] sm:$0xff]
        %v2895 = vld [vmem:[%s2879 + $0xb0] sm:$0xff]
        %v2896 = vld [vmem:[%s2879 + $0xc0] sm:$0xff]
        %v2897 = vld [vmem:[%s2879 + $0xc8] sm:$0xff]
        %v2898 = vld [vmem:[%s2879 + $0xd8] sm:$0xff]
        %v2899 = vld [vmem:[%s2879 + $0xe0] sm:$0xff]
        %v2900 = vld [vmem:[%s2879 + $0xf0] sm:$0xff]
        %v2901 = vld [vmem:[%s2879 + $0xf8] sm:$0xff]
        %v2902 = vld [vmem:[%s2879 + $0x108] sm:$0xff]
        %v2903 = vld [vmem:[%s2879 + $0x110] sm:$0xff]
        %v2904 = vld [vmem:[%s2879 + $0x120] sm:$0xff]
        %v2905 = vld [vmem:[%s2879 + $0x128] sm:$0xff]
        %v2906 = vld [vmem:[%s2879 + $0x138] sm:$0xff]
        %v2907 = vld [vmem:[%s2879 + $0x140] sm:$0xff]
        %v2908 = vld [vmem:[%s2879 + $0x150] sm:$0xff]
        %v2909 = vld [vmem:[%s2879 + $0x158] sm:$0xff]
        %v2910 = vld [vmem:[%s2879 + $0x168] sm:$0xff]
        %v2911 = vld [vmem:[%s2879 + $0x170] sm:$0xff]
        %s2912 = scalar_lea.vmem %s213, 24
        %v2913 = vld [vmem:[%s2912] sm:$0xf]
        %v2915 = vsel %vm250, %v2880, 0
        %v2918 = vsel %vm250, %v2881, 0
        %v2921 = vsel %vm250, %v2882, 0
        %v2924 = vsel %vm250, %v2883, 0
        %v2927 = vsel %vm250, %v2884, 0
        %v2930 = vsel %vm250, %v2885, 0
        %v2933 = vsel %vm250, %v2886, 0
        %v2936 = vsel %vm250, %v2887, 0
        %v2939 = vsel %vm250, %v2888, 0
        %v2942 = vsel %vm250, %v2889, 0
        %v2945 = vsel %vm250, %v2890, 0
        %v2948 = vsel %vm250, %v2891, 0
        %v2951 = vsel %vm250, %v2892, 0
        %v2954 = vsel %vm250, %v2893, 0
        %v2957 = vsel %vm250, %v2894, 0
        %v2960 = vsel %vm250, %v2895, 0
        %v2963 = vsel %vm250, %v2896, 0
        %v2966 = vsel %vm250, %v2897, 0
        %v2969 = vsel %vm250, %v2898, 0
        %v2972 = vsel %vm250, %v2899, 0
        %v2975 = vsel %vm250, %v2900, 0
        %v2978 = vsel %vm250, %v2901, 0
        %v2981 = vsel %vm250, %v2902, 0
        %v2984 = vsel %vm250, %v2903, 0
        %v2987 = vsel %vm250, %v2904, 0
        %v2990 = vsel %vm250, %v2905, 0
        %v2993 = vsel %vm250, %v2906, 0
        %v2996 = vsel %vm250, %v2907, 0
        %v2999 = vsel %vm250, %v2908, 0
        %v3002 = vsel %vm250, %v2909, 0
        %v3005 = vsel %vm250, %v2910, 0
        %v3008 = vsel %vm250, %v2911, 0
        %v3011 = vsel %vm347, %v2913, 0
        %3013 = vmatprep.subr.mxu0 0.0
        %3014 = vmatpush1.msra.mxu0 0.0
        %3015 = vmatprep.subr.mxu0 0.0
        %3016 = vmatpush1.msra.mxu0 0.0
        %3017 = vmatprep.subr.mxu0 0.0
        %3018 = vmatpush1.msra.mxu0 0.0
        %3019 = vmatprep.subr.mxu0 0.0
        %3020 = vmatpush1.msra.mxu0 0.0
        %3021 = vmatprep.subr.mxu0 0.0
        %3022 = vmatpush1.msra.mxu0 0.0
        %3023 = vmatprep.subr.mxu0 0.0
        %3024 = vmatpush1.msra.mxu0 0.0
        %3025 = vmatprep.subr.mxu0 0.0
        %3026 = vmatpush1.msra.mxu0 0.0
        %3027 = vmatprep.subr.mxu0 0.0
        %3028 = vmatpush1.msra.mxu0 0.0
        %3029 = vmatprep.subr.mxu0 0.0
        %3030 = vmatpush1.msra.mxu0 0.0
        %3031 = vmatprep.subr.mxu0 0.0
        %3032 = vmatpush1.msra.mxu0 0.0
        %3033 = vmatprep.subr.mxu0 0.0
        %3034 = vmatpush1.msra.mxu0 0.0
        %3035 = vmatprep.subr.mxu0 0.0
        %3036 = vmatpush1.msra.mxu0 0.0
        %3037 = vmatprep.subr.mxu0 0.0
        %3038 = vmatpush1.msra.mxu0 0.0
        %3039 = vmatprep.subr.mxu0 0.0
        %3040 = vmatpush1.msra.mxu0 0.0
        %3041 = vmatprep.subr.mxu0 0.0
        %3042 = vmatpush1.msra.mxu0 0.0
        %3043 = vmatprep.subr.mxu0 0.0
        %3044 = vmatpush1.msra.mxu0 %v3011
        %3045 = vmatprep.subr.mxu0 0.0
        %3046 = vmatpush2.msra.mxu0 0.0
        %3047 = vmatprep.subr.mxu0 0.0
        %3048 = vmatpush2.msra.mxu0 0.0
        %3049 = vmatprep.subr.mxu0 0.0
        %3050 = vmatpush2.msra.mxu0 0.0
        %3051 = vmatprep.subr.mxu0 0.0
        %3052 = vmatpush2.msra.mxu0 0.0
        %3053 = vmatprep.subr.mxu0 0.0
        %3054 = vmatpush2.msra.mxu0 0.0
        %3055 = vmatprep.subr.mxu0 0.0
        %3056 = vmatpush2.msra.mxu0 0.0
        %3057 = vmatprep.subr.mxu0 0.0
        %3058 = vmatpush2.msra.mxu0 0.0
        %3059 = vmatprep.subr.mxu0 0.0
        %3060 = vmatpush2.msra.mxu0 0.0
        %3061 = vmatprep.subr.mxu0 0.0
        %3062 = vmatpush2.msra.mxu0 0.0
        %3063 = vmatprep.subr.mxu0 0.0
        %3064 = vmatpush2.msra.mxu0 0.0
        %3065 = vmatprep.subr.mxu0 0.0
        %3066 = vmatpush2.msra.mxu0 0.0
        %3067 = vmatprep.subr.mxu0 0.0
        %3068 = vmatpush2.msra.mxu0 0.0
        %3069 = vmatprep.subr.mxu0 0.0
        %3070 = vmatpush2.msra.mxu0 0.0
        %3071 = vmatprep.subr.mxu0 0.0
        %3072 = vmatpush2.msra.mxu0 0.0
        %3073 = vmatprep.subr.mxu0 0.0
        %3074 = vmatpush2.msra.mxu0 0.0
        %3075 = vmatprep.subr.mxu0 0.0
        %3076 = vmatpush2.msra.mxu0 0.0
        %3077 = vmatprep.mubr.f32.mxu0 0.0
        %3078 = vmatmul.mubr.f32.gmra.mxu0 %v2915
        %v3079 = vpop.f32.mrf.mxu0
        %v3080 = vadd.f32 0.0, %v3079
        %v3081 = vpop.f32.mrf.mxu0
        %3082 = vmatprep.mubr.f32.mxu0 0.0
        %3083 = vmatmul.mubr.f32.gmra.mxu0 %v2918
        %v3084 = vpop.f32.mrf.mxu0
        %v3085 = vadd.f32 0.0, %v3084
        %v3086 = vpop.f32.mrf.mxu0
        %3087 = vmatprep.mubr.f32.mxu0 0.0
        %3088 = vmatmul.mubr.f32.gmra.mxu0 %v2921
        %v3089 = vpop.f32.mrf.mxu0
        %v3090 = vadd.f32 0.0, %v3089
        %v3091 = vpop.f32.mrf.mxu0
        %3092 = vmatprep.mubr.f32.mxu0 0.0
        %3093 = vmatmul.mubr.f32.gmra.mxu0 %v2924
        %v3094 = vpop.f32.mrf.mxu0
        %v3095 = vadd.f32 0.0, %v3094
        %v3096 = vpop.f32.mrf.mxu0
        %3097 = vmatprep.mubr.f32.mxu0 0.0
        %3098 = vmatmul.mubr.f32.gmra.mxu0 %v2927
        %v3099 = vpop.f32.mrf.mxu0
        %v3100 = vadd.f32 0.0, %v3099
        %v3101 = vpop.f32.mrf.mxu0
        %3102 = vmatprep.mubr.f32.mxu0 0.0
        %3103 = vmatmul.mubr.f32.gmra.mxu0 %v2930
        %v3104 = vpop.f32.mrf.mxu0
        %v3105 = vadd.f32 0.0, %v3104
        %v3106 = vpop.f32.mrf.mxu0
        %3107 = vmatprep.mubr.f32.mxu0 0.0
        %3108 = vmatmul.mubr.f32.gmra.mxu0 %v2933
        %v3109 = vpop.f32.mrf.mxu0
        %v3110 = vadd.f32 0.0, %v3109
        %v3111 = vpop.f32.mrf.mxu0
        %3112 = vmatprep.mubr.f32.mxu0 0.0
        %3113 = vmatmul.mubr.f32.gmra.mxu0 %v2936
        %v3114 = vpop.f32.mrf.mxu0
        %v3115 = vadd.f32 0.0, %v3114
        %v3116 = vpop.f32.mrf.mxu0
        %3117 = vmatprep.mubr.f32.mxu0 0.0
        %3118 = vmatmul.mubr.f32.gmra.mxu0 %v2939
        %v3119 = vpop.f32.mrf.mxu0
        %v3120 = vadd.f32 0.0, %v3119
        %v3121 = vpop.f32.mrf.mxu0
        %3122 = vmatprep.mubr.f32.mxu0 0.0
        %3123 = vmatmul.mubr.f32.gmra.mxu0 %v2942
        %v3124 = vpop.f32.mrf.mxu0
        %v3125 = vadd.f32 0.0, %v3124
        %v3126 = vpop.f32.mrf.mxu0
        %3127 = vmatprep.mubr.f32.mxu0 0.0
        %3128 = vmatmul.mubr.f32.gmra.mxu0 %v2945
        %v3129 = vpop.f32.mrf.mxu0
        %v3130 = vadd.f32 0.0, %v3129
        %v3131 = vpop.f32.mrf.mxu0
        %3132 = vmatprep.mubr.f32.mxu0 0.0
        %3133 = vmatmul.mubr.f32.gmra.mxu0 %v2948
        %v3134 = vpop.f32.mrf.mxu0
        %v3135 = vadd.f32 0.0, %v3134
        %v3136 = vpop.f32.mrf.mxu0
        %3137 = vmatprep.mubr.f32.mxu0 0.0
        %3138 = vmatmul.mubr.f32.gmra.mxu0 %v2951
        %v3139 = vpop.f32.mrf.mxu0
        %v3140 = vadd.f32 0.0, %v3139
        %v3141 = vpop.f32.mrf.mxu0
        %3142 = vmatprep.mubr.f32.mxu0 0.0
        %3143 = vmatmul.mubr.f32.gmra.mxu0 %v2954
        %v3144 = vpop.f32.mrf.mxu0
        %v3145 = vadd.f32 0.0, %v3144
        %v3146 = vpop.f32.mrf.mxu0
        %3147 = vmatprep.mubr.f32.mxu0 0.0
        %3148 = vmatmul.mubr.f32.gmra.mxu0 %v2957
        %v3149 = vpop.f32.mrf.mxu0
        %v3150 = vadd.f32 0.0, %v3149
        %v3151 = vpop.f32.mrf.mxu0
        %3152 = vmatprep.mubr.f32.mxu0 0.0
        %3153 = vmatmul.mubr.f32.gmra.mxu0 %v2960
        %v3154 = vpop.f32.mrf.mxu0
        %v3155 = vadd.f32 0.0, %v3154
        %v3156 = vpop.f32.mrf.mxu0
        %3157 = vmatprep.mubr.f32.mxu0 0.0
        %3158 = vmatmul.mubr.f32.gmra.mxu0 %v2963
        %v3159 = vpop.f32.mrf.mxu0
        %v3160 = vadd.f32 0.0, %v3159
        %v3161 = vpop.f32.mrf.mxu0
        %3162 = vmatprep.mubr.f32.mxu0 0.0
        %3163 = vmatmul.mubr.f32.gmra.mxu0 %v2966
        %v3164 = vpop.f32.mrf.mxu0
        %v3165 = vadd.f32 0.0, %v3164
        %v3166 = vpop.f32.mrf.mxu0
        %3167 = vmatprep.mubr.f32.mxu0 0.0
        %3168 = vmatmul.mubr.f32.gmra.mxu0 %v2969
        %v3169 = vpop.f32.mrf.mxu0
        %v3170 = vadd.f32 0.0, %v3169
        %v3171 = vpop.f32.mrf.mxu0
        %3172 = vmatprep.mubr.f32.mxu0 0.0
        %3173 = vmatmul.mubr.f32.gmra.mxu0 %v2972
        %v3174 = vpop.f32.mrf.mxu0
        %v3175 = vadd.f32 0.0, %v3174
        %v3176 = vpop.f32.mrf.mxu0
        %3177 = vmatprep.mubr.f32.mxu0 0.0
        %3178 = vmatmul.mubr.f32.gmra.mxu0 %v2975
        %v3179 = vpop.f32.mrf.mxu0
        %v3180 = vadd.f32 0.0, %v3179
        %v3181 = vpop.f32.mrf.mxu0
        %3182 = vmatprep.mubr.f32.mxu0 0.0
        %3183 = vmatmul.mubr.f32.gmra.mxu0 %v2978
        %v3184 = vpop.f32.mrf.mxu0
        %v3185 = vadd.f32 0.0, %v3184
        %v3186 = vpop.f32.mrf.mxu0
        %3187 = vmatprep.mubr.f32.mxu0 0.0
        %3188 = vmatmul.mubr.f32.gmra.mxu0 %v2981
        %v3189 = vpop.f32.mrf.mxu0
        %v3190 = vadd.f32 0.0, %v3189
        %v3191 = vpop.f32.mrf.mxu0
        %3192 = vmatprep.mubr.f32.mxu0 0.0
        %3193 = vmatmul.mubr.f32.gmra.mxu0 %v2984
        %v3194 = vpop.f32.mrf.mxu0
        %v3195 = vadd.f32 0.0, %v3194
        %v3196 = vpop.f32.mrf.mxu0
        %3197 = vmatprep.mubr.f32.mxu0 0.0
        %3198 = vmatmul.mubr.f32.gmra.mxu0 %v2987
        %v3199 = vpop.f32.mrf.mxu0
        %v3200 = vadd.f32 0.0, %v3199
        %v3201 = vpop.f32.mrf.mxu0
        %3202 = vmatprep.mubr.f32.mxu0 0.0
        %3203 = vmatmul.mubr.f32.gmra.mxu0 %v2990
        %v3204 = vpop.f32.mrf.mxu0
        %v3205 = vadd.f32 0.0, %v3204
        %v3206 = vpop.f32.mrf.mxu0
        %3207 = vmatprep.mubr.f32.mxu0 0.0
        %3208 = vmatmul.mubr.f32.gmra.mxu0 %v2993
        %v3209 = vpop.f32.mrf.mxu0
        %v3210 = vadd.f32 0.0, %v3209
        %v3211 = vpop.f32.mrf.mxu0
        %3212 = vmatprep.mubr.f32.mxu0 0.0
        %3213 = vmatmul.mubr.f32.gmra.mxu0 %v2996
        %v3214 = vpop.f32.mrf.mxu0
        %v3215 = vadd.f32 0.0, %v3214
        %v3216 = vpop.f32.mrf.mxu0
        %3217 = vmatprep.mubr.f32.mxu0 0.0
        %3218 = vmatmul.mubr.f32.gmra.mxu0 %v2999
        %v3219 = vpop.f32.mrf.mxu0
        %v3220 = vadd.f32 0.0, %v3219
        %v3221 = vpop.f32.mrf.mxu0
        %3222 = vmatprep.mubr.f32.mxu0 0.0
        %3223 = vmatmul.mubr.f32.gmra.mxu0 %v3002
        %v3224 = vpop.f32.mrf.mxu0
        %v3225 = vadd.f32 0.0, %v3224
        %v3226 = vpop.f32.mrf.mxu0
        %3227 = vmatprep.mubr.f32.mxu0 0.0
        %3228 = vmatmul.mubr.f32.gmra.mxu0 %v3005
        %v3229 = vpop.f32.mrf.mxu0
        %v3230 = vadd.f32 0.0, %v3229
        %v3231 = vpop.f32.mrf.mxu0
        %3232 = vmatprep.mubr.f32.mxu0 0.0
        %3233 = vmatmul.mubr.f32.gmra.mxu0 %v3008
        %v3234 = vpop.f32.mrf.mxu0
        %v3235 = vadd.f32 0.0, %v3234
        %v3236 = vpop.f32.mrf.mxu0
        %3237 = vdwg.mxu0
        %v3238 = vld [vmem:[#allocation2] sm:$0xff]
        %v3239 = vld [vmem:[#allocation2 + $0x8] sm:$0xff]
        %v3240 = vld [vmem:[#allocation2 + $0x10] sm:$0xff]
        %v3241 = vld [vmem:[#allocation2 + $0x18] sm:$0xff]
        %v3242 = vld [vmem:[#allocation2 + $0x20] sm:$0xff]
        %v3243 = vld [vmem:[#allocation2 + $0x28] sm:$0xff]
        %v3244 = vld [vmem:[#allocation2 + $0x30] sm:$0xff]
        %v3245 = vld [vmem:[#allocation2 + $0x38] sm:$0xff]
        %v3246 = vld [vmem:[#allocation2 + $0x40] sm:$0xff]
        %v3247 = vld [vmem:[#allocation2 + $0x48] sm:$0xff]
        %v3248 = vld [vmem:[#allocation2 + $0x50] sm:$0xff]
        %v3249 = vld [vmem:[#allocation2 + $0x58] sm:$0xff]
        %v3250 = vld [vmem:[#allocation2 + $0x60] sm:$0xff]
        %v3251 = vld [vmem:[#allocation2 + $0x68] sm:$0xff]
        %v3252 = vld [vmem:[#allocation2 + $0x70] sm:$0xff]
        %v3253 = vld [vmem:[#allocation2 + $0x78] sm:$0xff]
        %v3254 = vld [vmem:[#allocation2 + $0x80] sm:$0xff]
        %v3255 = vld [vmem:[#allocation2 + $0x88] sm:$0xff]
        %v3256 = vld [vmem:[#allocation2 + $0x90] sm:$0xff]
        %v3257 = vld [vmem:[#allocation2 + $0x98] sm:$0xff]
        %v3258 = vld [vmem:[#allocation2 + $0xa0] sm:$0xff]
        %v3259 = vld [vmem:[#allocation2 + $0xa8] sm:$0xff]
        %v3260 = vld [vmem:[#allocation2 + $0xb0] sm:$0xff]
        %v3261 = vld [vmem:[#allocation2 + $0xb8] sm:$0xff]
        %v3262 = vld [vmem:[#allocation2 + $0xc0] sm:$0xff]
        %v3263 = vld [vmem:[#allocation2 + $0xc8] sm:$0xff]
        %v3264 = vld [vmem:[#allocation2 + $0xd0] sm:$0xff]
        %v3265 = vld [vmem:[#allocation2 + $0xd8] sm:$0xff]
        %v3266 = vld [vmem:[#allocation2 + $0xe0] sm:$0xff]
        %v3267 = vld [vmem:[#allocation2 + $0xe8] sm:$0xff]
        %v3268 = vld [vmem:[#allocation2 + $0xf0] sm:$0xff]
        %v3269 = vld [vmem:[#allocation2 + $0xf8] sm:$0xff]
        %v3270 = vadd.f32 %v3238, %v3080
        %v3271 = vadd.f32 %v3239, %v3085
        %v3272 = vadd.f32 %v3240, %v3090
        %v3273 = vadd.f32 %v3241, %v3095
        %v3274 = vadd.f32 %v3242, %v3100
        %v3275 = vadd.f32 %v3243, %v3105
        %v3276 = vadd.f32 %v3244, %v3110
        %v3277 = vadd.f32 %v3245, %v3115
        %v3278 = vadd.f32 %v3246, %v3120
        %v3279 = vadd.f32 %v3247, %v3125
        %v3280 = vadd.f32 %v3248, %v3130
        %v3281 = vadd.f32 %v3249, %v3135
        %v3282 = vadd.f32 %v3250, %v3140
        %v3283 = vadd.f32 %v3251, %v3145
        %v3284 = vadd.f32 %v3252, %v3150
        %v3285 = vadd.f32 %v3253, %v3155
        %v3286 = vadd.f32 %v3254, %v3160
        %v3287 = vadd.f32 %v3255, %v3165
        %v3288 = vadd.f32 %v3256, %v3170
        %v3289 = vadd.f32 %v3257, %v3175
        %v3290 = vadd.f32 %v3258, %v3180
        %v3291 = vadd.f32 %v3259, %v3185
        %v3292 = vadd.f32 %v3260, %v3190
        %v3293 = vadd.f32 %v3261, %v3195
        %v3294 = vadd.f32 %v3262, %v3200
        %v3295 = vadd.f32 %v3263, %v3205
        %v3296 = vadd.f32 %v3264, %v3210
        %v3297 = vadd.f32 %v3265, %v3215
        %v3298 = vadd.f32 %v3266, %v3220
        %v3299 = vadd.f32 %v3267, %v3225
        %v3300 = vadd.f32 %v3268, %v3230
        %v3301 = vadd.f32 %v3269, %v3235
        %3302 = vst [vmem:[#allocation2] sm:$0xff] %v3270
        %3303 = vst [vmem:[#allocation2 + $0x8] sm:$0xff] %v3271
        %3304 = vst [vmem:[#allocation2 + $0x10] sm:$0xff] %v3272
        %3305 = vst [vmem:[#allocation2 + $0x18] sm:$0xff] %v3273
        %3306 = vst [vmem:[#allocation2 + $0x20] sm:$0xff] %v3274
        %3307 = vst [vmem:[#allocation2 + $0x28] sm:$0xff] %v3275
        %3308 = vst [vmem:[#allocation2 + $0x30] sm:$0xff] %v3276
        %3309 = vst [vmem:[#allocation2 + $0x38] sm:$0xff] %v3277
        %3310 = vst [vmem:[#allocation2 + $0x40] sm:$0xff] %v3278
        %3311 = vst [vmem:[#allocation2 + $0x48] sm:$0xff] %v3279
        %3312 = vst [vmem:[#allocation2 + $0x50] sm:$0xff] %v3280
        %3313 = vst [vmem:[#allocation2 + $0x58] sm:$0xff] %v3281
        %3314 = vst [vmem:[#allocation2 + $0x60] sm:$0xff] %v3282
        %3315 = vst [vmem:[#allocation2 + $0x68] sm:$0xff] %v3283
        %3316 = vst [vmem:[#allocation2 + $0x70] sm:$0xff] %v3284
        %3317 = vst [vmem:[#allocation2 + $0x78] sm:$0xff] %v3285
        %3318 = vst [vmem:[#allocation2 + $0x80] sm:$0xff] %v3286
        %3319 = vst [vmem:[#allocation2 + $0x88] sm:$0xff] %v3287
        %3320 = vst [vmem:[#allocation2 + $0x90] sm:$0xff] %v3288
        %3321 = vst [vmem:[#allocation2 + $0x98] sm:$0xff] %v3289
        %3322 = vst [vmem:[#allocation2 + $0xa0] sm:$0xff] %v3290
        %3323 = vst [vmem:[#allocation2 + $0xa8] sm:$0xff] %v3291
        %3324 = vst [vmem:[#allocation2 + $0xb0] sm:$0xff] %v3292
        %3325 = vst [vmem:[#allocation2 + $0xb8] sm:$0xff] %v3293
        %3326 = vst [vmem:[#allocation2 + $0xc0] sm:$0xff] %v3294
        %3327 = vst [vmem:[#allocation2 + $0xc8] sm:$0xff] %v3295
        %3328 = vst [vmem:[#allocation2 + $0xd0] sm:$0xff] %v3296
        %3329 = vst [vmem:[#allocation2 + $0xd8] sm:$0xff] %v3297
        %3330 = vst [vmem:[#allocation2 + $0xe0] sm:$0xff] %v3298
        %3331 = vst [vmem:[#allocation2 + $0xe8] sm:$0xff] %v3299
        %3332 = vst [vmem:[#allocation2 + $0xf0] sm:$0xff] %v3300
        %3333 = vst [vmem:[#allocation2 + $0xf8] sm:$0xff] %v3301
        %v3334 = vld [vmem:[%s2879 + $0x1] sm:$0xff]
        %v3335 = vld [vmem:[%s2879 + $0x9] sm:$0xff]
        %v3336 = vld [vmem:[%s2879 + $0x19] sm:$0xff]
        %v3337 = vld [vmem:[%s2879 + $0x21] sm:$0xff]
        %v3338 = vld [vmem:[%s2879 + $0x31] sm:$0xff]
        %v3339 = vld [vmem:[%s2879 + $0x39] sm:$0xff]
        %v3340 = vld [vmem:[%s2879 + $0x49] sm:$0xff]
        %v3341 = vld [vmem:[%s2879 + $0x51] sm:$0xff]
        %v3342 = vld [vmem:[%s2879 + $0x61] sm:$0xff]
        %v3343 = vld [vmem:[%s2879 + $0x69] sm:$0xff]
        %v3344 = vld [vmem:[%s2879 + $0x79] sm:$0xff]
        %v3345 = vld [vmem:[%s2879 + $0x81] sm:$0xff]
        %v3346 = vld [vmem:[%s2879 + $0x91] sm:$0xff]
        %v3347 = vld [vmem:[%s2879 + $0x99] sm:$0xff]
        %v3348 = vld [vmem:[%s2879 + $0xa9] sm:$0xff]
        %v3349 = vld [vmem:[%s2879 + $0xb1] sm:$0xff]
        %v3350 = vld [vmem:[%s2879 + $0xc1] sm:$0xff]
        %v3351 = vld [vmem:[%s2879 + $0xc9] sm:$0xff]
        %v3352 = vld [vmem:[%s2879 + $0xd9] sm:$0xff]
        %v3353 = vld [vmem:[%s2879 + $0xe1] sm:$0xff]
        %v3354 = vld [vmem:[%s2879 + $0xf1] sm:$0xff]
        %v3355 = vld [vmem:[%s2879 + $0xf9] sm:$0xff]
        %v3356 = vld [vmem:[%s2879 + $0x109] sm:$0xff]
        %v3357 = vld [vmem:[%s2879 + $0x111] sm:$0xff]
        %v3358 = vld [vmem:[%s2879 + $0x121] sm:$0xff]
        %v3359 = vld [vmem:[%s2879 + $0x129] sm:$0xff]
        %v3360 = vld [vmem:[%s2879 + $0x139] sm:$0xff]
        %v3361 = vld [vmem:[%s2879 + $0x141] sm:$0xff]
        %v3362 = vld [vmem:[%s2879 + $0x151] sm:$0xff]
        %v3363 = vld [vmem:[%s2879 + $0x159] sm:$0xff]
        %v3364 = vld [vmem:[%s2879 + $0x169] sm:$0xff]
        %v3365 = vld [vmem:[%s2879 + $0x171] sm:$0xff]
        %s3366 = scalar_lea.vmem %s213, 28
        %v3367 = vld [vmem:[%s3366] sm:$0xf]
        %v3369 = vsel %vm250, %v3334, 0
        %v3372 = vsel %vm250, %v3335, 0
        %v3375 = vsel %vm250, %v3336, 0
        %v3378 = vsel %vm250, %v3337, 0
        %v3381 = vsel %vm250, %v3338, 0
        %v3384 = vsel %vm250, %v3339, 0
        %v3387 = vsel %vm250, %v3340, 0
        %v3390 = vsel %vm250, %v3341, 0
        %v3393 = vsel %vm250, %v3342, 0
        %v3396 = vsel %vm250, %v3343, 0
        %v3399 = vsel %vm250, %v3344, 0
        %v3402 = vsel %vm250, %v3345, 0
        %v3405 = vsel %vm250, %v3346, 0
        %v3408 = vsel %vm250, %v3347, 0
        %v3411 = vsel %vm250, %v3348, 0
        %v3414 = vsel %vm250, %v3349, 0
        %v3417 = vsel %vm250, %v3350, 0
        %v3420 = vsel %vm250, %v3351, 0
        %v3423 = vsel %vm250, %v3352, 0
        %v3426 = vsel %vm250, %v3353, 0
        %v3429 = vsel %vm250, %v3354, 0
        %v3432 = vsel %vm250, %v3355, 0
        %v3435 = vsel %vm250, %v3356, 0
        %v3438 = vsel %vm250, %v3357, 0
        %v3441 = vsel %vm250, %v3358, 0
        %v3444 = vsel %vm250, %v3359, 0
        %v3447 = vsel %vm250, %v3360, 0
        %v3450 = vsel %vm250, %v3361, 0
        %v3453 = vsel %vm250, %v3362, 0
        %v3456 = vsel %vm250, %v3363, 0
        %v3459 = vsel %vm250, %v3364, 0
        %v3462 = vsel %vm250, %v3365, 0
        %v3465 = vsel %vm347, %v3367, 0
        %3467 = vmatprep.subr.mxu0 0.0
        %3468 = vmatpush1.msra.mxu0 0.0
        %3469 = vmatprep.subr.mxu0 0.0
        %3470 = vmatpush1.msra.mxu0 0.0
        %3471 = vmatprep.subr.mxu0 0.0
        %3472 = vmatpush1.msra.mxu0 0.0
        %3473 = vmatprep.subr.mxu0 0.0
        %3474 = vmatpush1.msra.mxu0 0.0
        %3475 = vmatprep.subr.mxu0 0.0
        %3476 = vmatpush1.msra.mxu0 0.0
        %3477 = vmatprep.subr.mxu0 0.0
        %3478 = vmatpush1.msra.mxu0 0.0
        %3479 = vmatprep.subr.mxu0 0.0
        %3480 = vmatpush1.msra.mxu0 0.0
        %3481 = vmatprep.subr.mxu0 0.0
        %3482 = vmatpush1.msra.mxu0 0.0
        %3483 = vmatprep.subr.mxu0 0.0
        %3484 = vmatpush1.msra.mxu0 0.0
        %3485 = vmatprep.subr.mxu0 0.0
        %3486 = vmatpush1.msra.mxu0 0.0
        %3487 = vmatprep.subr.mxu0 0.0
        %3488 = vmatpush1.msra.mxu0 0.0
        %3489 = vmatprep.subr.mxu0 0.0
        %3490 = vmatpush1.msra.mxu0 0.0
        %3491 = vmatprep.subr.mxu0 0.0
        %3492 = vmatpush1.msra.mxu0 0.0
        %3493 = vmatprep.subr.mxu0 0.0
        %3494 = vmatpush1.msra.mxu0 0.0
        %3495 = vmatprep.subr.mxu0 0.0
        %3496 = vmatpush1.msra.mxu0 0.0
        %3497 = vmatprep.subr.mxu0 0.0
        %3498 = vmatpush1.msra.mxu0 %v3465
        %3499 = vmatprep.subr.mxu0 0.0
        %3500 = vmatpush2.msra.mxu0 0.0
        %3501 = vmatprep.subr.mxu0 0.0
        %3502 = vmatpush2.msra.mxu0 0.0
        %3503 = vmatprep.subr.mxu0 0.0
        %3504 = vmatpush2.msra.mxu0 0.0
        %3505 = vmatprep.subr.mxu0 0.0
        %3506 = vmatpush2.msra.mxu0 0.0
        %3507 = vmatprep.subr.mxu0 0.0
        %3508 = vmatpush2.msra.mxu0 0.0
        %3509 = vmatprep.subr.mxu0 0.0
        %3510 = vmatpush2.msra.mxu0 0.0
        %3511 = vmatprep.subr.mxu0 0.0
        %3512 = vmatpush2.msra.mxu0 0.0
        %3513 = vmatprep.subr.mxu0 0.0
        %3514 = vmatpush2.msra.mxu0 0.0
        %3515 = vmatprep.subr.mxu0 0.0
        %3516 = vmatpush2.msra.mxu0 0.0
        %3517 = vmatprep.subr.mxu0 0.0
        %3518 = vmatpush2.msra.mxu0 0.0
        %3519 = vmatprep.subr.mxu0 0.0
        %3520 = vmatpush2.msra.mxu0 0.0
        %3521 = vmatprep.subr.mxu0 0.0
        %3522 = vmatpush2.msra.mxu0 0.0
        %3523 = vmatprep.subr.mxu0 0.0
        %3524 = vmatpush2.msra.mxu0 0.0
        %3525 = vmatprep.subr.mxu0 0.0
        %3526 = vmatpush2.msra.mxu0 0.0
        %3527 = vmatprep.subr.mxu0 0.0
        %3528 = vmatpush2.msra.mxu0 0.0
        %3529 = vmatprep.subr.mxu0 0.0
        %3530 = vmatpush2.msra.mxu0 0.0
        %3531 = vmatprep.mubr.f32.mxu0 0.0
        %3532 = vmatmul.mubr.f32.gmra.mxu0 %v3369
        %v3533 = vpop.f32.mrf.mxu0
        %v3534 = vadd.f32 0.0, %v3533
        %v3535 = vpop.f32.mrf.mxu0
        %3536 = vmatprep.mubr.f32.mxu0 0.0
        %3537 = vmatmul.mubr.f32.gmra.mxu0 %v3372
        %v3538 = vpop.f32.mrf.mxu0
        %v3539 = vadd.f32 0.0, %v3538
        %v3540 = vpop.f32.mrf.mxu0
        %3541 = vmatprep.mubr.f32.mxu0 0.0
        %3542 = vmatmul.mubr.f32.gmra.mxu0 %v3375
        %v3543 = vpop.f32.mrf.mxu0
        %v3544 = vadd.f32 0.0, %v3543
        %v3545 = vpop.f32.mrf.mxu0
        %3546 = vmatprep.mubr.f32.mxu0 0.0
        %3547 = vmatmul.mubr.f32.gmra.mxu0 %v3378
        %v3548 = vpop.f32.mrf.mxu0
        %v3549 = vadd.f32 0.0, %v3548
        %v3550 = vpop.f32.mrf.mxu0
        %3551 = vmatprep.mubr.f32.mxu0 0.0
        %3552 = vmatmul.mubr.f32.gmra.mxu0 %v3381
        %v3553 = vpop.f32.mrf.mxu0
        %v3554 = vadd.f32 0.0, %v3553
        %v3555 = vpop.f32.mrf.mxu0
        %3556 = vmatprep.mubr.f32.mxu0 0.0
        %3557 = vmatmul.mubr.f32.gmra.mxu0 %v3384
        %v3558 = vpop.f32.mrf.mxu0
        %v3559 = vadd.f32 0.0, %v3558
        %v3560 = vpop.f32.mrf.mxu0
        %3561 = vmatprep.mubr.f32.mxu0 0.0
        %3562 = vmatmul.mubr.f32.gmra.mxu0 %v3387
        %v3563 = vpop.f32.mrf.mxu0
        %v3564 = vadd.f32 0.0, %v3563
        %v3565 = vpop.f32.mrf.mxu0
        %3566 = vmatprep.mubr.f32.mxu0 0.0
        %3567 = vmatmul.mubr.f32.gmra.mxu0 %v3390
        %v3568 = vpop.f32.mrf.mxu0
        %v3569 = vadd.f32 0.0, %v3568
        %v3570 = vpop.f32.mrf.mxu0
        %3571 = vmatprep.mubr.f32.mxu0 0.0
        %3572 = vmatmul.mubr.f32.gmra.mxu0 %v3393
        %v3573 = vpop.f32.mrf.mxu0
        %v3574 = vadd.f32 0.0, %v3573
        %v3575 = vpop.f32.mrf.mxu0
        %3576 = vmatprep.mubr.f32.mxu0 0.0
        %3577 = vmatmul.mubr.f32.gmra.mxu0 %v3396
        %v3578 = vpop.f32.mrf.mxu0
        %v3579 = vadd.f32 0.0, %v3578
        %v3580 = vpop.f32.mrf.mxu0
        %3581 = vmatprep.mubr.f32.mxu0 0.0
        %3582 = vmatmul.mubr.f32.gmra.mxu0 %v3399
        %v3583 = vpop.f32.mrf.mxu0
        %v3584 = vadd.f32 0.0, %v3583
        %v3585 = vpop.f32.mrf.mxu0
        %3586 = vmatprep.mubr.f32.mxu0 0.0
        %3587 = vmatmul.mubr.f32.gmra.mxu0 %v3402
        %v3588 = vpop.f32.mrf.mxu0
        %v3589 = vadd.f32 0.0, %v3588
        %v3590 = vpop.f32.mrf.mxu0
        %3591 = vmatprep.mubr.f32.mxu0 0.0
        %3592 = vmatmul.mubr.f32.gmra.mxu0 %v3405
        %v3593 = vpop.f32.mrf.mxu0
        %v3594 = vadd.f32 0.0, %v3593
        %v3595 = vpop.f32.mrf.mxu0
        %3596 = vmatprep.mubr.f32.mxu0 0.0
        %3597 = vmatmul.mubr.f32.gmra.mxu0 %v3408
        %v3598 = vpop.f32.mrf.mxu0
        %v3599 = vadd.f32 0.0, %v3598
        %v3600 = vpop.f32.mrf.mxu0
        %3601 = vmatprep.mubr.f32.mxu0 0.0
        %3602 = vmatmul.mubr.f32.gmra.mxu0 %v3411
        %v3603 = vpop.f32.mrf.mxu0
        %v3604 = vadd.f32 0.0, %v3603
        %v3605 = vpop.f32.mrf.mxu0
        %3606 = vmatprep.mubr.f32.mxu0 0.0
        %3607 = vmatmul.mubr.f32.gmra.mxu0 %v3414
        %v3608 = vpop.f32.mrf.mxu0
        %v3609 = vadd.f32 0.0, %v3608
        %v3610 = vpop.f32.mrf.mxu0
        %3611 = vmatprep.mubr.f32.mxu0 0.0
        %3612 = vmatmul.mubr.f32.gmra.mxu0 %v3417
        %v3613 = vpop.f32.mrf.mxu0
        %v3614 = vadd.f32 0.0, %v3613
        %v3615 = vpop.f32.mrf.mxu0
        %3616 = vmatprep.mubr.f32.mxu0 0.0
        %3617 = vmatmul.mubr.f32.gmra.mxu0 %v3420
        %v3618 = vpop.f32.mrf.mxu0
        %v3619 = vadd.f32 0.0, %v3618
        %v3620 = vpop.f32.mrf.mxu0
        %3621 = vmatprep.mubr.f32.mxu0 0.0
        %3622 = vmatmul.mubr.f32.gmra.mxu0 %v3423
        %v3623 = vpop.f32.mrf.mxu0
        %v3624 = vadd.f32 0.0, %v3623
        %v3625 = vpop.f32.mrf.mxu0
        %3626 = vmatprep.mubr.f32.mxu0 0.0
        %3627 = vmatmul.mubr.f32.gmra.mxu0 %v3426
        %v3628 = vpop.f32.mrf.mxu0
        %v3629 = vadd.f32 0.0, %v3628
        %v3630 = vpop.f32.mrf.mxu0
        %3631 = vmatprep.mubr.f32.mxu0 0.0
        %3632 = vmatmul.mubr.f32.gmra.mxu0 %v3429
        %v3633 = vpop.f32.mrf.mxu0
        %v3634 = vadd.f32 0.0, %v3633
        %v3635 = vpop.f32.mrf.mxu0
        %3636 = vmatprep.mubr.f32.mxu0 0.0
        %3637 = vmatmul.mubr.f32.gmra.mxu0 %v3432
        %v3638 = vpop.f32.mrf.mxu0
        %v3639 = vadd.f32 0.0, %v3638
        %v3640 = vpop.f32.mrf.mxu0
        %3641 = vmatprep.mubr.f32.mxu0 0.0
        %3642 = vmatmul.mubr.f32.gmra.mxu0 %v3435
        %v3643 = vpop.f32.mrf.mxu0
        %v3644 = vadd.f32 0.0, %v3643
        %v3645 = vpop.f32.mrf.mxu0
        %3646 = vmatprep.mubr.f32.mxu0 0.0
        %3647 = vmatmul.mubr.f32.gmra.mxu0 %v3438
        %v3648 = vpop.f32.mrf.mxu0
        %v3649 = vadd.f32 0.0, %v3648
        %v3650 = vpop.f32.mrf.mxu0
        %3651 = vmatprep.mubr.f32.mxu0 0.0
        %3652 = vmatmul.mubr.f32.gmra.mxu0 %v3441
        %v3653 = vpop.f32.mrf.mxu0
        %v3654 = vadd.f32 0.0, %v3653
        %v3655 = vpop.f32.mrf.mxu0
        %3656 = vmatprep.mubr.f32.mxu0 0.0
        %3657 = vmatmul.mubr.f32.gmra.mxu0 %v3444
        %v3658 = vpop.f32.mrf.mxu0
        %v3659 = vadd.f32 0.0, %v3658
        %v3660 = vpop.f32.mrf.mxu0
        %3661 = vmatprep.mubr.f32.mxu0 0.0
        %3662 = vmatmul.mubr.f32.gmra.mxu0 %v3447
        %v3663 = vpop.f32.mrf.mxu0
        %v3664 = vadd.f32 0.0, %v3663
        %v3665 = vpop.f32.mrf.mxu0
        %3666 = vmatprep.mubr.f32.mxu0 0.0
        %3667 = vmatmul.mubr.f32.gmra.mxu0 %v3450
        %v3668 = vpop.f32.mrf.mxu0
        %v3669 = vadd.f32 0.0, %v3668
        %v3670 = vpop.f32.mrf.mxu0
        %3671 = vmatprep.mubr.f32.mxu0 0.0
        %3672 = vmatmul.mubr.f32.gmra.mxu0 %v3453
        %v3673 = vpop.f32.mrf.mxu0
        %v3674 = vadd.f32 0.0, %v3673
        %v3675 = vpop.f32.mrf.mxu0
        %3676 = vmatprep.mubr.f32.mxu0 0.0
        %3677 = vmatmul.mubr.f32.gmra.mxu0 %v3456
        %v3678 = vpop.f32.mrf.mxu0
        %v3679 = vadd.f32 0.0, %v3678
        %v3680 = vpop.f32.mrf.mxu0
        %3681 = vmatprep.mubr.f32.mxu0 0.0
        %3682 = vmatmul.mubr.f32.gmra.mxu0 %v3459
        %v3683 = vpop.f32.mrf.mxu0
        %v3684 = vadd.f32 0.0, %v3683
        %v3685 = vpop.f32.mrf.mxu0
        %3686 = vmatprep.mubr.f32.mxu0 0.0
        %3687 = vmatmul.mubr.f32.gmra.mxu0 %v3462
        %v3688 = vpop.f32.mrf.mxu0
        %v3689 = vadd.f32 0.0, %v3688
        %v3690 = vpop.f32.mrf.mxu0
        %3691 = vdwg.mxu0
        %v3692 = vld [vmem:[#allocation2] sm:$0xff]
        %v3693 = vld [vmem:[#allocation2 + $0x8] sm:$0xff]
        %v3694 = vld [vmem:[#allocation2 + $0x10] sm:$0xff]
        %v3695 = vld [vmem:[#allocation2 + $0x18] sm:$0xff]
        %v3696 = vld [vmem:[#allocation2 + $0x20] sm:$0xff]
        %v3697 = vld [vmem:[#allocation2 + $0x28] sm:$0xff]
        %v3698 = vld [vmem:[#allocation2 + $0x30] sm:$0xff]
        %v3699 = vld [vmem:[#allocation2 + $0x38] sm:$0xff]
        %v3700 = vld [vmem:[#allocation2 + $0x40] sm:$0xff]
        %v3701 = vld [vmem:[#allocation2 + $0x48] sm:$0xff]
        %v3702 = vld [vmem:[#allocation2 + $0x50] sm:$0xff]
        %v3703 = vld [vmem:[#allocation2 + $0x58] sm:$0xff]
        %v3704 = vld [vmem:[#allocation2 + $0x60] sm:$0xff]
        %v3705 = vld [vmem:[#allocation2 + $0x68] sm:$0xff]
        %v3706 = vld [vmem:[#allocation2 + $0x70] sm:$0xff]
        %v3707 = vld [vmem:[#allocation2 + $0x78] sm:$0xff]
        %v3708 = vld [vmem:[#allocation2 + $0x80] sm:$0xff]
        %v3709 = vld [vmem:[#allocation2 + $0x88] sm:$0xff]
        %v3710 = vld [vmem:[#allocation2 + $0x90] sm:$0xff]
        %v3711 = vld [vmem:[#allocation2 + $0x98] sm:$0xff]
        %v3712 = vld [vmem:[#allocation2 + $0xa0] sm:$0xff]
        %v3713 = vld [vmem:[#allocation2 + $0xa8] sm:$0xff]
        %v3714 = vld [vmem:[#allocation2 + $0xb0] sm:$0xff]
        %v3715 = vld [vmem:[#allocation2 + $0xb8] sm:$0xff]
        %v3716 = vld [vmem:[#allocation2 + $0xc0] sm:$0xff]
        %v3717 = vld [vmem:[#allocation2 + $0xc8] sm:$0xff]
        %v3718 = vld [vmem:[#allocation2 + $0xd0] sm:$0xff]
        %v3719 = vld [vmem:[#allocation2 + $0xd8] sm:$0xff]
        %v3720 = vld [vmem:[#allocation2 + $0xe0] sm:$0xff]
        %v3721 = vld [vmem:[#allocation2 + $0xe8] sm:$0xff]
        %v3722 = vld [vmem:[#allocation2 + $0xf0] sm:$0xff]
        %v3723 = vld [vmem:[#allocation2 + $0xf8] sm:$0xff]
        %v3724 = vadd.f32 %v3692, %v3534
        %v3725 = vadd.f32 %v3693, %v3539
        %v3726 = vadd.f32 %v3694, %v3544
        %v3727 = vadd.f32 %v3695, %v3549
        %v3728 = vadd.f32 %v3696, %v3554
        %v3729 = vadd.f32 %v3697, %v3559
        %v3730 = vadd.f32 %v3698, %v3564
        %v3731 = vadd.f32 %v3699, %v3569
        %v3732 = vadd.f32 %v3700, %v3574
        %v3733 = vadd.f32 %v3701, %v3579
        %v3734 = vadd.f32 %v3702, %v3584
        %v3735 = vadd.f32 %v3703, %v3589
        %v3736 = vadd.f32 %v3704, %v3594
        %v3737 = vadd.f32 %v3705, %v3599
        %v3738 = vadd.f32 %v3706, %v3604
        %v3739 = vadd.f32 %v3707, %v3609
        %v3740 = vadd.f32 %v3708, %v3614
        %v3741 = vadd.f32 %v3709, %v3619
        %v3742 = vadd.f32 %v3710, %v3624
        %v3743 = vadd.f32 %v3711, %v3629
        %v3744 = vadd.f32 %v3712, %v3634
        %v3745 = vadd.f32 %v3713, %v3639
        %v3746 = vadd.f32 %v3714, %v3644
        %v3747 = vadd.f32 %v3715, %v3649
        %v3748 = vadd.f32 %v3716, %v3654
        %v3749 = vadd.f32 %v3717, %v3659
        %v3750 = vadd.f32 %v3718, %v3664
        %v3751 = vadd.f32 %v3719, %v3669
        %v3752 = vadd.f32 %v3720, %v3674
        %v3753 = vadd.f32 %v3721, %v3679
        %v3754 = vadd.f32 %v3722, %v3684
        %v3755 = vadd.f32 %v3723, %v3689
        %3756 = vst [vmem:[#allocation2] sm:$0xff] %v3724
        %3757 = vst [vmem:[#allocation2 + $0x8] sm:$0xff] %v3725
        %3758 = vst [vmem:[#allocation2 + $0x10] sm:$0xff] %v3726
        %3759 = vst [vmem:[#allocation2 + $0x18] sm:$0xff] %v3727
        %3760 = vst [vmem:[#allocation2 + $0x20] sm:$0xff] %v3728
        %3761 = vst [vmem:[#allocation2 + $0x28] sm:$0xff] %v3729
        %3762 = vst [vmem:[#allocation2 + $0x30] sm:$0xff] %v3730
        %3763 = vst [vmem:[#allocation2 + $0x38] sm:$0xff] %v3731
        %3764 = vst [vmem:[#allocation2 + $0x40] sm:$0xff] %v3732
        %3765 = vst [vmem:[#allocation2 + $0x48] sm:$0xff] %v3733
        %3766 = vst [vmem:[#allocation2 + $0x50] sm:$0xff] %v3734
        %3767 = vst [vmem:[#allocation2 + $0x58] sm:$0xff] %v3735
        %3768 = vst [vmem:[#allocation2 + $0x60] sm:$0xff] %v3736
        %3769 = vst [vmem:[#allocation2 + $0x68] sm:$0xff] %v3737
        %3770 = vst [vmem:[#allocation2 + $0x70] sm:$0xff] %v3738
        %3771 = vst [vmem:[#allocation2 + $0x78] sm:$0xff] %v3739
        %3772 = vst [vmem:[#allocation2 + $0x80] sm:$0xff] %v3740
        %3773 = vst [vmem:[#allocation2 + $0x88] sm:$0xff] %v3741
        %3774 = vst [vmem:[#allocation2 + $0x90] sm:$0xff] %v3742
        %3775 = vst [vmem:[#allocation2 + $0x98] sm:$0xff] %v3743
        %3776 = vst [vmem:[#allocation2 + $0xa0] sm:$0xff] %v3744
        %3777 = vst [vmem:[#allocation2 + $0xa8] sm:$0xff] %v3745
        %3778 = vst [vmem:[#allocation2 + $0xb0] sm:$0xff] %v3746
        %3779 = vst [vmem:[#allocation2 + $0xb8] sm:$0xff] %v3747
        %3780 = vst [vmem:[#allocation2 + $0xc0] sm:$0xff] %v3748
        %3781 = vst [vmem:[#allocation2 + $0xc8] sm:$0xff] %v3749
        %3782 = vst [vmem:[#allocation2 + $0xd0] sm:$0xff] %v3750
        %3783 = vst [vmem:[#allocation2 + $0xd8] sm:$0xff] %v3751
        %3784 = vst [vmem:[#allocation2 + $0xe0] sm:$0xff] %v3752
        %3785 = vst [vmem:[#allocation2 + $0xe8] sm:$0xff] %v3753
        %3786 = vst [vmem:[#allocation2 + $0xf0] sm:$0xff] %v3754
        %3787 = vst [vmem:[#allocation2 + $0xf8] sm:$0xff] %v3755
        %v3788 = vld [vmem:[%s2879 + $0x2] sm:$0xff]
        %v3789 = vld [vmem:[%s2879 + $0xa] sm:$0xff]
        %v3790 = vld [vmem:[%s2879 + $0x1a] sm:$0xff]
        %v3791 = vld [vmem:[%s2879 + $0x22] sm:$0xff]
        %v3792 = vld [vmem:[%s2879 + $0x32] sm:$0xff]
        %v3793 = vld [vmem:[%s2879 + $0x3a] sm:$0xff]
        %v3794 = vld [vmem:[%s2879 + $0x4a] sm:$0xff]
        %v3795 = vld [vmem:[%s2879 + $0x52] sm:$0xff]
        %v3796 = vld [vmem:[%s2879 + $0x62] sm:$0xff]
        %v3797 = vld [vmem:[%s2879 + $0x6a] sm:$0xff]
        %v3798 = vld [vmem:[%s2879 + $0x7a] sm:$0xff]
        %v3799 = vld [vmem:[%s2879 + $0x82] sm:$0xff]
        %v3800 = vld [vmem:[%s2879 + $0x92] sm:$0xff]
        %v3801 = vld [vmem:[%s2879 + $0x9a] sm:$0xff]
        %v3802 = vld [vmem:[%s2879 + $0xaa] sm:$0xff]
        %v3803 = vld [vmem:[%s2879 + $0xb2] sm:$0xff]
        %v3804 = vld [vmem:[%s2879 + $0xc2] sm:$0xff]
        %v3805 = vld [vmem:[%s2879 + $0xca] sm:$0xff]
        %v3806 = vld [vmem:[%s2879 + $0xda] sm:$0xff]
        %v3807 = vld [vmem:[%s2879 + $0xe2] sm:$0xff]
        %v3808 = vld [vmem:[%s2879 + $0xf2] sm:$0xff]
        %v3809 = vld [vmem:[%s2879 + $0xfa] sm:$0xff]
        %v3810 = vld [vmem:[%s2879 + $0x10a] sm:$0xff]
        %v3811 = vld [vmem:[%s2879 + $0x112] sm:$0xff]
        %v3812 = vld [vmem:[%s2879 + $0x122] sm:$0xff]
        %v3813 = vld [vmem:[%s2879 + $0x12a] sm:$0xff]
        %v3814 = vld [vmem:[%s2879 + $0x13a] sm:$0xff]
        %v3815 = vld [vmem:[%s2879 + $0x142] sm:$0xff]
        %v3816 = vld [vmem:[%s2879 + $0x152] sm:$0xff]
        %v3817 = vld [vmem:[%s2879 + $0x15a] sm:$0xff]
        %v3818 = vld [vmem:[%s2879 + $0x16a] sm:$0xff]
        %v3819 = vld [vmem:[%s2879 + $0x172] sm:$0xff]
        %s3820 = scalar_lea.vmem %s213, 32
        %v3821 = vld [vmem:[%s3820] sm:$0xf]
        %v3823 = vsel %vm250, %v3788, 0
        %v3826 = vsel %vm250, %v3789, 0
        %v3829 = vsel %vm250, %v3790, 0
        %v3832 = vsel %vm250, %v3791, 0
        %v3835 = vsel %vm250, %v3792, 0
        %v3838 = vsel %vm250, %v3793, 0
        %v3841 = vsel %vm250, %v3794, 0
        %v3844 = vsel %vm250, %v3795, 0
        %v3847 = vsel %vm250, %v3796, 0
        %v3850 = vsel %vm250, %v3797, 0
        %v3853 = vsel %vm250, %v3798, 0
        %v3856 = vsel %vm250, %v3799, 0
        %v3859 = vsel %vm250, %v3800, 0
        %v3862 = vsel %vm250, %v3801, 0
        %v3865 = vsel %vm250, %v3802, 0
        %v3868 = vsel %vm250, %v3803, 0
        %v3871 = vsel %vm250, %v3804, 0
        %v3874 = vsel %vm250, %v3805, 0
        %v3877 = vsel %vm250, %v3806, 0
        %v3880 = vsel %vm250, %v3807, 0
        %v3883 = vsel %vm250, %v3808, 0
        %v3886 = vsel %vm250, %v3809, 0
        %v3889 = vsel %vm250, %v3810, 0
        %v3892 = vsel %vm250, %v3811, 0
        %v3895 = vsel %vm250, %v3812, 0
        %v3898 = vsel %vm250, %v3813, 0
        %v3901 = vsel %vm250, %v3814, 0
        %v3904 = vsel %vm250, %v3815, 0
        %v3907 = vsel %vm250, %v3816, 0
        %v3910 = vsel %vm250, %v3817, 0
        %v3913 = vsel %vm250, %v3818, 0
        %v3916 = vsel %vm250, %v3819, 0
        %v3919 = vsel %vm347, %v3821, 0
        %3921 = vmatprep.subr.mxu0 0.0
        %3922 = vmatpush1.msra.mxu0 0.0
        %3923 = vmatprep.subr.mxu0 0.0
        %3924 = vmatpush1.msra.mxu0 0.0
        %3925 = vmatprep.subr.mxu0 0.0
        %3926 = vmatpush1.msra.mxu0 0.0
        %3927 = vmatprep.subr.mxu0 0.0
        %3928 = vmatpush1.msra.mxu0 0.0
        %3929 = vmatprep.subr.mxu0 0.0
        %3930 = vmatpush1.msra.mxu0 0.0
        %3931 = vmatprep.subr.mxu0 0.0
        %3932 = vmatpush1.msra.mxu0 0.0
        %3933 = vmatprep.subr.mxu0 0.0
        %3934 = vmatpush1.msra.mxu0 0.0
        %3935 = vmatprep.subr.mxu0 0.0
        %3936 = vmatpush1.msra.mxu0 0.0
        %3937 = vmatprep.subr.mxu0 0.0
        %3938 = vmatpush1.msra.mxu0 0.0
        %3939 = vmatprep.subr.mxu0 0.0
        %3940 = vmatpush1.msra.mxu0 0.0
        %3941 = vmatprep.subr.mxu0 0.0
        %3942 = vmatpush1.msra.mxu0 0.0
        %3943 = vmatprep.subr.mxu0 0.0
        %3944 = vmatpush1.msra.mxu0 0.0
        %3945 = vmatprep.subr.mxu0 0.0
        %3946 = vmatpush1.msra.mxu0 0.0
        %3947 = vmatprep.subr.mxu0 0.0
        %3948 = vmatpush1.msra.mxu0 0.0
        %3949 = vmatprep.subr.mxu0 0.0
        %3950 = vmatpush1.msra.mxu0 0.0
        %3951 = vmatprep.subr.mxu0 0.0
        %3952 = vmatpush1.msra.mxu0 %v3919
        %3953 = vmatprep.subr.mxu0 0.0
        %3954 = vmatpush2.msra.mxu0 0.0
        %3955 = vmatprep.subr.mxu0 0.0
        %3956 = vmatpush2.msra.mxu0 0.0
        %3957 = vmatprep.subr.mxu0 0.0
        %3958 = vmatpush2.msra.mxu0 0.0
        %3959 = vmatprep.subr.mxu0 0.0
        %3960 = vmatpush2.msra.mxu0 0.0
        %3961 = vmatprep.subr.mxu0 0.0
        %3962 = vmatpush2.msra.mxu0 0.0
        %3963 = vmatprep.subr.mxu0 0.0
        %3964 = vmatpush2.msra.mxu0 0.0
        %3965 = vmatprep.subr.mxu0 0.0
        %3966 = vmatpush2.msra.mxu0 0.0
        %3967 = vmatprep.subr.mxu0 0.0
        %3968 = vmatpush2.msra.mxu0 0.0
        %3969 = vmatprep.subr.mxu0 0.0
        %3970 = vmatpush2.msra.mxu0 0.0
        %3971 = vmatprep.subr.mxu0 0.0
        %3972 = vmatpush2.msra.mxu0 0.0
        %3973 = vmatprep.subr.mxu0 0.0
        %3974 = vmatpush2.msra.mxu0 0.0
        %3975 = vmatprep.subr.mxu0 0.0
        %3976 = vmatpush2.msra.mxu0 0.0
        %3977 = vmatprep.subr.mxu0 0.0
        %3978 = vmatpush2.msra.mxu0 0.0
        %3979 = vmatprep.subr.mxu0 0.0
        %3980 = vmatpush2.msra.mxu0 0.0
        %3981 = vmatprep.subr.mxu0 0.0
        %3982 = vmatpush2.msra.mxu0 0.0
        %3983 = vmatprep.subr.mxu0 0.0
        %3984 = vmatpush2.msra.mxu0 0.0
        %3985 = vmatprep.mubr.f32.mxu0 0.0
        %3986 = vmatmul.mubr.f32.gmra.mxu0 %v3823
        %v3987 = vpop.f32.mrf.mxu0
        %v3988 = vadd.f32 0.0, %v3987
        %v3989 = vpop.f32.mrf.mxu0
        %3990 = vmatprep.mubr.f32.mxu0 0.0
        %3991 = vmatmul.mubr.f32.gmra.mxu0 %v3826
        %v3992 = vpop.f32.mrf.mxu0
        %v3993 = vadd.f32 0.0, %v3992
        %v3994 = vpop.f32.mrf.mxu0
        %3995 = vmatprep.mubr.f32.mxu0 0.0
        %3996 = vmatmul.mubr.f32.gmra.mxu0 %v3829
        %v3997 = vpop.f32.mrf.mxu0
        %v3998 = vadd.f32 0.0, %v3997
        %v3999 = vpop.f32.mrf.mxu0
        %4000 = vmatprep.mubr.f32.mxu0 0.0
        %4001 = vmatmul.mubr.f32.gmra.mxu0 %v3832
        %v4002 = vpop.f32.mrf.mxu0
        %v4003 = vadd.f32 0.0, %v4002
        %v4004 = vpop.f32.mrf.mxu0
        %4005 = vmatprep.mubr.f32.mxu0 0.0
        %4006 = vmatmul.mubr.f32.gmra.mxu0 %v3835
        %v4007 = vpop.f32.mrf.mxu0
        %v4008 = vadd.f32 0.0, %v4007
        %v4009 = vpop.f32.mrf.mxu0
        %4010 = vmatprep.mubr.f32.mxu0 0.0
        %4011 = vmatmul.mubr.f32.gmra.mxu0 %v3838
        %v4012 = vpop.f32.mrf.mxu0
        %v4013 = vadd.f32 0.0, %v4012
        %v4014 = vpop.f32.mrf.mxu0
        %4015 = vmatprep.mubr.f32.mxu0 0.0
        %4016 = vmatmul.mubr.f32.gmra.mxu0 %v3841
        %v4017 = vpop.f32.mrf.mxu0
        %v4018 = vadd.f32 0.0, %v4017
        %v4019 = vpop.f32.mrf.mxu0
        %4020 = vmatprep.mubr.f32.mxu0 0.0
        %4021 = vmatmul.mubr.f32.gmra.mxu0 %v3844
        %v4022 = vpop.f32.mrf.mxu0
        %v4023 = vadd.f32 0.0, %v4022
        %v4024 = vpop.f32.mrf.mxu0
        %4025 = vmatprep.mubr.f32.mxu0 0.0
        %4026 = vmatmul.mubr.f32.gmra.mxu0 %v3847
        %v4027 = vpop.f32.mrf.mxu0
        %v4028 = vadd.f32 0.0, %v4027
        %v4029 = vpop.f32.mrf.mxu0
        %4030 = vmatprep.mubr.f32.mxu0 0.0
        %4031 = vmatmul.mubr.f32.gmra.mxu0 %v3850
        %v4032 = vpop.f32.mrf.mxu0
        %v4033 = vadd.f32 0.0, %v4032
        %v4034 = vpop.f32.mrf.mxu0
        %4035 = vmatprep.mubr.f32.mxu0 0.0
        %4036 = vmatmul.mubr.f32.gmra.mxu0 %v3853
        %v4037 = vpop.f32.mrf.mxu0
        %v4038 = vadd.f32 0.0, %v4037
        %v4039 = vpop.f32.mrf.mxu0
        %4040 = vmatprep.mubr.f32.mxu0 0.0
        %4041 = vmatmul.mubr.f32.gmra.mxu0 %v3856
        %v4042 = vpop.f32.mrf.mxu0
        %v4043 = vadd.f32 0.0, %v4042
        %v4044 = vpop.f32.mrf.mxu0
        %4045 = vmatprep.mubr.f32.mxu0 0.0
        %4046 = vmatmul.mubr.f32.gmra.mxu0 %v3859
        %v4047 = vpop.f32.mrf.mxu0
        %v4048 = vadd.f32 0.0, %v4047
        %v4049 = vpop.f32.mrf.mxu0
        %4050 = vmatprep.mubr.f32.mxu0 0.0
        %4051 = vmatmul.mubr.f32.gmra.mxu0 %v3862
        %v4052 = vpop.f32.mrf.mxu0
        %v4053 = vadd.f32 0.0, %v4052
        %v4054 = vpop.f32.mrf.mxu0
        %4055 = vmatprep.mubr.f32.mxu0 0.0
        %4056 = vmatmul.mubr.f32.gmra.mxu0 %v3865
        %v4057 = vpop.f32.mrf.mxu0
        %v4058 = vadd.f32 0.0, %v4057
        %v4059 = vpop.f32.mrf.mxu0
        %4060 = vmatprep.mubr.f32.mxu0 0.0
        %4061 = vmatmul.mubr.f32.gmra.mxu0 %v3868
        %v4062 = vpop.f32.mrf.mxu0
        %v4063 = vadd.f32 0.0, %v4062
        %v4064 = vpop.f32.mrf.mxu0
        %4065 = vmatprep.mubr.f32.mxu0 0.0
        %4066 = vmatmul.mubr.f32.gmra.mxu0 %v3871
        %v4067 = vpop.f32.mrf.mxu0
        %v4068 = vadd.f32 0.0, %v4067
        %v4069 = vpop.f32.mrf.mxu0
        %4070 = vmatprep.mubr.f32.mxu0 0.0
        %4071 = vmatmul.mubr.f32.gmra.mxu0 %v3874
        %v4072 = vpop.f32.mrf.mxu0
        %v4073 = vadd.f32 0.0, %v4072
        %v4074 = vpop.f32.mrf.mxu0
        %4075 = vmatprep.mubr.f32.mxu0 0.0
        %4076 = vmatmul.mubr.f32.gmra.mxu0 %v3877
        %v4077 = vpop.f32.mrf.mxu0
        %v4078 = vadd.f32 0.0, %v4077
        %v4079 = vpop.f32.mrf.mxu0
        %4080 = vmatprep.mubr.f32.mxu0 0.0
        %4081 = vmatmul.mubr.f32.gmra.mxu0 %v3880
        %v4082 = vpop.f32.mrf.mxu0
        %v4083 = vadd.f32 0.0, %v4082
        %v4084 = vpop.f32.mrf.mxu0
        %4085 = vmatprep.mubr.f32.mxu0 0.0
        %4086 = vmatmul.mubr.f32.gmra.mxu0 %v3883
        %v4087 = vpop.f32.mrf.mxu0
        %v4088 = vadd.f32 0.0, %v4087
        %v4089 = vpop.f32.mrf.mxu0
        %4090 = vmatprep.mubr.f32.mxu0 0.0
        %4091 = vmatmul.mubr.f32.gmra.mxu0 %v3886
        %v4092 = vpop.f32.mrf.mxu0
        %v4093 = vadd.f32 0.0, %v4092
        %v4094 = vpop.f32.mrf.mxu0
        %4095 = vmatprep.mubr.f32.mxu0 0.0
        %4096 = vmatmul.mubr.f32.gmra.mxu0 %v3889
        %v4097 = vpop.f32.mrf.mxu0
        %v4098 = vadd.f32 0.0, %v4097
        %v4099 = vpop.f32.mrf.mxu0
        %4100 = vmatprep.mubr.f32.mxu0 0.0
        %4101 = vmatmul.mubr.f32.gmra.mxu0 %v3892
        %v4102 = vpop.f32.mrf.mxu0
        %v4103 = vadd.f32 0.0, %v4102
        %v4104 = vpop.f32.mrf.mxu0
        %4105 = vmatprep.mubr.f32.mxu0 0.0
        %4106 = vmatmul.mubr.f32.gmra.mxu0 %v3895
        %v4107 = vpop.f32.mrf.mxu0
        %v4108 = vadd.f32 0.0, %v4107
        %v4109 = vpop.f32.mrf.mxu0
        %4110 = vmatprep.mubr.f32.mxu0 0.0
        %4111 = vmatmul.mubr.f32.gmra.mxu0 %v3898
        %v4112 = vpop.f32.mrf.mxu0
        %v4113 = vadd.f32 0.0, %v4112
        %v4114 = vpop.f32.mrf.mxu0
        %4115 = vmatprep.mubr.f32.mxu0 0.0
        %4116 = vmatmul.mubr.f32.gmra.mxu0 %v3901
        %v4117 = vpop.f32.mrf.mxu0
        %v4118 = vadd.f32 0.0, %v4117
        %v4119 = vpop.f32.mrf.mxu0
        %4120 = vmatprep.mubr.f32.mxu0 0.0
        %4121 = vmatmul.mubr.f32.gmra.mxu0 %v3904
        %v4122 = vpop.f32.mrf.mxu0
        %v4123 = vadd.f32 0.0, %v4122
        %v4124 = vpop.f32.mrf.mxu0
        %4125 = vmatprep.mubr.f32.mxu0 0.0
        %4126 = vmatmul.mubr.f32.gmra.mxu0 %v3907
        %v4127 = vpop.f32.mrf.mxu0
        %v4128 = vadd.f32 0.0, %v4127
        %v4129 = vpop.f32.mrf.mxu0
        %4130 = vmatprep.mubr.f32.mxu0 0.0
        %4131 = vmatmul.mubr.f32.gmra.mxu0 %v3910
        %v4132 = vpop.f32.mrf.mxu0
        %v4133 = vadd.f32 0.0, %v4132
        %v4134 = vpop.f32.mrf.mxu0
        %4135 = vmatprep.mubr.f32.mxu0 0.0
        %4136 = vmatmul.mubr.f32.gmra.mxu0 %v3913
        %v4137 = vpop.f32.mrf.mxu0
        %v4138 = vadd.f32 0.0, %v4137
        %v4139 = vpop.f32.mrf.mxu0
        %4140 = vmatprep.mubr.f32.mxu0 0.0
        %4141 = vmatmul.mubr.f32.gmra.mxu0 %v3916
        %v4142 = vpop.f32.mrf.mxu0
        %v4143 = vadd.f32 0.0, %v4142
        %v4144 = vpop.f32.mrf.mxu0
        %4145 = vdwg.mxu0
        %v4146 = vld [vmem:[#allocation2] sm:$0xff]
        %v4147 = vld [vmem:[#allocation2 + $0x8] sm:$0xff]
        %v4148 = vld [vmem:[#allocation2 + $0x10] sm:$0xff]
        %v4149 = vld [vmem:[#allocation2 + $0x18] sm:$0xff]
        %v4150 = vld [vmem:[#allocation2 + $0x20] sm:$0xff]
        %v4151 = vld [vmem:[#allocation2 + $0x28] sm:$0xff]
        %v4152 = vld [vmem:[#allocation2 + $0x30] sm:$0xff]
        %v4153 = vld [vmem:[#allocation2 + $0x38] sm:$0xff]
        %v4154 = vld [vmem:[#allocation2 + $0x40] sm:$0xff]
        %v4155 = vld [vmem:[#allocation2 + $0x48] sm:$0xff]
        %v4156 = vld [vmem:[#allocation2 + $0x50] sm:$0xff]
        %v4157 = vld [vmem:[#allocation2 + $0x58] sm:$0xff]
        %v4158 = vld [vmem:[#allocation2 + $0x60] sm:$0xff]
        %v4159 = vld [vmem:[#allocation2 + $0x68] sm:$0xff]
        %v4160 = vld [vmem:[#allocation2 + $0x70] sm:$0xff]
        %v4161 = vld [vmem:[#allocation2 + $0x78] sm:$0xff]
        %v4162 = vld [vmem:[#allocation2 + $0x80] sm:$0xff]
        %v4163 = vld [vmem:[#allocation2 + $0x88] sm:$0xff]
        %v4164 = vld [vmem:[#allocation2 + $0x90] sm:$0xff]
        %v4165 = vld [vmem:[#allocation2 + $0x98] sm:$0xff]
        %v4166 = vld [vmem:[#allocation2 + $0xa0] sm:$0xff]
        %v4167 = vld [vmem:[#allocation2 + $0xa8] sm:$0xff]
        %v4168 = vld [vmem:[#allocation2 + $0xb0] sm:$0xff]
        %v4169 = vld [vmem:[#allocation2 + $0xb8] sm:$0xff]
        %v4170 = vld [vmem:[#allocation2 + $0xc0] sm:$0xff]
        %v4171 = vld [vmem:[#allocation2 + $0xc8] sm:$0xff]
        %v4172 = vld [vmem:[#allocation2 + $0xd0] sm:$0xff]
        %v4173 = vld [vmem:[#allocation2 + $0xd8] sm:$0xff]
        %v4174 = vld [vmem:[#allocation2 + $0xe0] sm:$0xff]
        %v4175 = vld [vmem:[#allocation2 + $0xe8] sm:$0xff]
        %v4176 = vld [vmem:[#allocation2 + $0xf0] sm:$0xff]
        %v4177 = vld [vmem:[#allocation2 + $0xf8] sm:$0xff]
        %v4178 = vadd.f32 %v4146, %v3988
        %v4179 = vadd.f32 %v4147, %v3993
        %v4180 = vadd.f32 %v4148, %v3998
        %v4181 = vadd.f32 %v4149, %v4003
        %v4182 = vadd.f32 %v4150, %v4008
        %v4183 = vadd.f32 %v4151, %v4013
        %v4184 = vadd.f32 %v4152, %v4018
        %v4185 = vadd.f32 %v4153, %v4023
        %v4186 = vadd.f32 %v4154, %v4028
        %v4187 = vadd.f32 %v4155, %v4033
        %v4188 = vadd.f32 %v4156, %v4038
        %v4189 = vadd.f32 %v4157, %v4043
        %v4190 = vadd.f32 %v4158, %v4048
        %v4191 = vadd.f32 %v4159, %v4053
        %v4192 = vadd.f32 %v4160, %v4058
        %v4193 = vadd.f32 %v4161, %v4063
        %v4194 = vadd.f32 %v4162, %v4068
        %v4195 = vadd.f32 %v4163, %v4073
        %v4196 = vadd.f32 %v4164, %v4078
        %v4197 = vadd.f32 %v4165, %v4083
        %v4198 = vadd.f32 %v4166, %v4088
        %v4199 = vadd.f32 %v4167, %v4093
        %v4200 = vadd.f32 %v4168, %v4098
        %v4201 = vadd.f32 %v4169, %v4103
        %v4202 = vadd.f32 %v4170, %v4108
        %v4203 = vadd.f32 %v4171, %v4113
        %v4204 = vadd.f32 %v4172, %v4118
        %v4205 = vadd.f32 %v4173, %v4123
        %v4206 = vadd.f32 %v4174, %v4128
        %v4207 = vadd.f32 %v4175, %v4133
        %v4208 = vadd.f32 %v4176, %v4138
        %v4209 = vadd.f32 %v4177, %v4143
        %4210 = vst [vmem:[#allocation2] sm:$0xff] %v4178
        %4211 = vst [vmem:[#allocation2 + $0x8] sm:$0xff] %v4179
        %4212 = vst [vmem:[#allocation2 + $0x10] sm:$0xff] %v4180
        %4213 = vst [vmem:[#allocation2 + $0x18] sm:$0xff] %v4181
        %4214 = vst [vmem:[#allocation2 + $0x20] sm:$0xff] %v4182
        %4215 = vst [vmem:[#allocation2 + $0x28] sm:$0xff] %v4183
        %4216 = vst [vmem:[#allocation2 + $0x30] sm:$0xff] %v4184
        %4217 = vst [vmem:[#allocation2 + $0x38] sm:$0xff] %v4185
        %4218 = vst [vmem:[#allocation2 + $0x40] sm:$0xff] %v4186
        %4219 = vst [vmem:[#allocation2 + $0x48] sm:$0xff] %v4187
        %4220 = vst [vmem:[#allocation2 + $0x50] sm:$0xff] %v4188
        %4221 = vst [vmem:[#allocation2 + $0x58] sm:$0xff] %v4189
        %4222 = vst [vmem:[#allocation2 + $0x60] sm:$0xff] %v4190
        %4223 = vst [vmem:[#allocation2 + $0x68] sm:$0xff] %v4191
        %4224 = vst [vmem:[#allocation2 + $0x70] sm:$0xff] %v4192
        %4225 = vst [vmem:[#allocation2 + $0x78] sm:$0xff] %v4193
        %4226 = vst [vmem:[#allocation2 + $0x80] sm:$0xff] %v4194
        %4227 = vst [vmem:[#allocation2 + $0x88] sm:$0xff] %v4195
        %4228 = vst [vmem:[#allocation2 + $0x90] sm:$0xff] %v4196
        %4229 = vst [vmem:[#allocation2 + $0x98] sm:$0xff] %v4197
        %4230 = vst [vmem:[#allocation2 + $0xa0] sm:$0xff] %v4198
        %4231 = vst [vmem:[#allocation2 + $0xa8] sm:$0xff] %v4199
        %4232 = vst [vmem:[#allocation2 + $0xb0] sm:$0xff] %v4200
        %4233 = vst [vmem:[#allocation2 + $0xb8] sm:$0xff] %v4201
        %4234 = vst [vmem:[#allocation2 + $0xc0] sm:$0xff] %v4202
        %4235 = vst [vmem:[#allocation2 + $0xc8] sm:$0xff] %v4203
        %4236 = vst [vmem:[#allocation2 + $0xd0] sm:$0xff] %v4204
        %4237 = vst [vmem:[#allocation2 + $0xd8] sm:$0xff] %v4205
        %4238 = vst [vmem:[#allocation2 + $0xe0] sm:$0xff] %v4206
        %4239 = vst [vmem:[#allocation2 + $0xe8] sm:$0xff] %v4207
        %4240 = vst [vmem:[#allocation2 + $0xf0] sm:$0xff] %v4208
        %4241 = vst [vmem:[#allocation2 + $0xf8] sm:$0xff] %v4209
        %v4242 = vld [vmem:[#allocation2] sm:$0xff]
        %v4243 = vld [vmem:[#allocation2 + $0x8] sm:$0xff]
        %v4244 = vld [vmem:[#allocation2 + $0x10] sm:$0xff]
        %v4245 = vld [vmem:[#allocation2 + $0x18] sm:$0xff]
        %v4246 = vld [vmem:[#allocation2 + $0x20] sm:$0xff]
        %v4247 = vld [vmem:[#allocation2 + $0x28] sm:$0xff]
        %v4248 = vld [vmem:[#allocation2 + $0x30] sm:$0xff]
        %v4249 = vld [vmem:[#allocation2 + $0x38] sm:$0xff]
        %v4250 = vld [vmem:[#allocation2 + $0x40] sm:$0xff]
        %v4251 = vld [vmem:[#allocation2 + $0x48] sm:$0xff]
        %v4252 = vld [vmem:[#allocation2 + $0x50] sm:$0xff]
        %v4253 = vld [vmem:[#allocation2 + $0x58] sm:$0xff]
        %v4254 = vld [vmem:[#allocation2 + $0x60] sm:$0xff]
        %v4255 = vld [vmem:[#allocation2 + $0x68] sm:$0xff]
        %v4256 = vld [vmem:[#allocation2 + $0x70] sm:$0xff]
        %v4257 = vld [vmem:[#allocation2 + $0x78] sm:$0xff]
        %v4258 = vld [vmem:[#allocation2 + $0x80] sm:$0xff]
        %v4259 = vld [vmem:[#allocation2 + $0x88] sm:$0xff]
        %v4260 = vld [vmem:[#allocation2 + $0x90] sm:$0xff]
        %v4261 = vld [vmem:[#allocation2 + $0x98] sm:$0xff]
        %v4262 = vld [vmem:[#allocation2 + $0xa0] sm:$0xff]
        %v4263 = vld [vmem:[#allocation2 + $0xa8] sm:$0xff]
        %v4264 = vld [vmem:[#allocation2 + $0xb0] sm:$0xff]
        %v4265 = vld [vmem:[#allocation2 + $0xb8] sm:$0xff]
        %v4266 = vld [vmem:[#allocation2 + $0xc0] sm:$0xff]
        %v4267 = vld [vmem:[#allocation2 + $0xc8] sm:$0xff]
        %v4268 = vld [vmem:[#allocation2 + $0xd0] sm:$0xff]
        %v4269 = vld [vmem:[#allocation2 + $0xd8] sm:$0xff]
        %v4270 = vld [vmem:[#allocation2 + $0xe0] sm:$0xff]
        %v4271 = vld [vmem:[#allocation2 + $0xe8] sm:$0xff]
        %v4272 = vld [vmem:[#allocation2 + $0xf0] sm:$0xff]
        %v4273 = vld [vmem:[#allocation2 + $0xf8] sm:$0xff]
        %v4274 = vld [vmem:[%s216] sm:$0x1]
        %v4276 = vlaneseq
        %v4277 = vshrl.u32 %v4276, 7
        %v4278 = vsub.s32 0, %v4277
        %v4279 = vrot.slane %v4274, %v4278
        %v4281 = vadd.f32 %v4242, %v4279
        %v4282 = vadd.f32 %v4243, %v4279
        %v4283 = vadd.f32 %v4244, %v4279
        %v4284 = vadd.f32 %v4245, %v4279
        %v4285 = vadd.f32 %v4246, %v4279
        %v4286 = vadd.f32 %v4247, %v4279
        %v4287 = vadd.f32 %v4248, %v4279
        %v4288 = vadd.f32 %v4249, %v4279
        %v4289 = vadd.f32 %v4250, %v4279
        %v4290 = vadd.f32 %v4251, %v4279
        %v4291 = vadd.f32 %v4252, %v4279
        %v4292 = vadd.f32 %v4253, %v4279
        %v4293 = vadd.f32 %v4254, %v4279
        %v4294 = vadd.f32 %v4255, %v4279
        %v4295 = vadd.f32 %v4256, %v4279
        %v4296 = vadd.f32 %v4257, %v4279
        %v4297 = vadd.f32 %v4258, %v4279
        %v4298 = vadd.f32 %v4259, %v4279
        %v4299 = vadd.f32 %v4260, %v4279
        %v4300 = vadd.f32 %v4261, %v4279
        %v4301 = vadd.f32 %v4262, %v4279
        %v4302 = vadd.f32 %v4263, %v4279
        %v4303 = vadd.f32 %v4264, %v4279
        %v4304 = vadd.f32 %v4265, %v4279
        %v4305 = vadd.f32 %v4266, %v4279
        %v4306 = vadd.f32 %v4267, %v4279
        %v4307 = vadd.f32 %v4268, %v4279
        %v4308 = vadd.f32 %v4269, %v4279
        %v4309 = vadd.f32 %v4270, %v4279
        %v4310 = vadd.f32 %v4271, %v4279
        %v4311 = vadd.f32 %v4272, %v4279
        %v4312 = vadd.f32 %v4273, %v4279
        %4313 = vst [vmem:[%s203] sm:$0xff] %v4281
        %4314 = vst [vmem:[%s203 + $0x8] sm:$0xff] %v4282
        %4315 = vst [vmem:[%s203 + $0x10] sm:$0xff] %v4283
        %4316 = vst [vmem:[%s203 + $0x18] sm:$0xff] %v4284
        %4317 = vst [vmem:[%s203 + $0x20] sm:$0xff] %v4285
        %4318 = vst [vmem:[%s203 + $0x28] sm:$0xff] %v4286
        %4319 = vst [vmem:[%s203 + $0x30] sm:$0xff] %v4287
        %4320 = vst [vmem:[%s203 + $0x38] sm:$0xff] %v4288
        %4321 = vst [vmem:[%s203 + $0x40] sm:$0xff] %v4289
        %4322 = vst [vmem:[%s203 + $0x48] sm:$0xff] %v4290
        %4323 = vst [vmem:[%s203 + $0x50] sm:$0xff] %v4291
        %4324 = vst [vmem:[%s203 + $0x58] sm:$0xff] %v4292
        %4325 = vst [vmem:[%s203 + $0x60] sm:$0xff] %v4293
        %4326 = vst [vmem:[%s203 + $0x68] sm:$0xff] %v4294
        %4327 = vst [vmem:[%s203 + $0x70] sm:$0xff] %v4295
        %4328 = vst [vmem:[%s203 + $0x78] sm:$0xff] %v4296
        %4329 = vst [vmem:[%s203 + $0x80] sm:$0xff] %v4297
        %4330 = vst [vmem:[%s203 + $0x88] sm:$0xff] %v4298
        %4331 = vst [vmem:[%s203 + $0x90] sm:$0xff] %v4299
        %4332 = vst [vmem:[%s203 + $0x98] sm:$0xff] %v4300
        %4333 = vst [vmem:[%s203 + $0xa0] sm:$0xff] %v4301
        %4334 = vst [vmem:[%s203 + $0xa8] sm:$0xff] %v4302
        %4335 = vst [vmem:[%s203 + $0xb0] sm:$0xff] %v4303
        %4336 = vst [vmem:[%s203 + $0xb8] sm:$0xff] %v4304
        %4337 = vst [vmem:[%s203 + $0xc0] sm:$0xff] %v4305
        %4338 = vst [vmem:[%s203 + $0xc8] sm:$0xff] %v4306
        %4339 = vst [vmem:[%s203 + $0xd0] sm:$0xff] %v4307
        %4340 = vst [vmem:[%s203 + $0xd8] sm:$0xff] %v4308
        %4341 = vst [vmem:[%s203 + $0xe0] sm:$0xff] %v4309
        %4342 = vst [vmem:[%s203 + $0xe8] sm:$0xff] %v4310
        %4343 = vst [vmem:[%s203 + $0xf0] sm:$0xff] %v4311
        %4344 = vst [vmem:[%s203 + $0xf8] sm:$0xff] %v4312
        %s4345 = sand.u32 %s117, 1
        %s4346 = scalar_lea.sflag [#allocation4], %s4345
        %s4347 = sand.u32 %s117, 1
        %s4348 = smul.addr %s4347, 256
        %s4349 = scalar_lea.vmem [#allocation3], %s4348
        // Predicated region
        $region33: #{tpu_custom_call.1} parent=31 // pred_check
          %p4350 = pneg %p127
        $region34: #{tpu_custom_call.1} parent=31 // pred_check_branch
          %4352 = sbr.rel (%p4350) target = $region36
        $region35: #{tpu_custom_call.1} parent=31 // pred_region
          %s4354 = ssub.s32 4096, 4096
          %4355 = vsyncadd %s4346, %s4354
          %s4356 = smul.addr %s21, 32
          %s4357 = sadd.s32 %s22, %s4356
          %s4358 = smul.addr %s4357, 128
          %s4359 = scalar_lea.hbm %s3, %s4358
          %s4360 = sshll.u32 %s4349, 4
          %s4361 = int_to_ptr.vmem [resolvable:$true] %s4360
          %4366 = dma.vmem_to_hbm [thread:$0]  %s4361, 4096, %s4359, %s4346, 128, 128, 8
        $region36: #{tpu_custom_call.1} parent=31 // pred_fallthru
          _
      $region32: #{tpu_custom_call.1} parent=5 // pred_fallthru
        _
      %p4367 = scmp.le.s32.totalorder 2, %s12
      // Predicated region
      $region37: #{tpu_custom_call.1} parent=5 // pred_check
        %p4368 = pneg %p4367
      $region38: #{tpu_custom_call.1} parent=5 // pred_check_branch
        %4370 = sbr.rel (%p4368) target = $region40
      $region39: #{tpu_custom_call.1} parent=5 // pred_region
        %s4371 = ssub.s32 %s12, 2
        // Predicated region
        $region41: #{tpu_custom_call.1} parent=39 // pred_check
          %p4372 = pneg %p133
        $region42: #{tpu_custom_call.1} parent=39 // pred_check_branch
          %4374 = sbr.rel (%p4372) target = $region44
        $region43: #{tpu_custom_call.1} parent=39 // pred_region
          %s4375 = sand.u32 %s118, 1
          %s4376 = scalar_lea.sflag [#allocation4], %s4375
          %s4377 = sand.u32 %s118, 1
          %s4378 = smul.addr %s4377, 256
          %s4379 = scalar_lea.vmem [#allocation3], %s4378
          %4380 = dma.done %s4376, 4096
        $region44: #{tpu_custom_call.1} parent=39 // pred_fallthru
          _
      $region40: #{tpu_custom_call.1} parent=5 // pred_fallthru
        _
    $region6: #{tpu_custom_call.1} parent=1 // loop_footer
      %s16 = sadd.s32 1, %s12
    $region7: #{tpu_custom_call.1} parent=1 // loop_footer_branch
      %11 = sbr.rel target = $region3
    $region8: #{tpu_custom_call.1} parent=1 // loop_exit
      _
    %4381 = vsyncpa [#allocation4], 1
    %s4382 = scalar_lea.sflag [#allocation4], 1
    %4383 = vsyncpa %s4382, 1

</llo_original>
